<compile_context>
chip_gen: v7x
topology: tpu7x:2x2x1
jax: 0.10.0
libtpu: 0.0.40
codegen_flags: <defaults>
</compile_context>

<pallas_src>
import math

import numpy as np
import jax
import jax.numpy as jnp
from jax.experimental import pallas as pl
from jax.experimental.pallas import tpu as pltpu


def _vmem_spec():
    return pl.BlockSpec(memory_space=pltpu.MemorySpace.VMEM)


def _smem_spec():
    return pl.BlockSpec(memory_space=pltpu.MemorySpace.SMEM)


# ---------------------------------------------------------------------------
# Fused Euler–Maruyama kernel (one pallas_call per forward).
#
#   drift:     f(t, y) = relu(y @ W1y + t * W1t + b1) @ W2 + b2
#   diffusion: g(y)    = y @ Wg + bg            (diagonal noise)
#   step:      y <- y + f(t_s, y) * h_s + g(y) * dW_s     (dW_s ~ N(0, h_s))
#
# The sub-step schedule (start time, step size, which output row to record) is
# computed on the host from the concrete `t` vector and `dt`, so the loop is
# statically unrolled in-kernel (LLO-visible); the schedule *values* are read
# from SMEM so the compiled kernel only depends on the schedule length.
# ---------------------------------------------------------------------------
def _make_sde_kernel(n_steps, rec_after, t_count, with_norm):
    def kernel(*refs):
        (t_ref, ts_ref, hs_ref, x_ref, dw_ref,
         w1y_ref, w1t_ref, b1_ref, w2_ref, b2_ref,
         wg_ref, bg_ref) = refs[:12]
        ys_ref = refs[12]
        norm_ref = refs[13] if with_norm else None

        # Hoist weight loads once; reused across every unrolled stage.
        w1y = w1y_ref[...]
        w1t = w1t_ref[...]
        b1 = b1_ref[...]
        w2 = w2_ref[...]
        b2 = b2_ref[...]
        wg = wg_ref[...]
        bg = bg_ref[...]

        def drift(t_s, y):
            h = jnp.dot(y, w1y, preferred_element_type=jnp.float32)
            h = jnp.maximum(h + t_s * w1t + b1, 0.0)
            return jnp.dot(h, w2, preferred_element_type=jnp.float32) + b2

        def diffusion(y):
            return jnp.dot(y, wg, preferred_element_type=jnp.float32) + bg

        x0 = x_ref[...]

        if with_norm:
            # ||f(t_i, x0)||^2 + ||g(x0)||^2 for every output time, folded into the
            # same kernel (no extra launches / weight DMA). Partial (elementwise)
            # values are written; the wrapper finishes the scalar reduction.
            g0 = diffusion(x0)
            gsq = g0 * g0
            for i in range(t_count):
                fi = drift(t_ref[i], x0)
                norm_ref[i] = fi * fi + gsq

        y = x0
        ys_ref[0] = y
        for s in range(n_steps):
            t_s = ts_ref[s]
            h_s = hs_ref[s]
            f = drift(t_s, y)
            g = diffusion(y)
            y = y + f * h_s + g * dw_ref[s]
            if rec_after[s] >= 0:
                ys_ref[rec_after[s]] = y

    return kernel


def _fixed_step_schedule(t_np, dt):
    """torchsde fixed-step schedule: step dt, truncating at each output time."""
    ts, hs, rec = [], [], []
    for i in range(len(t_np) - 1):
        t0 = float(t_np[i])
        t1 = float(t_np[i + 1])
        span = t1 - t0
        n = max(1, int(math.ceil(span / dt - 1e-9)))
        cur = t0
        for k in range(n):
            nxt = t1 if k == n - 1 else min(cur + dt, t1)
            ts.append(cur)
            hs.append(nxt - cur)
            rec.append(i + 1 if k == n - 1 else -1)
            cur = nxt
    if not hs:  # degenerate T == 1 case: one zero-length no-op step
        ts, hs, rec = [0.0], [0.0], [-1]
    return (np.asarray(ts, np.float32), np.asarray(hs, np.float32), tuple(rec))


# ---------------------------------------------------------------------------
# Parameter containers (drift MLP / default Linear diffusion)
# ---------------------------------------------------------------------------
class PallasToyDrift:
    """Drift term: f(t, y) = relu([y, t] @ W1 + b1) @ W2 + b2 (time as a feature).

    W1 is pre-split (w1y / w1t) so the fused kernel never concatenates."""

    def __init__(self, dim, hidden_dim, key):
        self.dim = dim
        self.hidden_dim = hidden_dim
        k1, k2, k3, k4 = jax.random.split(key, 4)
        in_dim = dim + 1
        s1 = 1.0 / float(np.sqrt(in_dim))
        s2 = 1.0 / float(np.sqrt(hidden_dim))
        w1 = jax.random.uniform(k1, (in_dim, hidden_dim), jnp.float32, -s1, s1)
        self.w1y = w1[:dim]                     # (D, H)
        self.w1t = w1[dim:]                     # (1, H)
        self.b1 = jax.random.uniform(k2, (1, hidden_dim), jnp.float32, -s1, s1)
        self.w2 = jax.random.uniform(k3, (hidden_dim, dim), jnp.float32, -s2, s2)
        self.b2 = jax.random.uniform(k4, (1, dim), jnp.float32, -s2, s2)

    def __call__(self, t, y):
        # Plain-jnp mirror of the in-kernel drift (API parity / debugging only).
        h = jnp.maximum(y @ self.w1y + jnp.asarray(t, jnp.float32) * self.w1t + self.b1, 0.0)
        return h @ self.w2 + self.b2


class PallasLinear:
    """Default diffusion term (mirrors nn.Linear(in_features, out_features))."""

    def __init__(self, in_features, out_features, key):
        k1, k2 = jax.random.split(key)
        s = 1.0 / float(np.sqrt(in_features))
        self.w = jax.random.uniform(k1, (in_features, out_features), jnp.float32, -s, s)
        self.b = jax.random.uniform(k2, (1, out_features), jnp.float32, -s, s)

    def __call__(self, y):
        return y @ self.w + self.b


# ---------------------------------------------------------------------------
# JAX/Pallas port of MIOFlow ToySDEModel
# ---------------------------------------------------------------------------
class ToySDEModel:
    def __init__(self, func, method='euler', noise_type='diagonal', sde_type='ito',
                 in_features=2, out_features=2, gunc=None, dt=0.1,
                 adjoint_method=None, use_norm=False, key=None):
        assert method == 'euler', "only the fixed-step 'euler' (Euler-Maruyama) solver is implemented"
        assert noise_type == 'diagonal', "only diagonal noise is implemented"
        self.func = func
        self.method = method
        self.noise_type = noise_type
        self.sde_type = sde_type
        # TODO(synk): adjoint_method only changes the backward pass of torchsde; the
        # forward integration is identical, so it is accepted but unused here.
        self.adjoint_method = adjoint_method
        self.use_norm = use_norm
        self.norm = []
        if key is None:
            key = jax.random.PRNGKey(1)
        kg, kn = jax.random.split(key)
        if gunc is None:
            self._gunc_args = 'y'
            self.gunc = PallasLinear(in_features, out_features, kg)
        else:
            # TODO(synk): custom (t, y) diffusion modules are not lowered into the
            # fused Pallas kernel; only the default Linear(y) diffusion path runs in-kernel.
            self._gunc_args = 't,y'
            self.gunc = gunc
        self.dt = dt
        self._noise_key = kn
        self._kernel_cache = {}

    def f(self, t, y):
        return self.func(t, y)

    def g(self, t, y):
        return self.gunc(t, y) if self._gunc_args == 't,y' else self.gunc(y)

    def forward(self, x, t, return_whole_sequence=False, dt=None):
        if self._gunc_args != 'y':
            raise NotImplementedError("custom (t, y) diffusion is not supported by the Pallas path")

        # dt resolution exactly mirrors the reference expression.
        dt = self.dt if self.dt is not None else 0.1 if dt is None else dt

        t_np = np.asarray(jax.device_get(t), dtype=np.float32)
        ts_np, hs_np, rec = _fixed_step_schedule(t_np, float(dt))
        n_steps = int(hs_np.shape[0])
        T = int(t_np.shape[0])
        B, D = x.shape
        with_norm = bool(self.use_norm)

        # Brownian increments, N(0, h) per sub-step / element (diagonal noise).
        self._noise_key, sub = jax.random.split(self._noise_key)
        dw = (jax.random.normal(sub, (n_steps, B, D), jnp.float32)
              * jnp.sqrt(jnp.asarray(hs_np))[:, None, None])

        cache_key = (n_steps, rec, T, B, D, self.func.hidden_dim, with_norm)
        call = self._kernel_cache.get(cache_key)
        if call is None:
            kernel = _make_sde_kernel(n_steps, rec, T, with_norm)
            ys_shape = jax.ShapeDtypeStruct((T, B, D), jnp.float32)
            if with_norm:
                out_shape = (ys_shape, jax.ShapeDtypeStruct((T, B, D), jnp.float32))
                out_specs = (_vmem_spec(), _vmem_spec())
            else:
                out_shape = ys_shape
                out_specs = _vmem_spec()
            call = pl.pallas_call(
                kernel,
                out_shape=out_shape,
                in_specs=[_smem_spec(), _smem_spec(), _smem_spec()] + [_vmem_spec()] * 9,
                out_specs=out_specs,
            )
            self._kernel_cache[cache_key] = call

        func, gunc = self.func, self.gunc
        args = (jnp.asarray(t_np), jnp.asarray(ts_np), jnp.asarray(hs_np),
                x.astype(jnp.float32), dw,
                func.w1y, func.w1t, func.b1, func.w2, func.b2,
                gunc.w, gunc.b)

        if with_norm:
            ys, norm_parts = call(*args)
            # TODO(synk): the reference calls self.gunc(time, x) here, which is
            # incompatible with the default Linear('y') diffusion; we use gunc(x).
            norms = jnp.sum(norm_parts, axis=(1, 2))        # ||f||^2 + ||g||^2 per time
            for i in range(T):
                self.norm.append(norms[i])
        else:
            ys = call(*args)

        return ys if return_whole_sequence else ys[-1]

    def train(self, mode=True):
        self.norm = []

    def eval(self):
        self.norm = []


if __name__ == "__main__":
    key = jax.random.PRNGKey(0)
    kx, kf, km = jax.random.split(key, 3)

    B = 16    # batch
    D = 8     # state / feature dim (in_features == out_features for diagonal noise)
    H = 32    # hidden width of the drift MLP
    T = 5     # number of output time points

    x = jax.random.normal(kx, (B, D), dtype=jnp.float32)
    t = jnp.linspace(0.0, 1.0, T, dtype=jnp.float32)

    func = PallasToyDrift(dim=D, hidden_dim=H, key=kf)
    model = ToySDEModel(func, method='euler', in_features=D, out_features=D,
                        dt=0.1, use_norm=False, key=km)

    last = model.forward(x, t, return_whole_sequence=False)
    jax.block_until_ready(last)
    assert last.shape == (B, D)
    assert bool(jnp.all(jnp.isfinite(last)))

    seq = model.forward(x, t, return_whole_sequence=True)
    jax.block_until_ready(seq)
    assert seq.shape == (T, B, D)

    # Exercise the fused use_norm path as well.
    model_n = ToySDEModel(func, method='euler', in_features=D, out_features=D,
                          dt=0.1, use_norm=True, key=km)
    out_n = model_n.forward(x, t, return_whole_sequence=False)
    jax.block_until_ready(out_n)
    assert len(model_n.norm) == T

    print("KERNEL_OK")
</pallas_src>

<mosaic_0001>
module attributes {stable_mosaic.version = 11 : i64} {
  func.func @kernel(%arg0: memref<5xf32, #tpu.memory_space<smem>>, %arg1: memref<12xf32, #tpu.memory_space<smem>>, %arg2: memref<12xf32, #tpu.memory_space<smem>>, %arg3: memref<16x8xf32, #tpu.memory_space<vmem>>, %arg4: memref<12x16x8xf32, #tpu.memory_space<vmem>>, %arg5: memref<8x32xf32, #tpu.memory_space<vmem>>, %arg6: memref<1x32xf32, #tpu.memory_space<vmem>>, %arg7: memref<1x32xf32, #tpu.memory_space<vmem>>, %arg8: memref<32x8xf32, #tpu.memory_space<vmem>>, %arg9: memref<1x8xf32, #tpu.memory_space<vmem>>, %arg10: memref<8x8xf32, #tpu.memory_space<vmem>>, %arg11: memref<1x8xf32, #tpu.memory_space<vmem>>, %arg12: memref<5x16x8xf32, #tpu.memory_space<vmem>>) attributes {dimension_semantics = [], scalar_prefetch = 0 : i64, scratch_operands = 0 : i64, tpu.core_type = #tpu.core_type<tc>} {
    %c0 = arith.constant 0 : index
    %c0_0 = arith.constant 0 : index
    %0 = vector.load %arg5[%c0, %c0_0] : memref<8x32xf32, #tpu.memory_space<vmem>>, vector<8x32xf32>
    %c0_1 = arith.constant 0 : index
    %c0_2 = arith.constant 0 : index
    %1 = vector.load %arg6[%c0_1, %c0_2] : memref<1x32xf32, #tpu.memory_space<vmem>>, vector<1x32xf32>
    %c0_3 = arith.constant 0 : index
    %c0_4 = arith.constant 0 : index
    %2 = vector.load %arg7[%c0_3, %c0_4] : memref<1x32xf32, #tpu.memory_space<vmem>>, vector<1x32xf32>
    %c0_5 = arith.constant 0 : index
    %c0_6 = arith.constant 0 : index
    %3 = vector.load %arg8[%c0_5, %c0_6] : memref<32x8xf32, #tpu.memory_space<vmem>>, vector<32x8xf32>
    %c0_7 = arith.constant 0 : index
    %c0_8 = arith.constant 0 : index
    %4 = vector.load %arg9[%c0_7, %c0_8] : memref<1x8xf32, #tpu.memory_space<vmem>>, vector<1x8xf32>
    %c0_9 = arith.constant 0 : index
    %c0_10 = arith.constant 0 : index
    %5 = vector.load %arg10[%c0_9, %c0_10] : memref<8x8xf32, #tpu.memory_space<vmem>>, vector<8x8xf32>
    %c0_11 = arith.constant 0 : index
    %c0_12 = arith.constant 0 : index
    %6 = vector.load %arg11[%c0_11, %c0_12] : memref<1x8xf32, #tpu.memory_space<vmem>>, vector<1x8xf32>
    %c0_13 = arith.constant 0 : index
    %c0_14 = arith.constant 0 : index
    %7 = vector.load %arg3[%c0_13, %c0_14] : memref<16x8xf32, #tpu.memory_space<vmem>>, vector<16x8xf32>
    %c0_15 = arith.constant 0 : index
    %c0_16 = arith.constant 0 : index
    %c0_17 = arith.constant 0 : index
    %8 = vector.load %arg12[%c0_15, %c0_16, %c0_17] : memref<5x16x8xf32, #tpu.memory_space<vmem>>, vector<1x16x8xf32>
    %9 = vector.shape_cast %8 : vector<1x16x8xf32> to vector<16x8xf32>
    %10 = vector.shape_cast %7 : vector<16x8xf32> to vector<1x16x8xf32>
    tpu.vector_store %arg12[%c0_15, %c0_16, %c0_17], %10 {strides = array<i32>} : memref<5x16x8xf32, #tpu.memory_space<vmem>>, vector<1x16x8xf32>,
    %c0_18 = arith.constant 0 : index
    %11 = memref.load %arg1[%c0_18] : memref<12xf32, #tpu.memory_space<smem>>
    %c0_19 = arith.constant 0 : index
    %12 = memref.load %arg2[%c0_19] : memref<12xf32, #tpu.memory_space<smem>>
    %cst = arith.constant dense<0.000000e+00> : vector<16x32xf32>
    %13 = tpu.matmul %7, %0, %cst {dimension_numbers = #tpu.dot_dimension_numbers<[1], [0], [0], [1], [0, 0, 1, 1], [], []>} : vector<16x8xf32>, vector<8x32xf32>, vector<16x32xf32> -> vector<16x32xf32>
    %14 = vector.broadcast %11 : f32 to vector<1x32xf32>
    %15 = arith.mulf %14, %1 : vector<1x32xf32>
    %16 = vector.broadcast %15 : vector<1x32xf32> to vector<16x32xf32>
    %17 = arith.addf %13, %16 : vector<16x32xf32>
    %18 = vector.broadcast %2 : vector<1x32xf32> to vector<16x32xf32>
    %19 = arith.addf %17, %18 : vector<16x32xf32>
    %cst_20 = arith.constant 0.000000e+00 : f32
    %20 = vector.broadcast %cst_20 : f32 to vector<16x32xf32>
    %21 = arith.maximumf %19, %20 : vector<16x32xf32>
    %cst_21 = arith.constant dense<0.000000e+00> : vector<16x8xf32>
    %22 = tpu.matmul %21, %3, %cst_21 {dimension_numbers = #tpu.dot_dimension_numbers<[1], [0], [0], [1], [0, 0, 1, 1], [], []>} : vector<16x32xf32>, vector<32x8xf32>, vector<16x8xf32> -> vector<16x8xf32>
    %23 = vector.broadcast %4 : vector<1x8xf32> to vector<16x8xf32>
    %24 = arith.addf %22, %23 : vector<16x8xf32>
    %cst_22 = arith.constant dense<0.000000e+00> : vector<16x8xf32>
    %25 = tpu.matmul %7, %5, %cst_22 {dimension_numbers = #tpu.dot_dimension_numbers<[1], [0], [0], [1], [0, 0, 1, 1], [], []>} : vector<16x8xf32>, vector<8x8xf32>, vector<16x8xf32> -> vector<16x8xf32>
    %26 = vector.broadcast %6 : vector<1x8xf32> to vector<16x8xf32>
    %27 = arith.addf %25, %26 : vector<16x8xf32>
    %28 = vector.broadcast %12 : f32 to vector<16x8xf32>
    %29 = arith.mulf %24, %28 : vector<16x8xf32>
    %30 = arith.addf %7, %29 : vector<16x8xf32>
    %c0_23 = arith.constant 0 : index
    %c0_24 = arith.constant 0 : index
    %c0_25 = arith.constant 0 : index
    %31 = vector.load %arg4[%c0_23, %c0_24, %c0_25] : memref<12x16x8xf32, #tpu.memory_space<vmem>>, vector<1x16x8xf32>
    %32 = vector.shape_cast %31 : vector<1x16x8xf32> to vector<16x8xf32>
    %33 = arith.mulf %27, %32 : vector<16x8xf32>
    %34 = arith.addf %30, %33 : vector<16x8xf32>
    %c1 = arith.constant 1 : index
    %35 = memref.load %arg1[%c1] : memref<12xf32, #tpu.memory_space<smem>>
    %c1_26 = arith.constant 1 : index
    %36 = memref.load %arg2[%c1_26] : memref<12xf32, #tpu.memory_space<smem>>
    %cst_27 = arith.constant dense<0.000000e+00> : vector<16x32xf32>
    %37 = tpu.matmul %34, %0, %cst_27 {dimension_numbers = #tpu.dot_dimension_numbers<[1], [0], [0], [1], [0, 0, 1, 1], [], []>} : vector<16x8xf32>, vector<8x32xf32>, vector<16x32xf32> -> vector<16x32xf32>
    %38 = vector.broadcast %35 : f32 to vector<1x32xf32>
    %39 = arith.mulf %38, %1 : vector<1x32xf32>
    %40 = vector.broadcast %39 : vector<1x32xf32> to vector<16x32xf32>
    %41 = arith.addf %37, %40 : vector<16x32xf32>
    %42 = vector.broadcast %2 : vector<1x32xf32> to vector<16x32xf32>
    %43 = arith.addf %41, %42 : vector<16x32xf32>
    %cst_28 = arith.constant 0.000000e+00 : f32
    %44 = vector.broadcast %cst_28 : f32 to vector<16x32xf32>
    %45 = arith.maximumf %43, %44 : vector<16x32xf32>
    %cst_29 = arith.constant dense<0.000000e+00> : vector<16x8xf32>
    %46 = tpu.matmul %45, %3, %cst_29 {dimension_numbers = #tpu.dot_dimension_numbers<[1], [0], [0], [1], [0, 0, 1, 1], [], []>} : vector<16x32xf32>, vector<32x8xf32>, vector<16x8xf32> -> vector<16x8xf32>
    %47 = vector.broadcast %4 : vector<1x8xf32> to vector<16x8xf32>
    %48 = arith.addf %46, %47 : vector<16x8xf32>
    %cst_30 = arith.constant dense<0.000000e+00> : vector<16x8xf32>
    %49 = tpu.matmul %34, %5, %cst_30 {dimension_numbers = #tpu.dot_dimension_numbers<[1], [0], [0], [1], [0, 0, 1, 1], [], []>} : vector<16x8xf32>, vector<8x8xf32>, vector<16x8xf32> -> vector<16x8xf32>
    %50 = vector.broadcast %6 : vector<1x8xf32> to vector<16x8xf32>
    %51 = arith.addf %49, %50 : vector<16x8xf32>
    %52 = vector.broadcast %36 : f32 to vector<16x8xf32>
    %53 = arith.mulf %48, %52 : vector<16x8xf32>
    %54 = arith.addf %34, %53 : vector<16x8xf32>
    %c1_31 = arith.constant 1 : index
    %c0_32 = arith.constant 0 : index
    %c0_33 = arith.constant 0 : index
    %55 = vector.load %arg4[%c1_31, %c0_32, %c0_33] : memref<12x16x8xf32, #tpu.memory_space<vmem>>, vector<1x16x8xf32>
    %56 = vector.shape_cast %55 : vector<1x16x8xf32> to vector<16x8xf32>
    %57 = arith.mulf %51, %56 : vector<16x8xf32>
    %58 = arith.addf %54, %57 : vector<16x8xf32>
    %c2 = arith.constant 2 : index
    %59 = memref.load %arg1[%c2] : memref<12xf32, #tpu.memory_space<smem>>
    %c2_34 = arith.constant 2 : index
    %60 = memref.load %arg2[%c2_34] : memref<12xf32, #tpu.memory_space<smem>>
    %cst_35 = arith.constant dense<0.000000e+00> : vector<16x32xf32>
    %61 = tpu.matmul %58, %0, %cst_35 {dimension_numbers = #tpu.dot_dimension_numbers<[1], [0], [0], [1], [0, 0, 1, 1], [], []>} : vector<16x8xf32>, vector<8x32xf32>, vector<16x32xf32> -> vector<16x32xf32>
    %62 = vector.broadcast %59 : f32 to vector<1x32xf32>
    %63 = arith.mulf %62, %1 : vector<1x32xf32>
    %64 = vector.broadcast %63 : vector<1x32xf32> to vector<16x32xf32>
    %65 = arith.addf %61, %64 : vector<16x32xf32>
    %66 = vector.broadcast %2 : vector<1x32xf32> to vector<16x32xf32>
    %67 = arith.addf %65, %66 : vector<16x32xf32>
    %cst_36 = arith.constant 0.000000e+00 : f32
    %68 = vector.broadcast %cst_36 : f32 to vector<16x32xf32>
    %69 = arith.maximumf %67, %68 : vector<16x32xf32>
    %cst_37 = arith.constant dense<0.000000e+00> : vector<16x8xf32>
    %70 = tpu.matmul %69, %3, %cst_37 {dimension_numbers = #tpu.dot_dimension_numbers<[1], [0], [0], [1], [0, 0, 1, 1], [], []>} : vector<16x32xf32>, vector<32x8xf32>, vector<16x8xf32> -> vector<16x8xf32>
    %71 = vector.broadcast %4 : vector<1x8xf32> to vector<16x8xf32>
    %72 = arith.addf %70, %71 : vector<16x8xf32>
    %cst_38 = arith.constant dense<0.000000e+00> : vector<16x8xf32>
    %73 = tpu.matmul %58, %5, %cst_38 {dimension_numbers = #tpu.dot_dimension_numbers<[1], [0], [0], [1], [0, 0, 1, 1], [], []>} : vector<16x8xf32>, vector<8x8xf32>, vector<16x8xf32> -> vector<16x8xf32>
    %74 = vector.broadcast %6 : vector<1x8xf32> to vector<16x8xf32>
    %75 = arith.addf %73, %74 : vector<16x8xf32>
    %76 = vector.broadcast %60 : f32 to vector<16x8xf32>
    %77 = arith.mulf %72, %76 : vector<16x8xf32>
    %78 = arith.addf %58, %77 : vector<16x8xf32>
    %c2_39 = arith.constant 2 : index
    %c0_40 = arith.constant 0 : index
    %c0_41 = arith.constant 0 : index
    %79 = vector.load %arg4[%c2_39, %c0_40, %c0_41] : memref<12x16x8xf32, #tpu.memory_space<vmem>>, vector<1x16x8xf32>
    %80 = vector.shape_cast %79 : vector<1x16x8xf32> to vector<16x8xf32>
    %81 = arith.mulf %75, %80 : vector<16x8xf32>
    %82 = arith.addf %78, %81 : vector<16x8xf32>
    %c1_42 = arith.constant 1 : index
    %c0_43 = arith.constant 0 : index
    %c0_44 = arith.constant 0 : index
    %83 = vector.load %arg12[%c1_42, %c0_43, %c0_44] : memref<5x16x8xf32, #tpu.memory_space<vmem>>, vector<1x16x8xf32>
    %84 = vector.shape_cast %83 : vector<1x16x8xf32> to vector<16x8xf32>
    %85 = vector.shape_cast %82 : vector<16x8xf32> to vector<1x16x8xf32>
    tpu.vector_store %arg12[%c1_42, %c0_43, %c0_44], %85 {strides = array<i32>} : memref<5x16x8xf32, #tpu.memory_space<vmem>>, vector<1x16x8xf32>,
    %c3 = arith.constant 3 : index
    %86 = memref.load %arg1[%c3] : memref<12xf32, #tpu.memory_space<smem>>
    %c3_45 = arith.constant 3 : index
    %87 = memref.load %arg2[%c3_45] : memref<12xf32, #tpu.memory_space<smem>>
    %cst_46 = arith.constant dense<0.000000e+00> : vector<16x32xf32>
    %88 = tpu.matmul %82, %0, %cst_46 {dimension_numbers = #tpu.dot_dimension_numbers<[1], [0], [0], [1], [0, 0, 1, 1], [], []>} : vector<16x8xf32>, vector<8x32xf32>, vector<16x32xf32> -> vector<16x32xf32>
    %89 = vector.broadcast %86 : f32 to vector<1x32xf32>
    %90 = arith.mulf %89, %1 : vector<1x32xf32>
    %91 = vector.broadcast %90 : vector<1x32xf32> to vector<16x32xf32>
    %92 = arith.addf %88, %91 : vector<16x32xf32>
    %93 = vector.broadcast %2 : vector<1x32xf32> to vector<16x32xf32>
    %94 = arith.addf %92, %93 : vector<16x32xf32>
    %cst_47 = arith.constant 0.000000e+00 : f32
    %95 = vector.broadcast %cst_47 : f32 to vector<16x32xf32>
    %96 = arith.maximumf %94, %95 : vector<16x32xf32>
    %cst_48 = arith.constant dense<0.000000e+00> : vector<16x8xf32>
    %97 = tpu.matmul %96, %3, %cst_48 {dimension_numbers = #tpu.dot_dimension_numbers<[1], [0], [0], [1], [0, 0, 1, 1], [], []>} : vector<16x32xf32>, vector<32x8xf32>, vector<16x8xf32> -> vector<16x8xf32>
    %98 = vector.broadcast %4 : vector<1x8xf32> to vector<16x8xf32>
    %99 = arith.addf %97, %98 : vector<16x8xf32>
    %cst_49 = arith.constant dense<0.000000e+00> : vector<16x8xf32>
    %100 = tpu.matmul %82, %5, %cst_49 {dimension_numbers = #tpu.dot_dimension_numbers<[1], [0], [0], [1], [0, 0, 1, 1], [], []>} : vector<16x8xf32>, vector<8x8xf32>, vector<16x8xf32> -> vector<16x8xf32>
    %101 = vector.broadcast %6 : vector<1x8xf32> to vector<16x8xf32>
    %102 = arith.addf %100, %101 : vector<16x8xf32>
    %103 = vector.broadcast %87 : f32 to vector<16x8xf32>
    %104 = arith.mulf %99, %103 : vector<16x8xf32>
    %105 = arith.addf %82, %104 : vector<16x8xf32>
    %c3_50 = arith.constant 3 : index
    %c0_51 = arith.constant 0 : index
    %c0_52 = arith.constant 0 : index
    %106 = vector.load %arg4[%c3_50, %c0_51, %c0_52] : memref<12x16x8xf32, #tpu.memory_space<vmem>>, vector<1x16x8xf32>
    %107 = vector.shape_cast %106 : vector<1x16x8xf32> to vector<16x8xf32>
    %108 = arith.mulf %102, %107 : vector<16x8xf32>
    %109 = arith.addf %105, %108 : vector<16x8xf32>
    %c4 = arith.constant 4 : index
    %110 = memref.load %arg1[%c4] : memref<12xf32, #tpu.memory_space<smem>>
    %c4_53 = arith.constant 4 : index
    %111 = memref.load %arg2[%c4_53] : memref<12xf32, #tpu.memory_space<smem>>
    %cst_54 = arith.constant dense<0.000000e+00> : vector<16x32xf32>
    %112 = tpu.matmul %109, %0, %cst_54 {dimension_numbers = #tpu.dot_dimension_numbers<[1], [0], [0], [1], [0, 0, 1, 1], [], []>} : vector<16x8xf32>, vector<8x32xf32>, vector<16x32xf32> -> vector<16x32xf32>
    %113 = vector.broadcast %110 : f32 to vector<1x32xf32>
    %114 = arith.mulf %113, %1 : vector<1x32xf32>
    %115 = vector.broadcast %114 : vector<1x32xf32> to vector<16x32xf32>
    %116 = arith.addf %112, %115 : vector<16x32xf32>
    %117 = vector.broadcast %2 : vector<1x32xf32> to vector<16x32xf32>
    %118 = arith.addf %116, %117 : vector<16x32xf32>
    %cst_55 = arith.constant 0.000000e+00 : f32
    %119 = vector.broadcast %cst_55 : f32 to vector<16x32xf32>
    %120 = arith.maximumf %118, %119 : vector<16x32xf32>
    %cst_56 = arith.constant dense<0.000000e+00> : vector<16x8xf32>
    %121 = tpu.matmul %120, %3, %cst_56 {dimension_numbers = #tpu.dot_dimension_numbers<[1], [0], [0], [1], [0, 0, 1, 1], [], []>} : vector<16x32xf32>, vector<32x8xf32>, vector<16x8xf32> -> vector<16x8xf32>
    %122 = vector.broadcast %4 : vector<1x8xf32> to vector<16x8xf32>
    %123 = arith.addf %121, %122 : vector<16x8xf32>
    %cst_57 = arith.constant dense<0.000000e+00> : vector<16x8xf32>
    %124 = tpu.matmul %109, %5, %cst_57 {dimension_numbers = #tpu.dot_dimension_numbers<[1], [0], [0], [1], [0, 0, 1, 1], [], []>} : vector<16x8xf32>, vector<8x8xf32>, vector<16x8xf32> -> vector<16x8xf32>
    %125 = vector.broadcast %6 : vector<1x8xf32> to vector<16x8xf32>
    %126 = arith.addf %124, %125 : vector<16x8xf32>
    %127 = vector.broadcast %111 : f32 to vector<16x8xf32>
    %128 = arith.mulf %123, %127 : vector<16x8xf32>
    %129 = arith.addf %109, %128 : vector<16x8xf32>
    %c4_58 = arith.constant 4 : index
    %c0_59 = arith.constant 0 : index
    %c0_60 = arith.constant 0 : index
    %130 = vector.load %arg4[%c4_58, %c0_59, %c0_60] : memref<12x16x8xf32, #tpu.memory_space<vmem>>, vector<1x16x8xf32>
    %131 = vector.shape_cast %130 : vector<1x16x8xf32> to vector<16x8xf32>
    %132 = arith.mulf %126, %131 : vector<16x8xf32>
    %133 = arith.addf %129, %132 : vector<16x8xf32>
    %c5 = arith.constant 5 : index
    %134 = memref.load %arg1[%c5] : memref<12xf32, #tpu.memory_space<smem>>
    %c5_61 = arith.constant 5 : index
    %135 = memref.load %arg2[%c5_61] : memref<12xf32, #tpu.memory_space<smem>>
    %cst_62 = arith.constant dense<0.000000e+00> : vector<16x32xf32>
    %136 = tpu.matmul %133, %0, %cst_62 {dimension_numbers = #tpu.dot_dimension_numbers<[1], [0], [0], [1], [0, 0, 1, 1], [], []>} : vector<16x8xf32>, vector<8x32xf32>, vector<16x32xf32> -> vector<16x32xf32>
    %137 = vector.broadcast %134 : f32 to vector<1x32xf32>
    %138 = arith.mulf %137, %1 : vector<1x32xf32>
    %139 = vector.broadcast %138 : vector<1x32xf32> to vector<16x32xf32>
    %140 = arith.addf %136, %139 : vector<16x32xf32>
    %141 = vector.broadcast %2 : vector<1x32xf32> to vector<16x32xf32>
    %142 = arith.addf %140, %141 : vector<16x32xf32>
    %cst_63 = arith.constant 0.000000e+00 : f32
    %143 = vector.broadcast %cst_63 : f32 to vector<16x32xf32>
    %144 = arith.maximumf %142, %143 : vector<16x32xf32>
    %cst_64 = arith.constant dense<0.000000e+00> : vector<16x8xf32>
    %145 = tpu.matmul %144, %3, %cst_64 {dimension_numbers = #tpu.dot_dimension_numbers<[1], [0], [0], [1], [0, 0, 1, 1], [], []>} : vector<16x32xf32>, vector<32x8xf32>, vector<16x8xf32> -> vector<16x8xf32>
    %146 = vector.broadcast %4 : vector<1x8xf32> to vector<16x8xf32>
    %147 = arith.addf %145, %146 : vector<16x8xf32>
    %cst_65 = arith.constant dense<0.000000e+00> : vector<16x8xf32>
    %148 = tpu.matmul %133, %5, %cst_65 {dimension_numbers = #tpu.dot_dimension_numbers<[1], [0], [0], [1], [0, 0, 1, 1], [], []>} : vector<16x8xf32>, vector<8x8xf32>, vector<16x8xf32> -> vector<16x8xf32>
    %149 = vector.broadcast %6 : vector<1x8xf32> to vector<16x8xf32>
    %150 = arith.addf %148, %149 : vector<16x8xf32>
    %151 = vector.broadcast %135 : f32 to vector<16x8xf32>
    %152 = arith.mulf %147, %151 : vector<16x8xf32>
    %153 = arith.addf %133, %152 : vector<16x8xf32>
    %c5_66 = arith.constant 5 : index
    %c0_67 = arith.constant 0 : index
    %c0_68 = arith.constant 0 : index
    %154 = vector.load %arg4[%c5_66, %c0_67, %c0_68] : memref<12x16x8xf32, #tpu.memory_space<vmem>>, vector<1x16x8xf32>
    %155 = vector.shape_cast %154 : vector<1x16x8xf32> to vector<16x8xf32>
    %156 = arith.mulf %150, %155 : vector<16x8xf32>
    %157 = arith.addf %153, %156 : vector<16x8xf32>
    %c2_69 = arith.constant 2 : index
    %c0_70 = arith.constant 0 : index
    %c0_71 = arith.constant 0 : index
    %158 = vector.load %arg12[%c2_69, %c0_70, %c0_71] : memref<5x16x8xf32, #tpu.memory_space<vmem>>, vector<1x16x8xf32>
    %159 = vector.shape_cast %158 : vector<1x16x8xf32> to vector<16x8xf32>
    %160 = vector.shape_cast %157 : vector<16x8xf32> to vector<1x16x8xf32>
    tpu.vector_store %arg12[%c2_69, %c0_70, %c0_71], %160 {strides = array<i32>} : memref<5x16x8xf32, #tpu.memory_space<vmem>>, vector<1x16x8xf32>,
    %c6 = arith.constant 6 : index
    %161 = memref.load %arg1[%c6] : memref<12xf32, #tpu.memory_space<smem>>
    %c6_72 = arith.constant 6 : index
    %162 = memref.load %arg2[%c6_72] : memref<12xf32, #tpu.memory_space<smem>>
    %cst_73 = arith.constant dense<0.000000e+00> : vector<16x32xf32>
    %163 = tpu.matmul %157, %0, %cst_73 {dimension_numbers = #tpu.dot_dimension_numbers<[1], [0], [0], [1], [0, 0, 1, 1], [], []>} : vector<16x8xf32>, vector<8x32xf32>, vector<16x32xf32> -> vector<16x32xf32>
    %164 = vector.broadcast %161 : f32 to vector<1x32xf32>
    %165 = arith.mulf %164, %1 : vector<1x32xf32>
    %166 = vector.broadcast %165 : vector<1x32xf32> to vector<16x32xf32>
    %167 = arith.addf %163, %166 : vector<16x32xf32>
    %168 = vector.broadcast %2 : vector<1x32xf32> to vector<16x32xf32>
    %169 = arith.addf %167, %168 : vector<16x32xf32>
    %cst_74 = arith.constant 0.000000e+00 : f32
    %170 = vector.broadcast %cst_74 : f32 to vector<16x32xf32>
    %171 = arith.maximumf %169, %170 : vector<16x32xf32>
    %cst_75 = arith.constant dense<0.000000e+00> : vector<16x8xf32>
    %172 = tpu.matmul %171, %3, %cst_75 {dimension_numbers = #tpu.dot_dimension_numbers<[1], [0], [0], [1], [0, 0, 1, 1], [], []>} : vector<16x32xf32>, vector<32x8xf32>, vector<16x8xf32> -> vector<16x8xf32>
    %173 = vector.broadcast %4 : vector<1x8xf32> to vector<16x8xf32>
    %174 = arith.addf %172, %173 : vector<16x8xf32>
    %cst_76 = arith.constant dense<0.000000e+00> : vector<16x8xf32>
    %175 = tpu.matmul %157, %5, %cst_76 {dimension_numbers = #tpu.dot_dimension_numbers<[1], [0], [0], [1], [0, 0, 1, 1], [], []>} : vector<16x8xf32>, vector<8x8xf32>, vector<16x8xf32> -> vector<16x8xf32>
    %176 = vector.broadcast %6 : vector<1x8xf32> to vector<16x8xf32>
    %177 = arith.addf %175, %176 : vector<16x8xf32>
    %178 = vector.broadcast %162 : f32 to vector<16x8xf32>
    %179 = arith.mulf %174, %178 : vector<16x8xf32>
    %180 = arith.addf %157, %179 : vector<16x8xf32>
    %c6_77 = arith.constant 6 : index
    %c0_78 = arith.constant 0 : index
    %c0_79 = arith.constant 0 : index
    %181 = vector.load %arg4[%c6_77, %c0_78, %c0_79] : memref<12x16x8xf32, #tpu.memory_space<vmem>>, vector<1x16x8xf32>
    %182 = vector.shape_cast %181 : vector<1x16x8xf32> to vector<16x8xf32>
    %183 = arith.mulf %177, %182 : vector<16x8xf32>
    %184 = arith.addf %180, %183 : vector<16x8xf32>
    %c7 = arith.constant 7 : index
    %185 = memref.load %arg1[%c7] : memref<12xf32, #tpu.memory_space<smem>>
    %c7_80 = arith.constant 7 : index
    %186 = memref.load %arg2[%c7_80] : memref<12xf32, #tpu.memory_space<smem>>
    %cst_81 = arith.constant dense<0.000000e+00> : vector<16x32xf32>
    %187 = tpu.matmul %184, %0, %cst_81 {dimension_numbers = #tpu.dot_dimension_numbers<[1], [0], [0], [1], [0, 0, 1, 1], [], []>} : vector<16x8xf32>, vector<8x32xf32>, vector<16x32xf32> -> vector<16x32xf32>
    %188 = vector.broadcast %185 : f32 to vector<1x32xf32>
    %189 = arith.mulf %188, %1 : vector<1x32xf32>
    %190 = vector.broadcast %189 : vector<1x32xf32> to vector<16x32xf32>
    %191 = arith.addf %187, %190 : vector<16x32xf32>
    %192 = vector.broadcast %2 : vector<1x32xf32> to vector<16x32xf32>
    %193 = arith.addf %191, %192 : vector<16x32xf32>
    %cst_82 = arith.constant 0.000000e+00 : f32
    %194 = vector.broadcast %cst_82 : f32 to vector<16x32xf32>
    %195 = arith.maximumf %193, %194 : vector<16x32xf32>
    %cst_83 = arith.constant dense<0.000000e+00> : vector<16x8xf32>
    %196 = tpu.matmul %195, %3, %cst_83 {dimension_numbers = #tpu.dot_dimension_numbers<[1], [0], [0], [1], [0, 0, 1, 1], [], []>} : vector<16x32xf32>, vector<32x8xf32>, vector<16x8xf32> -> vector<16x8xf32>
    %197 = vector.broadcast %4 : vector<1x8xf32> to vector<16x8xf32>
    %198 = arith.addf %196, %197 : vector<16x8xf32>
    %cst_84 = arith.constant dense<0.000000e+00> : vector<16x8xf32>
    %199 = tpu.matmul %184, %5, %cst_84 {dimension_numbers = #tpu.dot_dimension_numbers<[1], [0], [0], [1], [0, 0, 1, 1], [], []>} : vector<16x8xf32>, vector<8x8xf32>, vector<16x8xf32> -> vector<16x8xf32>
    %200 = vector.broadcast %6 : vector<1x8xf32> to vector<16x8xf32>
    %201 = arith.addf %199, %200 : vector<16x8xf32>
    %202 = vector.broadcast %186 : f32 to vector<16x8xf32>
    %203 = arith.mulf %198, %202 : vector<16x8xf32>
    %204 = arith.addf %184, %203 : vector<16x8xf32>
    %c7_85 = arith.constant 7 : index
    %c0_86 = arith.constant 0 : index
    %c0_87 = arith.constant 0 : index
    %205 = vector.load %arg4[%c7_85, %c0_86, %c0_87] : memref<12x16x8xf32, #tpu.memory_space<vmem>>, vector<1x16x8xf32>
    %206 = vector.shape_cast %205 : vector<1x16x8xf32> to vector<16x8xf32>
    %207 = arith.mulf %201, %206 : vector<16x8xf32>
    %208 = arith.addf %204, %207 : vector<16x8xf32>
    %c8 = arith.constant 8 : index
    %209 = memref.load %arg1[%c8] : memref<12xf32, #tpu.memory_space<smem>>
    %c8_88 = arith.constant 8 : index
    %210 = memref.load %arg2[%c8_88] : memref<12xf32, #tpu.memory_space<smem>>
    %cst_89 = arith.constant dense<0.000000e+00> : vector<16x32xf32>
    %211 = tpu.matmul %208, %0, %cst_89 {dimension_numbers = #tpu.dot_dimension_numbers<[1], [0], [0], [1], [0, 0, 1, 1], [], []>} : vector<16x8xf32>, vector<8x32xf32>, vector<16x32xf32> -> vector<16x32xf32>
    %212 = vector.broadcast %209 : f32 to vector<1x32xf32>
    %213 = arith.mulf %212, %1 : vector<1x32xf32>
    %214 = vector.broadcast %213 : vector<1x32xf32> to vector<16x32xf32>
    %215 = arith.addf %211, %214 : vector<16x32xf32>
    %216 = vector.broadcast %2 : vector<1x32xf32> to vector<16x32xf32>
    %217 = arith.addf %215, %216 : vector<16x32xf32>
    %cst_90 = arith.constant 0.000000e+00 : f32
    %218 = vector.broadcast %cst_90 : f32 to vector<16x32xf32>
    %219 = arith.maximumf %217, %218 : vector<16x32xf32>
    %cst_91 = arith.constant dense<0.000000e+00> : vector<16x8xf32>
    %220 = tpu.matmul %219, %3, %cst_91 {dimension_numbers = #tpu.dot_dimension_numbers<[1], [0], [0], [1], [0, 0, 1, 1], [], []>} : vector<16x32xf32>, vector<32x8xf32>, vector<16x8xf32> -> vector<16x8xf32>
    %221 = vector.broadcast %4 : vector<1x8xf32> to vector<16x8xf32>
    %222 = arith.addf %220, %221 : vector<16x8xf32>
    %cst_92 = arith.constant dense<0.000000e+00> : vector<16x8xf32>
    %223 = tpu.matmul %208, %5, %cst_92 {dimension_numbers = #tpu.dot_dimension_numbers<[1], [0], [0], [1], [0, 0, 1, 1], [], []>} : vector<16x8xf32>, vector<8x8xf32>, vector<16x8xf32> -> vector<16x8xf32>
    %224 = vector.broadcast %6 : vector<1x8xf32> to vector<16x8xf32>
    %225 = arith.addf %223, %224 : vector<16x8xf32>
    %226 = vector.broadcast %210 : f32 to vector<16x8xf32>
    %227 = arith.mulf %222, %226 : vector<16x8xf32>
    %228 = arith.addf %208, %227 : vector<16x8xf32>
    %c8_93 = arith.constant 8 : index
    %c0_94 = arith.constant 0 : index
    %c0_95 = arith.constant 0 : index
    %229 = vector.load %arg4[%c8_93, %c0_94, %c0_95] : memref<12x16x8xf32, #tpu.memory_space<vmem>>, vector<1x16x8xf32>
    %230 = vector.shape_cast %229 : vector<1x16x8xf32> to vector<16x8xf32>
    %231 = arith.mulf %225, %230 : vector<16x8xf32>
    %232 = arith.addf %228, %231 : vector<16x8xf32>
    %c3_96 = arith.constant 3 : index
    %c0_97 = arith.constant 0 : index
    %c0_98 = arith.constant 0 : index
    %233 = vector.load %arg12[%c3_96, %c0_97, %c0_98] : memref<5x16x8xf32, #tpu.memory_space<vmem>>, vector<1x16x8xf32>
    %234 = vector.shape_cast %233 : vector<1x16x8xf32> to vector<16x8xf32>
    %235 = vector.shape_cast %232 : vector<16x8xf32> to vector<1x16x8xf32>
    tpu.vector_store %arg12[%c3_96, %c0_97, %c0_98], %235 {strides = array<i32>} : memref<5x16x8xf32, #tpu.memory_space<vmem>>, vector<1x16x8xf32>,
    %c9 = arith.constant 9 : index
    %236 = memref.load %arg1[%c9] : memref<12xf32, #tpu.memory_space<smem>>
    %c9_99 = arith.constant 9 : index
    %237 = memref.load %arg2[%c9_99] : memref<12xf32, #tpu.memory_space<smem>>
    %cst_100 = arith.constant dense<0.000000e+00> : vector<16x32xf32>
    %238 = tpu.matmul %232, %0, %cst_100 {dimension_numbers = #tpu.dot_dimension_numbers<[1], [0], [0], [1], [0, 0, 1, 1], [], []>} : vector<16x8xf32>, vector<8x32xf32>, vector<16x32xf32> -> vector<16x32xf32>
    %239 = vector.broadcast %236 : f32 to vector<1x32xf32>
    %240 = arith.mulf %239, %1 : vector<1x32xf32>
    %241 = vector.broadcast %240 : vector<1x32xf32> to vector<16x32xf32>
    %242 = arith.addf %238, %241 : vector<16x32xf32>
    %243 = vector.broadcast %2 : vector<1x32xf32> to vector<16x32xf32>
    %244 = arith.addf %242, %243 : vector<16x32xf32>
    %cst_101 = arith.constant 0.000000e+00 : f32
    %245 = vector.broadcast %cst_101 : f32 to vector<16x32xf32>
    %246 = arith.maximumf %244, %245 : vector<16x32xf32>
    %cst_102 = arith.constant dense<0.000000e+00> : vector<16x8xf32>
    %247 = tpu.matmul %246, %3, %cst_102 {dimension_numbers = #tpu.dot_dimension_numbers<[1], [0], [0], [1], [0, 0, 1, 1], [], []>} : vector<16x32xf32>, vector<32x8xf32>, vector<16x8xf32> -> vector<16x8xf32>
    %248 = vector.broadcast %4 : vector<1x8xf32> to vector<16x8xf32>
    %249 = arith.addf %247, %248 : vector<16x8xf32>
    %cst_103 = arith.constant dense<0.000000e+00> : vector<16x8xf32>
    %250 = tpu.matmul %232, %5, %cst_103 {dimension_numbers = #tpu.dot_dimension_numbers<[1], [0], [0], [1], [0, 0, 1, 1], [], []>} : vector<16x8xf32>, vector<8x8xf32>, vector<16x8xf32> -> vector<16x8xf32>
    %251 = vector.broadcast %6 : vector<1x8xf32> to vector<16x8xf32>
    %252 = arith.addf %250, %251 : vector<16x8xf32>
    %253 = vector.broadcast %237 : f32 to vector<16x8xf32>
    %254 = arith.mulf %249, %253 : vector<16x8xf32>
    %255 = arith.addf %232, %254 : vector<16x8xf32>
    %c9_104 = arith.constant 9 : index
    %c0_105 = arith.constant 0 : index
    %c0_106 = arith.constant 0 : index
    %256 = vector.load %arg4[%c9_104, %c0_105, %c0_106] : memref<12x16x8xf32, #tpu.memory_space<vmem>>, vector<1x16x8xf32>
    %257 = vector.shape_cast %256 : vector<1x16x8xf32> to vector<16x8xf32>
    %258 = arith.mulf %252, %257 : vector<16x8xf32>
    %259 = arith.addf %255, %258 : vector<16x8xf32>
    %c10 = arith.constant 10 : index
    %260 = memref.load %arg1[%c10] : memref<12xf32, #tpu.memory_space<smem>>
    %c10_107 = arith.constant 10 : index
    %261 = memref.load %arg2[%c10_107] : memref<12xf32, #tpu.memory_space<smem>>
    %cst_108 = arith.constant dense<0.000000e+00> : vector<16x32xf32>
    %262 = tpu.matmul %259, %0, %cst_108 {dimension_numbers = #tpu.dot_dimension_numbers<[1], [0], [0], [1], [0, 0, 1, 1], [], []>} : vector<16x8xf32>, vector<8x32xf32>, vector<16x32xf32> -> vector<16x32xf32>
    %263 = vector.broadcast %260 : f32 to vector<1x32xf32>
    %264 = arith.mulf %263, %1 : vector<1x32xf32>
    %265 = vector.broadcast %264 : vector<1x32xf32> to vector<16x32xf32>
    %266 = arith.addf %262, %265 : vector<16x32xf32>
    %267 = vector.broadcast %2 : vector<1x32xf32> to vector<16x32xf32>
    %268 = arith.addf %266, %267 : vector<16x32xf32>
    %cst_109 = arith.constant 0.000000e+00 : f32
    %269 = vector.broadcast %cst_109 : f32 to vector<16x32xf32>
    %270 = arith.maximumf %268, %269 : vector<16x32xf32>
    %cst_110 = arith.constant dense<0.000000e+00> : vector<16x8xf32>
    %271 = tpu.matmul %270, %3, %cst_110 {dimension_numbers = #tpu.dot_dimension_numbers<[1], [0], [0], [1], [0, 0, 1, 1], [], []>} : vector<16x32xf32>, vector<32x8xf32>, vector<16x8xf32> -> vector<16x8xf32>
    %272 = vector.broadcast %4 : vector<1x8xf32> to vector<16x8xf32>
    %273 = arith.addf %271, %272 : vector<16x8xf32>
    %cst_111 = arith.constant dense<0.000000e+00> : vector<16x8xf32>
    %274 = tpu.matmul %259, %5, %cst_111 {dimension_numbers = #tpu.dot_dimension_numbers<[1], [0], [0], [1], [0, 0, 1, 1], [], []>} : vector<16x8xf32>, vector<8x8xf32>, vector<16x8xf32> -> vector<16x8xf32>
    %275 = vector.broadcast %6 : vector<1x8xf32> to vector<16x8xf32>
    %276 = arith.addf %274, %275 : vector<16x8xf32>
    %277 = vector.broadcast %261 : f32 to vector<16x8xf32>
    %278 = arith.mulf %273, %277 : vector<16x8xf32>
    %279 = arith.addf %259, %278 : vector<16x8xf32>
    %c10_112 = arith.constant 10 : index
    %c0_113 = arith.constant 0 : index
    %c0_114 = arith.constant 0 : index
    %280 = vector.load %arg4[%c10_112, %c0_113, %c0_114] : memref<12x16x8xf32, #tpu.memory_space<vmem>>, vector<1x16x8xf32>
    %281 = vector.shape_cast %280 : vector<1x16x8xf32> to vector<16x8xf32>
    %282 = arith.mulf %276, %281 : vector<16x8xf32>
    %283 = arith.addf %279, %282 : vector<16x8xf32>
    %c11 = arith.constant 11 : index
    %284 = memref.load %arg1[%c11] : memref<12xf32, #tpu.memory_space<smem>>
    %c11_115 = arith.constant 11 : index
    %285 = memref.load %arg2[%c11_115] : memref<12xf32, #tpu.memory_space<smem>>
    %cst_116 = arith.constant dense<0.000000e+00> : vector<16x32xf32>
    %286 = tpu.matmul %283, %0, %cst_116 {dimension_numbers = #tpu.dot_dimension_numbers<[1], [0], [0], [1], [0, 0, 1, 1], [], []>} : vector<16x8xf32>, vector<8x32xf32>, vector<16x32xf32> -> vector<16x32xf32>
    %287 = vector.broadcast %284 : f32 to vector<1x32xf32>
    %288 = arith.mulf %287, %1 : vector<1x32xf32>
    %289 = vector.broadcast %288 : vector<1x32xf32> to vector<16x32xf32>
    %290 = arith.addf %286, %289 : vector<16x32xf32>
    %291 = vector.broadcast %2 : vector<1x32xf32> to vector<16x32xf32>
    %292 = arith.addf %290, %291 : vector<16x32xf32>
    %cst_117 = arith.constant 0.000000e+00 : f32
    %293 = vector.broadcast %cst_117 : f32 to vector<16x32xf32>
    %294 = arith.maximumf %292, %293 : vector<16x32xf32>
    %cst_118 = arith.constant dense<0.000000e+00> : vector<16x8xf32>
    %295 = tpu.matmul %294, %3, %cst_118 {dimension_numbers = #tpu.dot_dimension_numbers<[1], [0], [0], [1], [0, 0, 1, 1], [], []>} : vector<16x32xf32>, vector<32x8xf32>, vector<16x8xf32> -> vector<16x8xf32>
    %296 = vector.broadcast %4 : vector<1x8xf32> to vector<16x8xf32>
    %297 = arith.addf %295, %296 : vector<16x8xf32>
    %cst_119 = arith.constant dense<0.000000e+00> : vector<16x8xf32>
    %298 = tpu.matmul %283, %5, %cst_119 {dimension_numbers = #tpu.dot_dimension_numbers<[1], [0], [0], [1], [0, 0, 1, 1], [], []>} : vector<16x8xf32>, vector<8x8xf32>, vector<16x8xf32> -> vector<16x8xf32>
    %299 = vector.broadcast %6 : vector<1x8xf32> to vector<16x8xf32>
    %300 = arith.addf %298, %299 : vector<16x8xf32>
    %301 = vector.broadcast %285 : f32 to vector<16x8xf32>
    %302 = arith.mulf %297, %301 : vector<16x8xf32>
    %303 = arith.addf %283, %302 : vector<16x8xf32>
    %c11_120 = arith.constant 11 : index
    %c0_121 = arith.constant 0 : index
    %c0_122 = arith.constant 0 : index
    %304 = vector.load %arg4[%c11_120, %c0_121, %c0_122] : memref<12x16x8xf32, #tpu.memory_space<vmem>>, vector<1x16x8xf32>
    %305 = vector.shape_cast %304 : vector<1x16x8xf32> to vector<16x8xf32>
    %306 = arith.mulf %300, %305 : vector<16x8xf32>
    %307 = arith.addf %303, %306 : vector<16x8xf32>
    %c4_123 = arith.constant 4 : index
    %c0_124 = arith.constant 0 : index
    %c0_125 = arith.constant 0 : index
    %308 = vector.load %arg12[%c4_123, %c0_124, %c0_125] : memref<5x16x8xf32, #tpu.memory_space<vmem>>, vector<1x16x8xf32>
    %309 = vector.shape_cast %308 : vector<1x16x8xf32> to vector<16x8xf32>
    %310 = vector.shape_cast %307 : vector<16x8xf32> to vector<1x16x8xf32>
    tpu.vector_store %arg12[%c4_123, %c0_124, %c0_125], %310 {strides = array<i32>} : memref<5x16x8xf32, #tpu.memory_space<vmem>>, vector<1x16x8xf32>,
    return
  }
}

</mosaic_0001>

<llo_original>
// kernel: tpu_custom_call.1
$region0: #{tpu_custom_call.1}
  #allocation0 [shape = 'u32[]', space=smem, size = 0x4, offset = 0x4, fixed_abs, tag = 'smem constant byte address 0x4 - core index']
  #allocation1 [shape = 'u32[144,128]{1,0:T(1,128)}', space=vmem, size = 0x12000, scoped, tag = 'internal scratch']
  %s0 = inlined_call_operand.vmem [shape: f32[5], index: 0, kind: input, shape index: {}]
  %s1 = inlined_call_operand.vmem [shape: f32[12], index: 1, kind: input, shape index: {}]
  %s2 = inlined_call_operand.vmem [shape: f32[12], index: 2, kind: input, shape index: {}]
  %s3 = inlined_call_operand.vmem [shape: f32[16,8], index: 3, kind: input, shape index: {}]
  %s4 = inlined_call_operand.vmem [shape: f32[12,16,8], index: 4, kind: input, shape index: {}]
  %s5 = inlined_call_operand.vmem [shape: f32[8,32], index: 5, kind: input, shape index: {}]
  %s6 = inlined_call_operand.vmem [shape: f32[1,32], index: 6, kind: input, shape index: {}]
  %s7 = inlined_call_operand.vmem [shape: f32[1,32], index: 7, kind: input, shape index: {}]
  %s8 = inlined_call_operand.vmem [shape: f32[32,8], index: 8, kind: input, shape index: {}]
  %s9 = inlined_call_operand.vmem [shape: f32[1,8], index: 9, kind: input, shape index: {}]
  %s10 = inlined_call_operand.vmem [shape: f32[8,8], index: 10, kind: input, shape index: {}]
  %s11 = inlined_call_operand.vmem [shape: f32[1,8], index: 11, kind: input, shape index: {}]
  %s12 = inlined_call_operand.vmem [shape: f32[5,16,8], index: 12, kind: output, shape index: {}]
  %s13 = sld [smem:[#allocation0]]
  $region70: #{tpu_custom_call.1} parent=0
    _
  %s15 = ssub.s32 1, %s13
  %s16 = scalar_select 0, %s15, %s13
  $region1: #{tpu_custom_call.1} parent=0
    #allocation2 [shape = 'u8[512]{0}', space=smem, size = 0x200, scoped, tag = 'input window, operand 0, single buffered']
    #allocation3 [shape = 's32[1]{0}', space=sflag, size = 0x4, scoped, tag = 'scoped memory for tpu_custom_call.1']
    #allocation4 [shape = 'u8[512]{0}', space=smem, size = 0x200, scoped, tag = 'input window, operand 1, single buffered']
    #allocation5 [shape = 's32[1]{0}', space=sflag, size = 0x4, scoped, tag = 'scoped memory for tpu_custom_call.1']
    #allocation6 [shape = 'u8[512]{0}', space=smem, size = 0x200, scoped, tag = 'input window, operand 2, single buffered']
    %17 = vsyncpa [#allocation3], 0
    %18 = vsyncpa [#allocation5], 0
    // Predicated region
    $region2: #{tpu_custom_call.1} parent=1 // pred_check
      _
    $region3: #{tpu_custom_call.1} parent=1 // pred_check_branch
      %20 = sbr.rel (0) target = $region5
    $region4: #{tpu_custom_call.1} parent=1 // pred_region
      %s22 = ssub.s32 16, 16
      %23 = vsyncadd [#allocation3], %s22
      %s25 = sshll.u32 %s0, 4
      %s26 = int_to_ptr.vmem [resolvable:$true] %s25
      %28 = dma.vmem_to_smem %s26, 16, [#allocation2], [#allocation3]
    $region5: #{tpu_custom_call.1} parent=1 // pred_fallthru
      _
    // Predicated region
    $region6: #{tpu_custom_call.1} parent=1 // pred_check
      _
    $region7: #{tpu_custom_call.1} parent=1 // pred_check_branch
      %30 = sbr.rel (0) target = $region9
    $region8: #{tpu_custom_call.1} parent=1 // pred_region
      %s32 = ssub.s32 16, 16
      %33 = vsyncadd [#allocation5], %s32
      %s35 = sshll.u32 %s1, 4
      %s36 = int_to_ptr.vmem [resolvable:$true] %s35
      %38 = dma.vmem_to_smem %s36, 16, [#allocation4], [#allocation5]
    $region9: #{tpu_custom_call.1} parent=1 // pred_fallthru
      _
    // Predicated region
    $region10: #{tpu_custom_call.1} parent=1 // pred_check
      _
    $region11: #{tpu_custom_call.1} parent=1 // pred_check_branch
      %40 = sbr.rel (0) target = $region13
    $region12: #{tpu_custom_call.1} parent=1 // pred_region
      %s42 = ssub.s32 16, 16
      %43 = vsyncadd [#allocation5], %s42
      %s45 = sshll.u32 %s2, 4
      %s46 = int_to_ptr.vmem [resolvable:$true] %s45
      %48 = dma.vmem_to_smem %s46, 16, [#allocation6], [#allocation5]
    $region13: #{tpu_custom_call.1} parent=1 // pred_fallthru
      _
    // Predicated region
    $region14: #{tpu_custom_call.1} parent=1 // pred_check
      _
    $region15: #{tpu_custom_call.1} parent=1 // pred_check_branch
      %50 = sbr.rel (0) target = $region17
    $region16: #{tpu_custom_call.1} parent=1 // pred_region
      _
    $region17: #{tpu_custom_call.1} parent=1 // pred_fallthru
      _
    // Predicated region
    $region18: #{tpu_custom_call.1} parent=1 // pred_check
      _
    $region19: #{tpu_custom_call.1} parent=1 // pred_check_branch
      %52 = sbr.rel (0) target = $region21
    $region20: #{tpu_custom_call.1} parent=1 // pred_region
      _
    $region21: #{tpu_custom_call.1} parent=1 // pred_fallthru
      _
    // Predicated region
    $region22: #{tpu_custom_call.1} parent=1 // pred_check
      _
    $region23: #{tpu_custom_call.1} parent=1 // pred_check_branch
      %54 = sbr.rel (0) target = $region25
    $region24: #{tpu_custom_call.1} parent=1 // pred_region
      _
    $region25: #{tpu_custom_call.1} parent=1 // pred_fallthru
      _
    // Predicated region
    $region26: #{tpu_custom_call.1} parent=1 // pred_check
      _
    $region27: #{tpu_custom_call.1} parent=1 // pred_check_branch
      %56 = sbr.rel (0) target = $region29
    $region28: #{tpu_custom_call.1} parent=1 // pred_region
      _
    $region29: #{tpu_custom_call.1} parent=1 // pred_fallthru
      _
    // Predicated region
    $region30: #{tpu_custom_call.1} parent=1 // pred_check
      _
    $region31: #{tpu_custom_call.1} parent=1 // pred_check_branch
      %58 = sbr.rel (0) target = $region33
    $region32: #{tpu_custom_call.1} parent=1 // pred_region
      _
    $region33: #{tpu_custom_call.1} parent=1 // pred_fallthru
      _
    // Predicated region
    $region34: #{tpu_custom_call.1} parent=1 // pred_check
      _
    $region35: #{tpu_custom_call.1} parent=1 // pred_check_branch
      %60 = sbr.rel (0) target = $region37
    $region36: #{tpu_custom_call.1} parent=1 // pred_region
      _
    $region37: #{tpu_custom_call.1} parent=1 // pred_fallthru
      _
    // Predicated region
    $region38: #{tpu_custom_call.1} parent=1 // pred_check
      _
    $region39: #{tpu_custom_call.1} parent=1 // pred_check_branch
      %62 = sbr.rel (0) target = $region41
    $region40: #{tpu_custom_call.1} parent=1 // pred_region
      _
    $region41: #{tpu_custom_call.1} parent=1 // pred_fallthru
      _
    // Predicated region
    $region42: #{tpu_custom_call.1} parent=1 // pred_check
      _
    $region43: #{tpu_custom_call.1} parent=1 // pred_check_branch
      %64 = sbr.rel (0) target = $region45
    $region44: #{tpu_custom_call.1} parent=1 // pred_region
      _
    $region45: #{tpu_custom_call.1} parent=1 // pred_fallthru
      _
    // Predicated region
    $region46: #{tpu_custom_call.1} parent=1 // pred_check
      _
    $region47: #{tpu_custom_call.1} parent=1 // pred_check_branch
      %66 = sbr.rel (0) target = $region49
    $region48: #{tpu_custom_call.1} parent=1 // pred_region
      _
    $region49: #{tpu_custom_call.1} parent=1 // pred_fallthru
      _
    // Predicated region
    $region50: #{tpu_custom_call.1} parent=1 // pred_check
      _
    $region51: #{tpu_custom_call.1} parent=1 // pred_check_branch
      %68 = sbr.rel (0) target = $region53
    $region52: #{tpu_custom_call.1} parent=1 // pred_region
      %69 = dma.done [#allocation3], 16
    $region53: #{tpu_custom_call.1} parent=1 // pred_fallthru
      _
    // Predicated region
    $region54: #{tpu_custom_call.1} parent=1 // pred_check
      _
    $region55: #{tpu_custom_call.1} parent=1 // pred_check_branch
      %71 = sbr.rel (0) target = $region57
    $region56: #{tpu_custom_call.1} parent=1 // pred_region
      %72 = dma.done [#allocation5], 16
    $region57: #{tpu_custom_call.1} parent=1 // pred_fallthru
      _
    // Predicated region
    $region58: #{tpu_custom_call.1} parent=1 // pred_check
      _
    $region59: #{tpu_custom_call.1} parent=1 // pred_check_branch
      %74 = sbr.rel (0) target = $region61
    $region60: #{tpu_custom_call.1} parent=1 // pred_region
      %75 = dma.done [#allocation5], 16
    $region61: #{tpu_custom_call.1} parent=1 // pred_fallthru
      _
    %76 = sfence
    %v77 = vld [vmem:[%s5] sm:$0xff]
    %v78 = vld [vmem:[%s6] sm:$0x1]
    %v79 = vld [vmem:[%s7] sm:$0x1]
    %v80 = vld [vmem:[%s8] sm:$0xff]
    %v81 = vld [vmem:[%s8 + $0x8] sm:$0xff]
    %v82 = vld [vmem:[%s8 + $0x10] sm:$0xff]
    %v83 = vld [vmem:[%s8 + $0x18] sm:$0xff]
    %v84 = vld [vmem:[%s9] sm:$0x1]
    %v85 = vld [vmem:[%s10] sm:$0xff]
    %v86 = vld [vmem:[%s11] sm:$0x1]
    %v87 = vld [vmem:[%s3] sm:$0xff]
    %v88 = vld [vmem:[%s3 + $0x8] sm:$0xff]
    %vm89 = vcmask 64512
    %90 = vst.msk [vmem:[%s12] sm:$0xff] %vm89, %v87
    %91 = vst.msk [vmem:[%s12 + $0x8] sm:$0xff] %vm89, %v88
    %s92 = sld [smem:[#allocation4]]
    %s93 = sld [smem:[#allocation6]]
    %v94 = vstv %s92
    %v95 = vmul.f32 %v94, %v78
    %v97 = vlaneseq
    %v98 = vshrl.u32 %v97, 7
    %v99 = vsub.s32 0, %v98
    %v100 = vrot.slane %v95, %v99
    %v103 = vsel %vm89, %v87, 0
    %v106 = vsel %vm89, %v88, 0
    %108 = vmatprep.subr.mxu0 0.0
    %109 = vmatpush1.msra.mxu0 %v77
    %110 = vmatprep.subr.mxu0 0.0
    %111 = vmatpush1.msra.mxu0 0.0
    %112 = vmatprep.subr.mxu0 0.0
    %113 = vmatpush1.msra.mxu0 0.0
    %114 = vmatprep.subr.mxu0 0.0
    %115 = vmatpush1.msra.mxu0 0.0
    %116 = vmatprep.subr.mxu0 0.0
    %117 = vmatpush1.msra.mxu0 0.0
    %118 = vmatprep.subr.mxu0 0.0
    %119 = vmatpush1.msra.mxu0 0.0
    %120 = vmatprep.subr.mxu0 0.0
    %121 = vmatpush1.msra.mxu0 0.0
    %122 = vmatprep.subr.mxu0 0.0
    %123 = vmatpush1.msra.mxu0 0.0
    %124 = vmatprep.subr.mxu0 0.0
    %125 = vmatpush1.msra.mxu0 0.0
    %126 = vmatprep.subr.mxu0 0.0
    %127 = vmatpush1.msra.mxu0 0.0
    %128 = vmatprep.subr.mxu0 0.0
    %129 = vmatpush1.msra.mxu0 0.0
    %130 = vmatprep.subr.mxu0 0.0
    %131 = vmatpush1.msra.mxu0 0.0
    %132 = vmatprep.subr.mxu0 0.0
    %133 = vmatpush1.msra.mxu0 0.0
    %134 = vmatprep.subr.mxu0 0.0
    %135 = vmatpush1.msra.mxu0 0.0
    %136 = vmatprep.subr.mxu0 0.0
    %137 = vmatpush1.msra.mxu0 0.0
    %138 = vmatprep.subr.mxu0 0.0
    %139 = vmatpush1.msra.mxu0 0.0
    %140 = vmatprep.subr.mxu0 0.0
    %141 = vmatpush1.msra.mxu0 0.0
    %142 = vmatprep.subr.mxu0 0.0
    %143 = vmatpush1.msra.mxu0 0.0
    %144 = vmatprep.subr.mxu0 0.0
    %145 = vmatpush1.msra.mxu0 0.0
    %146 = vmatprep.subr.mxu0 0.0
    %147 = vmatpush1.msra.mxu0 0.0
    %148 = vmatprep.subr.mxu0 0.0
    %149 = vmatpush1.msra.mxu0 0.0
    %150 = vmatprep.subr.mxu0 0.0
    %151 = vmatpush1.msra.mxu0 0.0
    %152 = vmatprep.subr.mxu0 0.0
    %153 = vmatpush1.msra.mxu0 0.0
    %154 = vmatprep.subr.mxu0 0.0
    %155 = vmatpush1.msra.mxu0 0.0
    %156 = vmatprep.subr.mxu0 0.0
    %157 = vmatpush1.msra.mxu0 0.0
    %158 = vmatprep.subr.mxu0 0.0
    %159 = vmatpush1.msra.mxu0 0.0
    %160 = vmatprep.subr.mxu0 0.0
    %161 = vmatpush1.msra.mxu0 0.0
    %162 = vmatprep.subr.mxu0 0.0
    %163 = vmatpush1.msra.mxu0 0.0
    %164 = vmatprep.subr.mxu0 0.0
    %165 = vmatpush1.msra.mxu0 0.0
    %166 = vmatprep.subr.mxu0 0.0
    %167 = vmatpush1.msra.mxu0 0.0
    %168 = vmatprep.subr.mxu0 0.0
    %169 = vmatpush1.msra.mxu0 0.0
    %170 = vmatprep.subr.mxu0 0.0
    %171 = vmatpush1.msra.mxu0 0.0
    %172 = vmatprep.mubr.f32.mxu0 0.0
    %173 = vmatmul.mubr.f32.gmra.mrb[0].mxu0 %v103
    %v174 = vpop.f32.mrb[0].mxu0
    %v175 = vadd.f32 %v100, %v174
    %v176 = vpop.f32.mrb[0].mxu0
    %177 = vmatprep.mubr.f32.mxu0 0.0
    %178 = vmatmul.mubr.f32.gmra.mrb[0].mxu0 %v106
    %v179 = vpop.f32.mrb[0].mxu0
    %v180 = vadd.f32 %v100, %v179
    %v181 = vpop.f32.mrb[0].mxu0
    %182 = vdwg.mxu0
    %v184 = vlaneseq
    %v185 = vshrl.u32 %v184, 7
    %v186 = vsub.s32 0, %v185
    %v187 = vrot.slane %v79, %v186
    %v189 = vadd.f32 %v175, %v187
    %v190 = vadd.f32 %v180, %v187
    %v191 = vmax.f32 %v189, 0.0
    %v192 = vmax.f32 %v190, 0.0
    %v194 = vlaneseq
    %v195 = vshrl.u32 %v194, 7
    %v196 = vsub.s32 0, %v195
    %v197 = vrot.slane %v84, %v196
    %vm199 = vcmask 261120
    %v201 = vsel %vm199, %v191, 0
    %v204 = vsel %vm199, %v192, 0
    %206 = vmatprep.subr.mxu0 0.0
    %207 = vmatpush1.msra.mxu0 %v80
    %208 = vmatprep.subr.mxu0 0.0
    %209 = vmatpush1.msra.mxu0 %v81
    %210 = vmatprep.subr.mxu0 0.0
    %211 = vmatpush1.msra.mxu0 %v82
    %212 = vmatprep.subr.mxu0 0.0
    %213 = vmatpush1.msra.mxu0 %v83
    %214 = vmatprep.subr.mxu0 0.0
    %215 = vmatpush1.msra.mxu0 0.0
    %216 = vmatprep.subr.mxu0 0.0
    %217 = vmatpush1.msra.mxu0 0.0
    %218 = vmatprep.subr.mxu0 0.0
    %219 = vmatpush1.msra.mxu0 0.0
    %220 = vmatprep.subr.mxu0 0.0
    %221 = vmatpush1.msra.mxu0 0.0
    %222 = vmatprep.subr.mxu0 0.0
    %223 = vmatpush1.msra.mxu0 0.0
    %224 = vmatprep.subr.mxu0 0.0
    %225 = vmatpush1.msra.mxu0 0.0
    %226 = vmatprep.subr.mxu0 0.0
    %227 = vmatpush1.msra.mxu0 0.0
    %228 = vmatprep.subr.mxu0 0.0
    %229 = vmatpush1.msra.mxu0 0.0
    %230 = vmatprep.subr.mxu0 0.0
    %231 = vmatpush1.msra.mxu0 0.0
    %232 = vmatprep.subr.mxu0 0.0
    %233 = vmatpush1.msra.mxu0 0.0
    %234 = vmatprep.subr.mxu0 0.0
    %235 = vmatpush1.msra.mxu0 0.0
    %236 = vmatprep.subr.mxu0 0.0
    %237 = vmatpush1.msra.mxu0 0.0
    %238 = vmatprep.subr.mxu0 0.0
    %239 = vmatpush1.msra.mxu0 0.0
    %240 = vmatprep.subr.mxu0 0.0
    %241 = vmatpush1.msra.mxu0 0.0
    %242 = vmatprep.subr.mxu0 0.0
    %243 = vmatpush1.msra.mxu0 0.0
    %244 = vmatprep.subr.mxu0 0.0
    %245 = vmatpush1.msra.mxu0 0.0
    %246 = vmatprep.subr.mxu0 0.0
    %247 = vmatpush1.msra.mxu0 0.0
    %248 = vmatprep.subr.mxu0 0.0
    %249 = vmatpush1.msra.mxu0 0.0
    %250 = vmatprep.subr.mxu0 0.0
    %251 = vmatpush1.msra.mxu0 0.0
    %252 = vmatprep.subr.mxu0 0.0
    %253 = vmatpush1.msra.mxu0 0.0
    %254 = vmatprep.subr.mxu0 0.0
    %255 = vmatpush1.msra.mxu0 0.0
    %256 = vmatprep.subr.mxu0 0.0
    %257 = vmatpush1.msra.mxu0 0.0
    %258 = vmatprep.subr.mxu0 0.0
    %259 = vmatpush1.msra.mxu0 0.0
    %260 = vmatprep.subr.mxu0 0.0
    %261 = vmatpush1.msra.mxu0 0.0
    %262 = vmatprep.subr.mxu0 0.0
    %263 = vmatpush1.msra.mxu0 0.0
    %264 = vmatprep.subr.mxu0 0.0
    %265 = vmatpush1.msra.mxu0 0.0
    %266 = vmatprep.subr.mxu0 0.0
    %267 = vmatpush1.msra.mxu0 0.0
    %268 = vmatprep.subr.mxu0 0.0
    %269 = vmatpush1.msra.mxu0 0.0
    %270 = vmatprep.mubr.f32.mxu0 0.0
    %271 = vmatmul.mubr.f32.gmra.mrb[0].mxu0 %v201
    %v272 = vpop.f32.mrb[0].mxu0
    %v273 = vadd.f32 %v197, %v272
    %v274 = vpop.f32.mrb[0].mxu0
    %275 = vmatprep.mubr.f32.mxu0 0.0
    %276 = vmatmul.mubr.f32.gmra.mrb[0].mxu0 %v204
    %v277 = vpop.f32.mrb[0].mxu0
    %v278 = vadd.f32 %v197, %v277
    %v279 = vpop.f32.mrb[0].mxu0
    %280 = vdwg.mxu0
    %v282 = vlaneseq
    %v283 = vshrl.u32 %v282, 7
    %v284 = vsub.s32 0, %v283
    %v285 = vrot.slane %v86, %v284
    %287 = vmatprep.subr.mxu0 0.0
    %288 = vmatpush1.msra.mxu0 %v85
    %289 = vmatprep.subr.mxu0 0.0
    %290 = vmatpush1.msra.mxu0 0.0
    %291 = vmatprep.subr.mxu0 0.0
    %292 = vmatpush1.msra.mxu0 0.0
    %293 = vmatprep.subr.mxu0 0.0
    %294 = vmatpush1.msra.mxu0 0.0
    %295 = vmatprep.subr.mxu0 0.0
    %296 = vmatpush1.msra.mxu0 0.0
    %297 = vmatprep.subr.mxu0 0.0
    %298 = vmatpush1.msra.mxu0 0.0
    %299 = vmatprep.subr.mxu0 0.0
    %300 = vmatpush1.msra.mxu0 0.0
    %301 = vmatprep.subr.mxu0 0.0
    %302 = vmatpush1.msra.mxu0 0.0
    %303 = vmatprep.subr.mxu0 0.0
    %304 = vmatpush1.msra.mxu0 0.0
    %305 = vmatprep.subr.mxu0 0.0
    %306 = vmatpush1.msra.mxu0 0.0
    %307 = vmatprep.subr.mxu0 0.0
    %308 = vmatpush1.msra.mxu0 0.0
    %309 = vmatprep.subr.mxu0 0.0
    %310 = vmatpush1.msra.mxu0 0.0
    %311 = vmatprep.subr.mxu0 0.0
    %312 = vmatpush1.msra.mxu0 0.0
    %313 = vmatprep.subr.mxu0 0.0
    %314 = vmatpush1.msra.mxu0 0.0
    %315 = vmatprep.subr.mxu0 0.0
    %316 = vmatpush1.msra.mxu0 0.0
    %317 = vmatprep.subr.mxu0 0.0
    %318 = vmatpush1.msra.mxu0 0.0
    %319 = vmatprep.subr.mxu0 0.0
    %320 = vmatpush1.msra.mxu0 0.0
    %321 = vmatprep.subr.mxu0 0.0
    %322 = vmatpush1.msra.mxu0 0.0
    %323 = vmatprep.subr.mxu0 0.0
    %324 = vmatpush1.msra.mxu0 0.0
    %325 = vmatprep.subr.mxu0 0.0
    %326 = vmatpush1.msra.mxu0 0.0
    %327 = vmatprep.subr.mxu0 0.0
    %328 = vmatpush1.msra.mxu0 0.0
    %329 = vmatprep.subr.mxu0 0.0
    %330 = vmatpush1.msra.mxu0 0.0
    %331 = vmatprep.subr.mxu0 0.0
    %332 = vmatpush1.msra.mxu0 0.0
    %333 = vmatprep.subr.mxu0 0.0
    %334 = vmatpush1.msra.mxu0 0.0
    %335 = vmatprep.subr.mxu0 0.0
    %336 = vmatpush1.msra.mxu0 0.0
    %337 = vmatprep.subr.mxu0 0.0
    %338 = vmatpush1.msra.mxu0 0.0
    %339 = vmatprep.subr.mxu0 0.0
    %340 = vmatpush1.msra.mxu0 0.0
    %341 = vmatprep.subr.mxu0 0.0
    %342 = vmatpush1.msra.mxu0 0.0
    %343 = vmatprep.subr.mxu0 0.0
    %344 = vmatpush1.msra.mxu0 0.0
    %345 = vmatprep.subr.mxu0 0.0
    %346 = vmatpush1.msra.mxu0 0.0
    %347 = vmatprep.subr.mxu0 0.0
    %348 = vmatpush1.msra.mxu0 0.0
    %349 = vmatprep.subr.mxu0 0.0
    %350 = vmatpush1.msra.mxu0 0.0
    %351 = vmatprep.mubr.f32.mxu0 0.0
    %352 = vmatmul.mubr.f32.gmra.mrb[0].mxu0 %v103
    %v353 = vpop.f32.mrb[0].mxu0
    %v354 = vadd.f32 %v285, %v353
    %v355 = vpop.f32.mrb[0].mxu0
    %356 = vmatprep.mubr.f32.mxu0 0.0
    %357 = vmatmul.mubr.f32.gmra.mrb[0].mxu0 %v106
    %v358 = vpop.f32.mrb[0].mxu0
    %v359 = vadd.f32 %v285, %v358
    %v360 = vpop.f32.mrb[0].mxu0
    %361 = vdwg.mxu0
    %v362 = vstv %s93
    %v363 = vmul.f32 %v273, %v362
    %v364 = vmul.f32 %v278, %v362
    %v365 = vadd.f32 %v87, %v363
    %v366 = vadd.f32 %v88, %v364
    %v367 = vld [vmem:[%s4] sm:$0xff]
    %v368 = vld [vmem:[%s4 + $0x8] sm:$0xff]
    %v369 = vmul.f32 %v354, %v367
    %v370 = vmul.f32 %v359, %v368
    %v371 = vadd.f32 %v365, %v369
    %v372 = vadd.f32 %v366, %v370
    %s373 = sld [smem:[#allocation4 + $0x1]]
    %s374 = sld [smem:[#allocation6 + $0x1]]
    %v375 = vstv %s373
    %v376 = vmul.f32 %v375, %v78
    %v378 = vlaneseq
    %v379 = vshrl.u32 %v378, 7
    %v380 = vsub.s32 0, %v379
    %v381 = vrot.slane %v376, %v380
    %v384 = vsel %vm89, %v371, 0
    %v387 = vsel %vm89, %v372, 0
    %389 = vmatprep.subr.mxu0 0.0
    %390 = vmatpush1.msra.mxu0 %v77
    %391 = vmatprep.subr.mxu0 0.0
    %392 = vmatpush1.msra.mxu0 0.0
    %393 = vmatprep.subr.mxu0 0.0
    %394 = vmatpush1.msra.mxu0 0.0
    %395 = vmatprep.subr.mxu0 0.0
    %396 = vmatpush1.msra.mxu0 0.0
    %397 = vmatprep.subr.mxu0 0.0
    %398 = vmatpush1.msra.mxu0 0.0
    %399 = vmatprep.subr.mxu0 0.0
    %400 = vmatpush1.msra.mxu0 0.0
    %401 = vmatprep.subr.mxu0 0.0
    %402 = vmatpush1.msra.mxu0 0.0
    %403 = vmatprep.subr.mxu0 0.0
    %404 = vmatpush1.msra.mxu0 0.0
    %405 = vmatprep.subr.mxu0 0.0
    %406 = vmatpush1.msra.mxu0 0.0
    %407 = vmatprep.subr.mxu0 0.0
    %408 = vmatpush1.msra.mxu0 0.0
    %409 = vmatprep.subr.mxu0 0.0
    %410 = vmatpush1.msra.mxu0 0.0
    %411 = vmatprep.subr.mxu0 0.0
    %412 = vmatpush1.msra.mxu0 0.0
    %413 = vmatprep.subr.mxu0 0.0
    %414 = vmatpush1.msra.mxu0 0.0
    %415 = vmatprep.subr.mxu0 0.0
    %416 = vmatpush1.msra.mxu0 0.0
    %417 = vmatprep.subr.mxu0 0.0
    %418 = vmatpush1.msra.mxu0 0.0
    %419 = vmatprep.subr.mxu0 0.0
    %420 = vmatpush1.msra.mxu0 0.0
    %421 = vmatprep.subr.mxu0 0.0
    %422 = vmatpush1.msra.mxu0 0.0
    %423 = vmatprep.subr.mxu0 0.0
    %424 = vmatpush1.msra.mxu0 0.0
    %425 = vmatprep.subr.mxu0 0.0
    %426 = vmatpush1.msra.mxu0 0.0
    %427 = vmatprep.subr.mxu0 0.0
    %428 = vmatpush1.msra.mxu0 0.0
    %429 = vmatprep.subr.mxu0 0.0
    %430 = vmatpush1.msra.mxu0 0.0
    %431 = vmatprep.subr.mxu0 0.0
    %432 = vmatpush1.msra.mxu0 0.0
    %433 = vmatprep.subr.mxu0 0.0
    %434 = vmatpush1.msra.mxu0 0.0
    %435 = vmatprep.subr.mxu0 0.0
    %436 = vmatpush1.msra.mxu0 0.0
    %437 = vmatprep.subr.mxu0 0.0
    %438 = vmatpush1.msra.mxu0 0.0
    %439 = vmatprep.subr.mxu0 0.0
    %440 = vmatpush1.msra.mxu0 0.0
    %441 = vmatprep.subr.mxu0 0.0
    %442 = vmatpush1.msra.mxu0 0.0
    %443 = vmatprep.subr.mxu0 0.0
    %444 = vmatpush1.msra.mxu0 0.0
    %445 = vmatprep.subr.mxu0 0.0
    %446 = vmatpush1.msra.mxu0 0.0
    %447 = vmatprep.subr.mxu0 0.0
    %448 = vmatpush1.msra.mxu0 0.0
    %449 = vmatprep.subr.mxu0 0.0
    %450 = vmatpush1.msra.mxu0 0.0
    %451 = vmatprep.subr.mxu0 0.0
    %452 = vmatpush1.msra.mxu0 0.0
    %453 = vmatprep.mubr.f32.mxu0 0.0
    %454 = vmatmul.mubr.f32.gmra.mrb[0].mxu0 %v384
    %v455 = vpop.f32.mrb[0].mxu0
    %v456 = vadd.f32 %v381, %v455
    %v457 = vpop.f32.mrb[0].mxu0
    %458 = vmatprep.mubr.f32.mxu0 0.0
    %459 = vmatmul.mubr.f32.gmra.mrb[0].mxu0 %v387
    %v460 = vpop.f32.mrb[0].mxu0
    %v461 = vadd.f32 %v381, %v460
    %v462 = vpop.f32.mrb[0].mxu0
    %463 = vdwg.mxu0
    %v464 = vadd.f32 %v456, %v187
    %v465 = vadd.f32 %v461, %v187
    %v466 = vmax.f32 %v464, 0.0
    %v467 = vmax.f32 %v465, 0.0
    %v469 = vsel %vm199, %v466, 0
    %v472 = vsel %vm199, %v467, 0
    %474 = vmatprep.subr.mxu0 0.0
    %475 = vmatpush1.msra.mxu0 %v80
    %476 = vmatprep.subr.mxu0 0.0
    %477 = vmatpush1.msra.mxu0 %v81
    %478 = vmatprep.subr.mxu0 0.0
    %479 = vmatpush1.msra.mxu0 %v82
    %480 = vmatprep.subr.mxu0 0.0
    %481 = vmatpush1.msra.mxu0 %v83
    %482 = vmatprep.subr.mxu0 0.0
    %483 = vmatpush1.msra.mxu0 0.0
    %484 = vmatprep.subr.mxu0 0.0
    %485 = vmatpush1.msra.mxu0 0.0
    %486 = vmatprep.subr.mxu0 0.0
    %487 = vmatpush1.msra.mxu0 0.0
    %488 = vmatprep.subr.mxu0 0.0
    %489 = vmatpush1.msra.mxu0 0.0
    %490 = vmatprep.subr.mxu0 0.0
    %491 = vmatpush1.msra.mxu0 0.0
    %492 = vmatprep.subr.mxu0 0.0
    %493 = vmatpush1.msra.mxu0 0.0
    %494 = vmatprep.subr.mxu0 0.0
    %495 = vmatpush1.msra.mxu0 0.0
    %496 = vmatprep.subr.mxu0 0.0
    %497 = vmatpush1.msra.mxu0 0.0
    %498 = vmatprep.subr.mxu0 0.0
    %499 = vmatpush1.msra.mxu0 0.0
    %500 = vmatprep.subr.mxu0 0.0
    %501 = vmatpush1.msra.mxu0 0.0
    %502 = vmatprep.subr.mxu0 0.0
    %503 = vmatpush1.msra.mxu0 0.0
    %504 = vmatprep.subr.mxu0 0.0
    %505 = vmatpush1.msra.mxu0 0.0
    %506 = vmatprep.subr.mxu0 0.0
    %507 = vmatpush1.msra.mxu0 0.0
    %508 = vmatprep.subr.mxu0 0.0
    %509 = vmatpush1.msra.mxu0 0.0
    %510 = vmatprep.subr.mxu0 0.0
    %511 = vmatpush1.msra.mxu0 0.0
    %512 = vmatprep.subr.mxu0 0.0
    %513 = vmatpush1.msra.mxu0 0.0
    %514 = vmatprep.subr.mxu0 0.0
    %515 = vmatpush1.msra.mxu0 0.0
    %516 = vmatprep.subr.mxu0 0.0
    %517 = vmatpush1.msra.mxu0 0.0
    %518 = vmatprep.subr.mxu0 0.0
    %519 = vmatpush1.msra.mxu0 0.0
    %520 = vmatprep.subr.mxu0 0.0
    %521 = vmatpush1.msra.mxu0 0.0
    %522 = vmatprep.subr.mxu0 0.0
    %523 = vmatpush1.msra.mxu0 0.0
    %524 = vmatprep.subr.mxu0 0.0
    %525 = vmatpush1.msra.mxu0 0.0
    %526 = vmatprep.subr.mxu0 0.0
    %527 = vmatpush1.msra.mxu0 0.0
    %528 = vmatprep.subr.mxu0 0.0
    %529 = vmatpush1.msra.mxu0 0.0
    %530 = vmatprep.subr.mxu0 0.0
    %531 = vmatpush1.msra.mxu0 0.0
    %532 = vmatprep.subr.mxu0 0.0
    %533 = vmatpush1.msra.mxu0 0.0
    %534 = vmatprep.subr.mxu0 0.0
    %535 = vmatpush1.msra.mxu0 0.0
    %536 = vmatprep.subr.mxu0 0.0
    %537 = vmatpush1.msra.mxu0 0.0
    %538 = vmatprep.mubr.f32.mxu0 0.0
    %539 = vmatmul.mubr.f32.gmra.mrb[0].mxu0 %v469
    %v540 = vpop.f32.mrb[0].mxu0
    %v541 = vadd.f32 %v197, %v540
    %v542 = vpop.f32.mrb[0].mxu0
    %543 = vmatprep.mubr.f32.mxu0 0.0
    %544 = vmatmul.mubr.f32.gmra.mrb[0].mxu0 %v472
    %v545 = vpop.f32.mrb[0].mxu0
    %v546 = vadd.f32 %v197, %v545
    %v547 = vpop.f32.mrb[0].mxu0
    %548 = vdwg.mxu0
    %549 = vmatprep.subr.mxu0 0.0
    %550 = vmatpush1.msra.mxu0 %v85
    %551 = vmatprep.subr.mxu0 0.0
    %552 = vmatpush1.msra.mxu0 0.0
    %553 = vmatprep.subr.mxu0 0.0
    %554 = vmatpush1.msra.mxu0 0.0
    %555 = vmatprep.subr.mxu0 0.0
    %556 = vmatpush1.msra.mxu0 0.0
    %557 = vmatprep.subr.mxu0 0.0
    %558 = vmatpush1.msra.mxu0 0.0
    %559 = vmatprep.subr.mxu0 0.0
    %560 = vmatpush1.msra.mxu0 0.0
    %561 = vmatprep.subr.mxu0 0.0
    %562 = vmatpush1.msra.mxu0 0.0
    %563 = vmatprep.subr.mxu0 0.0
    %564 = vmatpush1.msra.mxu0 0.0
    %565 = vmatprep.subr.mxu0 0.0
    %566 = vmatpush1.msra.mxu0 0.0
    %567 = vmatprep.subr.mxu0 0.0
    %568 = vmatpush1.msra.mxu0 0.0
    %569 = vmatprep.subr.mxu0 0.0
    %570 = vmatpush1.msra.mxu0 0.0
    %571 = vmatprep.subr.mxu0 0.0
    %572 = vmatpush1.msra.mxu0 0.0
    %573 = vmatprep.subr.mxu0 0.0
    %574 = vmatpush1.msra.mxu0 0.0
    %575 = vmatprep.subr.mxu0 0.0
    %576 = vmatpush1.msra.mxu0 0.0
    %577 = vmatprep.subr.mxu0 0.0
    %578 = vmatpush1.msra.mxu0 0.0
    %579 = vmatprep.subr.mxu0 0.0
    %580 = vmatpush1.msra.mxu0 0.0
    %581 = vmatprep.subr.mxu0 0.0
    %582 = vmatpush1.msra.mxu0 0.0
    %583 = vmatprep.subr.mxu0 0.0
    %584 = vmatpush1.msra.mxu0 0.0
    %585 = vmatprep.subr.mxu0 0.0
    %586 = vmatpush1.msra.mxu0 0.0
    %587 = vmatprep.subr.mxu0 0.0
    %588 = vmatpush1.msra.mxu0 0.0
    %589 = vmatprep.subr.mxu0 0.0
    %590 = vmatpush1.msra.mxu0 0.0
    %591 = vmatprep.subr.mxu0 0.0
    %592 = vmatpush1.msra.mxu0 0.0
    %593 = vmatprep.subr.mxu0 0.0
    %594 = vmatpush1.msra.mxu0 0.0
    %595 = vmatprep.subr.mxu0 0.0
    %596 = vmatpush1.msra.mxu0 0.0
    %597 = vmatprep.subr.mxu0 0.0
    %598 = vmatpush1.msra.mxu0 0.0
    %599 = vmatprep.subr.mxu0 0.0
    %600 = vmatpush1.msra.mxu0 0.0
    %601 = vmatprep.subr.mxu0 0.0
    %602 = vmatpush1.msra.mxu0 0.0
    %603 = vmatprep.subr.mxu0 0.0
    %604 = vmatpush1.msra.mxu0 0.0
    %605 = vmatprep.subr.mxu0 0.0
    %606 = vmatpush1.msra.mxu0 0.0
    %607 = vmatprep.subr.mxu0 0.0
    %608 = vmatpush1.msra.mxu0 0.0
    %609 = vmatprep.subr.mxu0 0.0
    %610 = vmatpush1.msra.mxu0 0.0
    %611 = vmatprep.subr.mxu0 0.0
    %612 = vmatpush1.msra.mxu0 0.0
    %613 = vmatprep.mubr.f32.mxu0 0.0
    %614 = vmatmul.mubr.f32.gmra.mrb[0].mxu0 %v384
    %v615 = vpop.f32.mrb[0].mxu0
    %v616 = vadd.f32 %v285, %v615
    %v617 = vpop.f32.mrb[0].mxu0
    %618 = vmatprep.mubr.f32.mxu0 0.0
    %619 = vmatmul.mubr.f32.gmra.mrb[0].mxu0 %v387
    %v620 = vpop.f32.mrb[0].mxu0
    %v621 = vadd.f32 %v285, %v620
    %v622 = vpop.f32.mrb[0].mxu0
    %623 = vdwg.mxu0
    %v624 = vstv %s374
    %v625 = vmul.f32 %v541, %v624
    %v626 = vmul.f32 %v546, %v624
    %v627 = vadd.f32 %v371, %v625
    %v628 = vadd.f32 %v372, %v626
    %s629 = scalar_lea.vmem %s4, 16
    %v630 = vld [vmem:[%s629] sm:$0xff]
    %v631 = vld [vmem:[%s629 + $0x8] sm:$0xff]
    %v632 = vmul.f32 %v616, %v630
    %v633 = vmul.f32 %v621, %v631
    %v634 = vadd.f32 %v627, %v632
    %v635 = vadd.f32 %v628, %v633
    %s636 = sld [smem:[#allocation4 + $0x2]]
    %s637 = sld [smem:[#allocation6 + $0x2]]
    %v638 = vstv %s636
    %v639 = vmul.f32 %v638, %v78
    %v641 = vlaneseq
    %v642 = vshrl.u32 %v641, 7
    %v643 = vsub.s32 0, %v642
    %v644 = vrot.slane %v639, %v643
    %v647 = vsel %vm89, %v634, 0
    %v650 = vsel %vm89, %v635, 0
    %652 = vmatprep.subr.mxu0 0.0
    %653 = vmatpush1.msra.mxu0 %v77
    %654 = vmatprep.subr.mxu0 0.0
    %655 = vmatpush1.msra.mxu0 0.0
    %656 = vmatprep.subr.mxu0 0.0
    %657 = vmatpush1.msra.mxu0 0.0
    %658 = vmatprep.subr.mxu0 0.0
    %659 = vmatpush1.msra.mxu0 0.0
    %660 = vmatprep.subr.mxu0 0.0
    %661 = vmatpush1.msra.mxu0 0.0
    %662 = vmatprep.subr.mxu0 0.0
    %663 = vmatpush1.msra.mxu0 0.0
    %664 = vmatprep.subr.mxu0 0.0
    %665 = vmatpush1.msra.mxu0 0.0
    %666 = vmatprep.subr.mxu0 0.0
    %667 = vmatpush1.msra.mxu0 0.0
    %668 = vmatprep.subr.mxu0 0.0
    %669 = vmatpush1.msra.mxu0 0.0
    %670 = vmatprep.subr.mxu0 0.0
    %671 = vmatpush1.msra.mxu0 0.0
    %672 = vmatprep.subr.mxu0 0.0
    %673 = vmatpush1.msra.mxu0 0.0
    %674 = vmatprep.subr.mxu0 0.0
    %675 = vmatpush1.msra.mxu0 0.0
    %676 = vmatprep.subr.mxu0 0.0
    %677 = vmatpush1.msra.mxu0 0.0
    %678 = vmatprep.subr.mxu0 0.0
    %679 = vmatpush1.msra.mxu0 0.0
    %680 = vmatprep.subr.mxu0 0.0
    %681 = vmatpush1.msra.mxu0 0.0
    %682 = vmatprep.subr.mxu0 0.0
    %683 = vmatpush1.msra.mxu0 0.0
    %684 = vmatprep.subr.mxu0 0.0
    %685 = vmatpush1.msra.mxu0 0.0
    %686 = vmatprep.subr.mxu0 0.0
    %687 = vmatpush1.msra.mxu0 0.0
    %688 = vmatprep.subr.mxu0 0.0
    %689 = vmatpush1.msra.mxu0 0.0
    %690 = vmatprep.subr.mxu0 0.0
    %691 = vmatpush1.msra.mxu0 0.0
    %692 = vmatprep.subr.mxu0 0.0
    %693 = vmatpush1.msra.mxu0 0.0
    %694 = vmatprep.subr.mxu0 0.0
    %695 = vmatpush1.msra.mxu0 0.0
    %696 = vmatprep.subr.mxu0 0.0
    %697 = vmatpush1.msra.mxu0 0.0
    %698 = vmatprep.subr.mxu0 0.0
    %699 = vmatpush1.msra.mxu0 0.0
    %700 = vmatprep.subr.mxu0 0.0
    %701 = vmatpush1.msra.mxu0 0.0
    %702 = vmatprep.subr.mxu0 0.0
    %703 = vmatpush1.msra.mxu0 0.0
    %704 = vmatprep.subr.mxu0 0.0
    %705 = vmatpush1.msra.mxu0 0.0
    %706 = vmatprep.subr.mxu0 0.0
    %707 = vmatpush1.msra.mxu0 0.0
    %708 = vmatprep.subr.mxu0 0.0
    %709 = vmatpush1.msra.mxu0 0.0
    %710 = vmatprep.subr.mxu0 0.0
    %711 = vmatpush1.msra.mxu0 0.0
    %712 = vmatprep.subr.mxu0 0.0
    %713 = vmatpush1.msra.mxu0 0.0
    %714 = vmatprep.subr.mxu0 0.0
    %715 = vmatpush1.msra.mxu0 0.0
    %716 = vmatprep.mubr.f32.mxu0 0.0
    %717 = vmatmul.mubr.f32.gmra.mrb[0].mxu0 %v647
    %v718 = vpop.f32.mrb[0].mxu0
    %v719 = vadd.f32 %v644, %v718
    %v720 = vpop.f32.mrb[0].mxu0
    %721 = vmatprep.mubr.f32.mxu0 0.0
    %722 = vmatmul.mubr.f32.gmra.mrb[0].mxu0 %v650
    %v723 = vpop.f32.mrb[0].mxu0
    %v724 = vadd.f32 %v644, %v723
    %v725 = vpop.f32.mrb[0].mxu0
    %726 = vdwg.mxu0
    %v727 = vadd.f32 %v719, %v187
    %v728 = vadd.f32 %v724, %v187
    %v729 = vmax.f32 %v727, 0.0
    %v730 = vmax.f32 %v728, 0.0
    %v732 = vsel %vm199, %v729, 0
    %v735 = vsel %vm199, %v730, 0
    %737 = vmatprep.subr.mxu0 0.0
    %738 = vmatpush1.msra.mxu0 %v80
    %739 = vmatprep.subr.mxu0 0.0
    %740 = vmatpush1.msra.mxu0 %v81
    %741 = vmatprep.subr.mxu0 0.0
    %742 = vmatpush1.msra.mxu0 %v82
    %743 = vmatprep.subr.mxu0 0.0
    %744 = vmatpush1.msra.mxu0 %v83
    %745 = vmatprep.subr.mxu0 0.0
    %746 = vmatpush1.msra.mxu0 0.0
    %747 = vmatprep.subr.mxu0 0.0
    %748 = vmatpush1.msra.mxu0 0.0
    %749 = vmatprep.subr.mxu0 0.0
    %750 = vmatpush1.msra.mxu0 0.0
    %751 = vmatprep.subr.mxu0 0.0
    %752 = vmatpush1.msra.mxu0 0.0
    %753 = vmatprep.subr.mxu0 0.0
    %754 = vmatpush1.msra.mxu0 0.0
    %755 = vmatprep.subr.mxu0 0.0
    %756 = vmatpush1.msra.mxu0 0.0
    %757 = vmatprep.subr.mxu0 0.0
    %758 = vmatpush1.msra.mxu0 0.0
    %759 = vmatprep.subr.mxu0 0.0
    %760 = vmatpush1.msra.mxu0 0.0
    %761 = vmatprep.subr.mxu0 0.0
    %762 = vmatpush1.msra.mxu0 0.0
    %763 = vmatprep.subr.mxu0 0.0
    %764 = vmatpush1.msra.mxu0 0.0
    %765 = vmatprep.subr.mxu0 0.0
    %766 = vmatpush1.msra.mxu0 0.0
    %767 = vmatprep.subr.mxu0 0.0
    %768 = vmatpush1.msra.mxu0 0.0
    %769 = vmatprep.subr.mxu0 0.0
    %770 = vmatpush1.msra.mxu0 0.0
    %771 = vmatprep.subr.mxu0 0.0
    %772 = vmatpush1.msra.mxu0 0.0
    %773 = vmatprep.subr.mxu0 0.0
    %774 = vmatpush1.msra.mxu0 0.0
    %775 = vmatprep.subr.mxu0 0.0
    %776 = vmatpush1.msra.mxu0 0.0
    %777 = vmatprep.subr.mxu0 0.0
    %778 = vmatpush1.msra.mxu0 0.0
    %779 = vmatprep.subr.mxu0 0.0
    %780 = vmatpush1.msra.mxu0 0.0
    %781 = vmatprep.subr.mxu0 0.0
    %782 = vmatpush1.msra.mxu0 0.0
    %783 = vmatprep.subr.mxu0 0.0
    %784 = vmatpush1.msra.mxu0 0.0
    %785 = vmatprep.subr.mxu0 0.0
    %786 = vmatpush1.msra.mxu0 0.0
    %787 = vmatprep.subr.mxu0 0.0
    %788 = vmatpush1.msra.mxu0 0.0
    %789 = vmatprep.subr.mxu0 0.0
    %790 = vmatpush1.msra.mxu0 0.0
    %791 = vmatprep.subr.mxu0 0.0
    %792 = vmatpush1.msra.mxu0 0.0
    %793 = vmatprep.subr.mxu0 0.0
    %794 = vmatpush1.msra.mxu0 0.0
    %795 = vmatprep.subr.mxu0 0.0
    %796 = vmatpush1.msra.mxu0 0.0
    %797 = vmatprep.subr.mxu0 0.0
    %798 = vmatpush1.msra.mxu0 0.0
    %799 = vmatprep.subr.mxu0 0.0
    %800 = vmatpush1.msra.mxu0 0.0
    %801 = vmatprep.mubr.f32.mxu0 0.0
    %802 = vmatmul.mubr.f32.gmra.mrb[0].mxu0 %v732
    %v803 = vpop.f32.mrb[0].mxu0
    %v804 = vadd.f32 %v197, %v803
    %v805 = vpop.f32.mrb[0].mxu0
    %806 = vmatprep.mubr.f32.mxu0 0.0
    %807 = vmatmul.mubr.f32.gmra.mrb[0].mxu0 %v735
    %v808 = vpop.f32.mrb[0].mxu0
    %v809 = vadd.f32 %v197, %v808
    %v810 = vpop.f32.mrb[0].mxu0
    %811 = vdwg.mxu0
    %812 = vmatprep.subr.mxu0 0.0
    %813 = vmatpush1.msra.mxu0 %v85
    %814 = vmatprep.subr.mxu0 0.0
    %815 = vmatpush1.msra.mxu0 0.0
    %816 = vmatprep.subr.mxu0 0.0
    %817 = vmatpush1.msra.mxu0 0.0
    %818 = vmatprep.subr.mxu0 0.0
    %819 = vmatpush1.msra.mxu0 0.0
    %820 = vmatprep.subr.mxu0 0.0
    %821 = vmatpush1.msra.mxu0 0.0
    %822 = vmatprep.subr.mxu0 0.0
    %823 = vmatpush1.msra.mxu0 0.0
    %824 = vmatprep.subr.mxu0 0.0
    %825 = vmatpush1.msra.mxu0 0.0
    %826 = vmatprep.subr.mxu0 0.0
    %827 = vmatpush1.msra.mxu0 0.0
    %828 = vmatprep.subr.mxu0 0.0
    %829 = vmatpush1.msra.mxu0 0.0
    %830 = vmatprep.subr.mxu0 0.0
    %831 = vmatpush1.msra.mxu0 0.0
    %832 = vmatprep.subr.mxu0 0.0
    %833 = vmatpush1.msra.mxu0 0.0
    %834 = vmatprep.subr.mxu0 0.0
    %835 = vmatpush1.msra.mxu0 0.0
    %836 = vmatprep.subr.mxu0 0.0
    %837 = vmatpush1.msra.mxu0 0.0
    %838 = vmatprep.subr.mxu0 0.0
    %839 = vmatpush1.msra.mxu0 0.0
    %840 = vmatprep.subr.mxu0 0.0
    %841 = vmatpush1.msra.mxu0 0.0
    %842 = vmatprep.subr.mxu0 0.0
    %843 = vmatpush1.msra.mxu0 0.0
    %844 = vmatprep.subr.mxu0 0.0
    %845 = vmatpush1.msra.mxu0 0.0
    %846 = vmatprep.subr.mxu0 0.0
    %847 = vmatpush1.msra.mxu0 0.0
    %848 = vmatprep.subr.mxu0 0.0
    %849 = vmatpush1.msra.mxu0 0.0
    %850 = vmatprep.subr.mxu0 0.0
    %851 = vmatpush1.msra.mxu0 0.0
    %852 = vmatprep.subr.mxu0 0.0
    %853 = vmatpush1.msra.mxu0 0.0
    %854 = vmatprep.subr.mxu0 0.0
    %855 = vmatpush1.msra.mxu0 0.0
    %856 = vmatprep.subr.mxu0 0.0
    %857 = vmatpush1.msra.mxu0 0.0
    %858 = vmatprep.subr.mxu0 0.0
    %859 = vmatpush1.msra.mxu0 0.0
    %860 = vmatprep.subr.mxu0 0.0
    %861 = vmatpush1.msra.mxu0 0.0
    %862 = vmatprep.subr.mxu0 0.0
    %863 = vmatpush1.msra.mxu0 0.0
    %864 = vmatprep.subr.mxu0 0.0
    %865 = vmatpush1.msra.mxu0 0.0
    %866 = vmatprep.subr.mxu0 0.0
    %867 = vmatpush1.msra.mxu0 0.0
    %868 = vmatprep.subr.mxu0 0.0
    %869 = vmatpush1.msra.mxu0 0.0
    %870 = vmatprep.subr.mxu0 0.0
    %871 = vmatpush1.msra.mxu0 0.0
    %872 = vmatprep.subr.mxu0 0.0
    %873 = vmatpush1.msra.mxu0 0.0
    %874 = vmatprep.subr.mxu0 0.0
    %875 = vmatpush1.msra.mxu0 0.0
    %876 = vmatprep.mubr.f32.mxu0 0.0
    %877 = vmatmul.mubr.f32.gmra.mrb[0].mxu0 %v647
    %v878 = vpop.f32.mrb[0].mxu0
    %v879 = vadd.f32 %v285, %v878
    %v880 = vpop.f32.mrb[0].mxu0
    %881 = vmatprep.mubr.f32.mxu0 0.0
    %882 = vmatmul.mubr.f32.gmra.mrb[0].mxu0 %v650
    %v883 = vpop.f32.mrb[0].mxu0
    %v884 = vadd.f32 %v285, %v883
    %v885 = vpop.f32.mrb[0].mxu0
    %886 = vdwg.mxu0
    %v887 = vstv %s637
    %v888 = vmul.f32 %v804, %v887
    %v889 = vmul.f32 %v809, %v887
    %v890 = vadd.f32 %v634, %v888
    %v891 = vadd.f32 %v635, %v889
    %s892 = scalar_lea.vmem %s4, 32
    %v893 = vld [vmem:[%s892] sm:$0xff]
    %v894 = vld [vmem:[%s892 + $0x8] sm:$0xff]
    %v895 = vmul.f32 %v879, %v893
    %v896 = vmul.f32 %v884, %v894
    %v897 = vadd.f32 %v890, %v895
    %v898 = vadd.f32 %v891, %v896
    %s899 = scalar_lea.vmem %s12, 16
    %900 = vst.msk [vmem:[%s899] sm:$0xff] %vm89, %v897
    %901 = vst.msk [vmem:[%s899 + $0x8] sm:$0xff] %vm89, %v898
    %s902 = sld [smem:[#allocation4 + $0x3]]
    %s903 = sld [smem:[#allocation6 + $0x3]]
    %v904 = vstv %s902
    %v905 = vmul.f32 %v904, %v78
    %v907 = vlaneseq
    %v908 = vshrl.u32 %v907, 7
    %v909 = vsub.s32 0, %v908
    %v910 = vrot.slane %v905, %v909
    %v913 = vsel %vm89, %v897, 0
    %v916 = vsel %vm89, %v898, 0
    %918 = vmatprep.subr.mxu0 0.0
    %919 = vmatpush1.msra.mxu0 %v77
    %920 = vmatprep.subr.mxu0 0.0
    %921 = vmatpush1.msra.mxu0 0.0
    %922 = vmatprep.subr.mxu0 0.0
    %923 = vmatpush1.msra.mxu0 0.0
    %924 = vmatprep.subr.mxu0 0.0
    %925 = vmatpush1.msra.mxu0 0.0
    %926 = vmatprep.subr.mxu0 0.0
    %927 = vmatpush1.msra.mxu0 0.0
    %928 = vmatprep.subr.mxu0 0.0
    %929 = vmatpush1.msra.mxu0 0.0
    %930 = vmatprep.subr.mxu0 0.0
    %931 = vmatpush1.msra.mxu0 0.0
    %932 = vmatprep.subr.mxu0 0.0
    %933 = vmatpush1.msra.mxu0 0.0
    %934 = vmatprep.subr.mxu0 0.0
    %935 = vmatpush1.msra.mxu0 0.0
    %936 = vmatprep.subr.mxu0 0.0
    %937 = vmatpush1.msra.mxu0 0.0
    %938 = vmatprep.subr.mxu0 0.0
    %939 = vmatpush1.msra.mxu0 0.0
    %940 = vmatprep.subr.mxu0 0.0
    %941 = vmatpush1.msra.mxu0 0.0
    %942 = vmatprep.subr.mxu0 0.0
    %943 = vmatpush1.msra.mxu0 0.0
    %944 = vmatprep.subr.mxu0 0.0
    %945 = vmatpush1.msra.mxu0 0.0
    %946 = vmatprep.subr.mxu0 0.0
    %947 = vmatpush1.msra.mxu0 0.0
    %948 = vmatprep.subr.mxu0 0.0
    %949 = vmatpush1.msra.mxu0 0.0
    %950 = vmatprep.subr.mxu0 0.0
    %951 = vmatpush1.msra.mxu0 0.0
    %952 = vmatprep.subr.mxu0 0.0
    %953 = vmatpush1.msra.mxu0 0.0
    %954 = vmatprep.subr.mxu0 0.0
    %955 = vmatpush1.msra.mxu0 0.0
    %956 = vmatprep.subr.mxu0 0.0
    %957 = vmatpush1.msra.mxu0 0.0
    %958 = vmatprep.subr.mxu0 0.0
    %959 = vmatpush1.msra.mxu0 0.0
    %960 = vmatprep.subr.mxu0 0.0
    %961 = vmatpush1.msra.mxu0 0.0
    %962 = vmatprep.subr.mxu0 0.0
    %963 = vmatpush1.msra.mxu0 0.0
    %964 = vmatprep.subr.mxu0 0.0
    %965 = vmatpush1.msra.mxu0 0.0
    %966 = vmatprep.subr.mxu0 0.0
    %967 = vmatpush1.msra.mxu0 0.0
    %968 = vmatprep.subr.mxu0 0.0
    %969 = vmatpush1.msra.mxu0 0.0
    %970 = vmatprep.subr.mxu0 0.0
    %971 = vmatpush1.msra.mxu0 0.0
    %972 = vmatprep.subr.mxu0 0.0
    %973 = vmatpush1.msra.mxu0 0.0
    %974 = vmatprep.subr.mxu0 0.0
    %975 = vmatpush1.msra.mxu0 0.0
    %976 = vmatprep.subr.mxu0 0.0
    %977 = vmatpush1.msra.mxu0 0.0
    %978 = vmatprep.subr.mxu0 0.0
    %979 = vmatpush1.msra.mxu0 0.0
    %980 = vmatprep.subr.mxu0 0.0
    %981 = vmatpush1.msra.mxu0 0.0
    %982 = vmatprep.mubr.f32.mxu0 0.0
    %983 = vmatmul.mubr.f32.gmra.mrb[0].mxu0 %v913
    %v984 = vpop.f32.mrb[0].mxu0
    %v985 = vadd.f32 %v910, %v984
    %v986 = vpop.f32.mrb[0].mxu0
    %987 = vmatprep.mubr.f32.mxu0 0.0
    %988 = vmatmul.mubr.f32.gmra.mrb[0].mxu0 %v916
    %v989 = vpop.f32.mrb[0].mxu0
    %v990 = vadd.f32 %v910, %v989
    %v991 = vpop.f32.mrb[0].mxu0
    %992 = vdwg.mxu0
    %v993 = vadd.f32 %v985, %v187
    %v994 = vadd.f32 %v990, %v187
    %v995 = vmax.f32 %v993, 0.0
    %v996 = vmax.f32 %v994, 0.0
    %v998 = vsel %vm199, %v995, 0
    %v1001 = vsel %vm199, %v996, 0
    %1003 = vmatprep.subr.mxu0 0.0
    %1004 = vmatpush1.msra.mxu0 %v80
    %1005 = vmatprep.subr.mxu0 0.0
    %1006 = vmatpush1.msra.mxu0 %v81
    %1007 = vmatprep.subr.mxu0 0.0
    %1008 = vmatpush1.msra.mxu0 %v82
    %1009 = vmatprep.subr.mxu0 0.0
    %1010 = vmatpush1.msra.mxu0 %v83
    %1011 = vmatprep.subr.mxu0 0.0
    %1012 = vmatpush1.msra.mxu0 0.0
    %1013 = vmatprep.subr.mxu0 0.0
    %1014 = vmatpush1.msra.mxu0 0.0
    %1015 = vmatprep.subr.mxu0 0.0
    %1016 = vmatpush1.msra.mxu0 0.0
    %1017 = vmatprep.subr.mxu0 0.0
    %1018 = vmatpush1.msra.mxu0 0.0
    %1019 = vmatprep.subr.mxu0 0.0
    %1020 = vmatpush1.msra.mxu0 0.0
    %1021 = vmatprep.subr.mxu0 0.0
    %1022 = vmatpush1.msra.mxu0 0.0
    %1023 = vmatprep.subr.mxu0 0.0
    %1024 = vmatpush1.msra.mxu0 0.0
    %1025 = vmatprep.subr.mxu0 0.0
    %1026 = vmatpush1.msra.mxu0 0.0
    %1027 = vmatprep.subr.mxu0 0.0
    %1028 = vmatpush1.msra.mxu0 0.0
    %1029 = vmatprep.subr.mxu0 0.0
    %1030 = vmatpush1.msra.mxu0 0.0
    %1031 = vmatprep.subr.mxu0 0.0
    %1032 = vmatpush1.msra.mxu0 0.0
    %1033 = vmatprep.subr.mxu0 0.0
    %1034 = vmatpush1.msra.mxu0 0.0
    %1035 = vmatprep.subr.mxu0 0.0
    %1036 = vmatpush1.msra.mxu0 0.0
    %1037 = vmatprep.subr.mxu0 0.0
    %1038 = vmatpush1.msra.mxu0 0.0
    %1039 = vmatprep.subr.mxu0 0.0
    %1040 = vmatpush1.msra.mxu0 0.0
    %1041 = vmatprep.subr.mxu0 0.0
    %1042 = vmatpush1.msra.mxu0 0.0
    %1043 = vmatprep.subr.mxu0 0.0
    %1044 = vmatpush1.msra.mxu0 0.0
    %1045 = vmatprep.subr.mxu0 0.0
    %1046 = vmatpush1.msra.mxu0 0.0
    %1047 = vmatprep.subr.mxu0 0.0
    %1048 = vmatpush1.msra.mxu0 0.0
    %1049 = vmatprep.subr.mxu0 0.0
    %1050 = vmatpush1.msra.mxu0 0.0
    %1051 = vmatprep.subr.mxu0 0.0
    %1052 = vmatpush1.msra.mxu0 0.0
    %1053 = vmatprep.subr.mxu0 0.0
    %1054 = vmatpush1.msra.mxu0 0.0
    %1055 = vmatprep.subr.mxu0 0.0
    %1056 = vmatpush1.msra.mxu0 0.0
    %1057 = vmatprep.subr.mxu0 0.0
    %1058 = vmatpush1.msra.mxu0 0.0
    %1059 = vmatprep.subr.mxu0 0.0
    %1060 = vmatpush1.msra.mxu0 0.0
    %1061 = vmatprep.subr.mxu0 0.0
    %1062 = vmatpush1.msra.mxu0 0.0
    %1063 = vmatprep.subr.mxu0 0.0
    %1064 = vmatpush1.msra.mxu0 0.0
    %1065 = vmatprep.subr.mxu0 0.0
    %1066 = vmatpush1.msra.mxu0 0.0
    %1067 = vmatprep.mubr.f32.mxu0 0.0
    %1068 = vmatmul.mubr.f32.gmra.mrb[0].mxu0 %v998
    %v1069 = vpop.f32.mrb[0].mxu0
    %v1070 = vadd.f32 %v197, %v1069
    %v1071 = vpop.f32.mrb[0].mxu0
    %1072 = vmatprep.mubr.f32.mxu0 0.0
    %1073 = vmatmul.mubr.f32.gmra.mrb[0].mxu0 %v1001
    %v1074 = vpop.f32.mrb[0].mxu0
    %v1075 = vadd.f32 %v197, %v1074
    %v1076 = vpop.f32.mrb[0].mxu0
    %1077 = vdwg.mxu0
    %1078 = vmatprep.subr.mxu0 0.0
    %1079 = vmatpush1.msra.mxu0 %v85
    %1080 = vmatprep.subr.mxu0 0.0
    %1081 = vmatpush1.msra.mxu0 0.0
    %1082 = vmatprep.subr.mxu0 0.0
    %1083 = vmatpush1.msra.mxu0 0.0
    %1084 = vmatprep.subr.mxu0 0.0
    %1085 = vmatpush1.msra.mxu0 0.0
    %1086 = vmatprep.subr.mxu0 0.0
    %1087 = vmatpush1.msra.mxu0 0.0
    %1088 = vmatprep.subr.mxu0 0.0
    %1089 = vmatpush1.msra.mxu0 0.0
    %1090 = vmatprep.subr.mxu0 0.0
    %1091 = vmatpush1.msra.mxu0 0.0
    %1092 = vmatprep.subr.mxu0 0.0
    %1093 = vmatpush1.msra.mxu0 0.0
    %1094 = vmatprep.subr.mxu0 0.0
    %1095 = vmatpush1.msra.mxu0 0.0
    %1096 = vmatprep.subr.mxu0 0.0
    %1097 = vmatpush1.msra.mxu0 0.0
    %1098 = vmatprep.subr.mxu0 0.0
    %1099 = vmatpush1.msra.mxu0 0.0
    %1100 = vmatprep.subr.mxu0 0.0
    %1101 = vmatpush1.msra.mxu0 0.0
    %1102 = vmatprep.subr.mxu0 0.0
    %1103 = vmatpush1.msra.mxu0 0.0
    %1104 = vmatprep.subr.mxu0 0.0
    %1105 = vmatpush1.msra.mxu0 0.0
    %1106 = vmatprep.subr.mxu0 0.0
    %1107 = vmatpush1.msra.mxu0 0.0
    %1108 = vmatprep.subr.mxu0 0.0
    %1109 = vmatpush1.msra.mxu0 0.0
    %1110 = vmatprep.subr.mxu0 0.0
    %1111 = vmatpush1.msra.mxu0 0.0
    %1112 = vmatprep.subr.mxu0 0.0
    %1113 = vmatpush1.msra.mxu0 0.0
    %1114 = vmatprep.subr.mxu0 0.0
    %1115 = vmatpush1.msra.mxu0 0.0
    %1116 = vmatprep.subr.mxu0 0.0
    %1117 = vmatpush1.msra.mxu0 0.0
    %1118 = vmatprep.subr.mxu0 0.0
    %1119 = vmatpush1.msra.mxu0 0.0
    %1120 = vmatprep.subr.mxu0 0.0
    %1121 = vmatpush1.msra.mxu0 0.0
    %1122 = vmatprep.subr.mxu0 0.0
    %1123 = vmatpush1.msra.mxu0 0.0
    %1124 = vmatprep.subr.mxu0 0.0
    %1125 = vmatpush1.msra.mxu0 0.0
    %1126 = vmatprep.subr.mxu0 0.0
    %1127 = vmatpush1.msra.mxu0 0.0
    %1128 = vmatprep.subr.mxu0 0.0
    %1129 = vmatpush1.msra.mxu0 0.0
    %1130 = vmatprep.subr.mxu0 0.0
    %1131 = vmatpush1.msra.mxu0 0.0
    %1132 = vmatprep.subr.mxu0 0.0
    %1133 = vmatpush1.msra.mxu0 0.0
    %1134 = vmatprep.subr.mxu0 0.0
    %1135 = vmatpush1.msra.mxu0 0.0
    %1136 = vmatprep.subr.mxu0 0.0
    %1137 = vmatpush1.msra.mxu0 0.0
    %1138 = vmatprep.subr.mxu0 0.0
    %1139 = vmatpush1.msra.mxu0 0.0
    %1140 = vmatprep.subr.mxu0 0.0
    %1141 = vmatpush1.msra.mxu0 0.0
    %1142 = vmatprep.mubr.f32.mxu0 0.0
    %1143 = vmatmul.mubr.f32.gmra.mrb[0].mxu0 %v913
    %v1144 = vpop.f32.mrb[0].mxu0
    %v1145 = vadd.f32 %v285, %v1144
    %v1146 = vpop.f32.mrb[0].mxu0
    %1147 = vmatprep.mubr.f32.mxu0 0.0
    %1148 = vmatmul.mubr.f32.gmra.mrb[0].mxu0 %v916
    %v1149 = vpop.f32.mrb[0].mxu0
    %v1150 = vadd.f32 %v285, %v1149
    %v1151 = vpop.f32.mrb[0].mxu0
    %1152 = vdwg.mxu0
    %v1153 = vstv %s903
    %v1154 = vmul.f32 %v1070, %v1153
    %v1155 = vmul.f32 %v1075, %v1153
    %v1156 = vadd.f32 %v897, %v1154
    %v1157 = vadd.f32 %v898, %v1155
    %s1158 = scalar_lea.vmem %s4, 48
    %v1159 = vld [vmem:[%s1158] sm:$0xff]
    %v1160 = vld [vmem:[%s1158 + $0x8] sm:$0xff]
    %v1161 = vmul.f32 %v1145, %v1159
    %v1162 = vmul.f32 %v1150, %v1160
    %v1163 = vadd.f32 %v1156, %v1161
    %v1164 = vadd.f32 %v1157, %v1162
    %s1165 = sld [smem:[#allocation4 + $0x4]]
    %s1166 = sld [smem:[#allocation6 + $0x4]]
    %v1167 = vstv %s1165
    %v1168 = vmul.f32 %v1167, %v78
    %v1170 = vlaneseq
    %v1171 = vshrl.u32 %v1170, 7
    %v1172 = vsub.s32 0, %v1171
    %v1173 = vrot.slane %v1168, %v1172
    %v1176 = vsel %vm89, %v1163, 0
    %v1179 = vsel %vm89, %v1164, 0
    %1181 = vmatprep.subr.mxu0 0.0
    %1182 = vmatpush1.msra.mxu0 %v77
    %1183 = vmatprep.subr.mxu0 0.0
    %1184 = vmatpush1.msra.mxu0 0.0
    %1185 = vmatprep.subr.mxu0 0.0
    %1186 = vmatpush1.msra.mxu0 0.0
    %1187 = vmatprep.subr.mxu0 0.0
    %1188 = vmatpush1.msra.mxu0 0.0
    %1189 = vmatprep.subr.mxu0 0.0
    %1190 = vmatpush1.msra.mxu0 0.0
    %1191 = vmatprep.subr.mxu0 0.0
    %1192 = vmatpush1.msra.mxu0 0.0
    %1193 = vmatprep.subr.mxu0 0.0
    %1194 = vmatpush1.msra.mxu0 0.0
    %1195 = vmatprep.subr.mxu0 0.0
    %1196 = vmatpush1.msra.mxu0 0.0
    %1197 = vmatprep.subr.mxu0 0.0
    %1198 = vmatpush1.msra.mxu0 0.0
    %1199 = vmatprep.subr.mxu0 0.0
    %1200 = vmatpush1.msra.mxu0 0.0
    %1201 = vmatprep.subr.mxu0 0.0
    %1202 = vmatpush1.msra.mxu0 0.0
    %1203 = vmatprep.subr.mxu0 0.0
    %1204 = vmatpush1.msra.mxu0 0.0
    %1205 = vmatprep.subr.mxu0 0.0
    %1206 = vmatpush1.msra.mxu0 0.0
    %1207 = vmatprep.subr.mxu0 0.0
    %1208 = vmatpush1.msra.mxu0 0.0
    %1209 = vmatprep.subr.mxu0 0.0
    %1210 = vmatpush1.msra.mxu0 0.0
    %1211 = vmatprep.subr.mxu0 0.0
    %1212 = vmatpush1.msra.mxu0 0.0
    %1213 = vmatprep.subr.mxu0 0.0
    %1214 = vmatpush1.msra.mxu0 0.0
    %1215 = vmatprep.subr.mxu0 0.0
    %1216 = vmatpush1.msra.mxu0 0.0
    %1217 = vmatprep.subr.mxu0 0.0
    %1218 = vmatpush1.msra.mxu0 0.0
    %1219 = vmatprep.subr.mxu0 0.0
    %1220 = vmatpush1.msra.mxu0 0.0
    %1221 = vmatprep.subr.mxu0 0.0
    %1222 = vmatpush1.msra.mxu0 0.0
    %1223 = vmatprep.subr.mxu0 0.0
    %1224 = vmatpush1.msra.mxu0 0.0
    %1225 = vmatprep.subr.mxu0 0.0
    %1226 = vmatpush1.msra.mxu0 0.0
    %1227 = vmatprep.subr.mxu0 0.0
    %1228 = vmatpush1.msra.mxu0 0.0
    %1229 = vmatprep.subr.mxu0 0.0
    %1230 = vmatpush1.msra.mxu0 0.0
    %1231 = vmatprep.subr.mxu0 0.0
    %1232 = vmatpush1.msra.mxu0 0.0
    %1233 = vmatprep.subr.mxu0 0.0
    %1234 = vmatpush1.msra.mxu0 0.0
    %1235 = vmatprep.subr.mxu0 0.0
    %1236 = vmatpush1.msra.mxu0 0.0
    %1237 = vmatprep.subr.mxu0 0.0
    %1238 = vmatpush1.msra.mxu0 0.0
    %1239 = vmatprep.subr.mxu0 0.0
    %1240 = vmatpush1.msra.mxu0 0.0
    %1241 = vmatprep.subr.mxu0 0.0
    %1242 = vmatpush1.msra.mxu0 0.0
    %1243 = vmatprep.subr.mxu0 0.0
    %1244 = vmatpush1.msra.mxu0 0.0
    %1245 = vmatprep.mubr.f32.mxu0 0.0
    %1246 = vmatmul.mubr.f32.gmra.mrb[0].mxu0 %v1176
    %v1247 = vpop.f32.mrb[0].mxu0
    %v1248 = vadd.f32 %v1173, %v1247
    %v1249 = vpop.f32.mrb[0].mxu0
    %1250 = vmatprep.mubr.f32.mxu0 0.0
    %1251 = vmatmul.mubr.f32.gmra.mrb[0].mxu0 %v1179
    %v1252 = vpop.f32.mrb[0].mxu0
    %v1253 = vadd.f32 %v1173, %v1252
    %v1254 = vpop.f32.mrb[0].mxu0
    %1255 = vdwg.mxu0
    %v1256 = vadd.f32 %v1248, %v187
    %v1257 = vadd.f32 %v1253, %v187
    %v1258 = vmax.f32 %v1256, 0.0
    %v1259 = vmax.f32 %v1257, 0.0
    %v1261 = vsel %vm199, %v1258, 0
    %v1264 = vsel %vm199, %v1259, 0
    %1266 = vmatprep.subr.mxu0 0.0
    %1267 = vmatpush1.msra.mxu0 %v80
    %1268 = vmatprep.subr.mxu0 0.0
    %1269 = vmatpush1.msra.mxu0 %v81
    %1270 = vmatprep.subr.mxu0 0.0
    %1271 = vmatpush1.msra.mxu0 %v82
    %1272 = vmatprep.subr.mxu0 0.0
    %1273 = vmatpush1.msra.mxu0 %v83
    %1274 = vmatprep.subr.mxu0 0.0
    %1275 = vmatpush1.msra.mxu0 0.0
    %1276 = vmatprep.subr.mxu0 0.0
    %1277 = vmatpush1.msra.mxu0 0.0
    %1278 = vmatprep.subr.mxu0 0.0
    %1279 = vmatpush1.msra.mxu0 0.0
    %1280 = vmatprep.subr.mxu0 0.0
    %1281 = vmatpush1.msra.mxu0 0.0
    %1282 = vmatprep.subr.mxu0 0.0
    %1283 = vmatpush1.msra.mxu0 0.0
    %1284 = vmatprep.subr.mxu0 0.0
    %1285 = vmatpush1.msra.mxu0 0.0
    %1286 = vmatprep.subr.mxu0 0.0
    %1287 = vmatpush1.msra.mxu0 0.0
    %1288 = vmatprep.subr.mxu0 0.0
    %1289 = vmatpush1.msra.mxu0 0.0
    %1290 = vmatprep.subr.mxu0 0.0
    %1291 = vmatpush1.msra.mxu0 0.0
    %1292 = vmatprep.subr.mxu0 0.0
    %1293 = vmatpush1.msra.mxu0 0.0
    %1294 = vmatprep.subr.mxu0 0.0
    %1295 = vmatpush1.msra.mxu0 0.0
    %1296 = vmatprep.subr.mxu0 0.0
    %1297 = vmatpush1.msra.mxu0 0.0
    %1298 = vmatprep.subr.mxu0 0.0
    %1299 = vmatpush1.msra.mxu0 0.0
    %1300 = vmatprep.subr.mxu0 0.0
    %1301 = vmatpush1.msra.mxu0 0.0
    %1302 = vmatprep.subr.mxu0 0.0
    %1303 = vmatpush1.msra.mxu0 0.0
    %1304 = vmatprep.subr.mxu0 0.0
    %1305 = vmatpush1.msra.mxu0 0.0
    %1306 = vmatprep.subr.mxu0 0.0
    %1307 = vmatpush1.msra.mxu0 0.0
    %1308 = vmatprep.subr.mxu0 0.0
    %1309 = vmatpush1.msra.mxu0 0.0
    %1310 = vmatprep.subr.mxu0 0.0
    %1311 = vmatpush1.msra.mxu0 0.0
    %1312 = vmatprep.subr.mxu0 0.0
    %1313 = vmatpush1.msra.mxu0 0.0
    %1314 = vmatprep.subr.mxu0 0.0
    %1315 = vmatpush1.msra.mxu0 0.0
    %1316 = vmatprep.subr.mxu0 0.0
    %1317 = vmatpush1.msra.mxu0 0.0
    %1318 = vmatprep.subr.mxu0 0.0
    %1319 = vmatpush1.msra.mxu0 0.0
    %1320 = vmatprep.subr.mxu0 0.0
    %1321 = vmatpush1.msra.mxu0 0.0
    %1322 = vmatprep.subr.mxu0 0.0
    %1323 = vmatpush1.msra.mxu0 0.0
    %1324 = vmatprep.subr.mxu0 0.0
    %1325 = vmatpush1.msra.mxu0 0.0
    %1326 = vmatprep.subr.mxu0 0.0
    %1327 = vmatpush1.msra.mxu0 0.0
    %1328 = vmatprep.subr.mxu0 0.0
    %1329 = vmatpush1.msra.mxu0 0.0
    %1330 = vmatprep.mubr.f32.mxu0 0.0
    %1331 = vmatmul.mubr.f32.gmra.mrb[0].mxu0 %v1261
    %v1332 = vpop.f32.mrb[0].mxu0
    %v1333 = vadd.f32 %v197, %v1332
    %v1334 = vpop.f32.mrb[0].mxu0
    %1335 = vmatprep.mubr.f32.mxu0 0.0
    %1336 = vmatmul.mubr.f32.gmra.mrb[0].mxu0 %v1264
    %v1337 = vpop.f32.mrb[0].mxu0
    %v1338 = vadd.f32 %v197, %v1337
    %v1339 = vpop.f32.mrb[0].mxu0
    %1340 = vdwg.mxu0
    %1341 = vmatprep.subr.mxu0 0.0
    %1342 = vmatpush1.msra.mxu0 %v85
    %1343 = vmatprep.subr.mxu0 0.0
    %1344 = vmatpush1.msra.mxu0 0.0
    %1345 = vmatprep.subr.mxu0 0.0
    %1346 = vmatpush1.msra.mxu0 0.0
    %1347 = vmatprep.subr.mxu0 0.0
    %1348 = vmatpush1.msra.mxu0 0.0
    %1349 = vmatprep.subr.mxu0 0.0
    %1350 = vmatpush1.msra.mxu0 0.0
    %1351 = vmatprep.subr.mxu0 0.0
    %1352 = vmatpush1.msra.mxu0 0.0
    %1353 = vmatprep.subr.mxu0 0.0
    %1354 = vmatpush1.msra.mxu0 0.0
    %1355 = vmatprep.subr.mxu0 0.0
    %1356 = vmatpush1.msra.mxu0 0.0
    %1357 = vmatprep.subr.mxu0 0.0
    %1358 = vmatpush1.msra.mxu0 0.0
    %1359 = vmatprep.subr.mxu0 0.0
    %1360 = vmatpush1.msra.mxu0 0.0
    %1361 = vmatprep.subr.mxu0 0.0
    %1362 = vmatpush1.msra.mxu0 0.0
    %1363 = vmatprep.subr.mxu0 0.0
    %1364 = vmatpush1.msra.mxu0 0.0
    %1365 = vmatprep.subr.mxu0 0.0
    %1366 = vmatpush1.msra.mxu0 0.0
    %1367 = vmatprep.subr.mxu0 0.0
    %1368 = vmatpush1.msra.mxu0 0.0
    %1369 = vmatprep.subr.mxu0 0.0
    %1370 = vmatpush1.msra.mxu0 0.0
    %1371 = vmatprep.subr.mxu0 0.0
    %1372 = vmatpush1.msra.mxu0 0.0
    %1373 = vmatprep.subr.mxu0 0.0
    %1374 = vmatpush1.msra.mxu0 0.0
    %1375 = vmatprep.subr.mxu0 0.0
    %1376 = vmatpush1.msra.mxu0 0.0
    %1377 = vmatprep.subr.mxu0 0.0
    %1378 = vmatpush1.msra.mxu0 0.0
    %1379 = vmatprep.subr.mxu0 0.0
    %1380 = vmatpush1.msra.mxu0 0.0
    %1381 = vmatprep.subr.mxu0 0.0
    %1382 = vmatpush1.msra.mxu0 0.0
    %1383 = vmatprep.subr.mxu0 0.0
    %1384 = vmatpush1.msra.mxu0 0.0
    %1385 = vmatprep.subr.mxu0 0.0
    %1386 = vmatpush1.msra.mxu0 0.0
    %1387 = vmatprep.subr.mxu0 0.0
    %1388 = vmatpush1.msra.mxu0 0.0
    %1389 = vmatprep.subr.mxu0 0.0
    %1390 = vmatpush1.msra.mxu0 0.0
    %1391 = vmatprep.subr.mxu0 0.0
    %1392 = vmatpush1.msra.mxu0 0.0
    %1393 = vmatprep.subr.mxu0 0.0
    %1394 = vmatpush1.msra.mxu0 0.0
    %1395 = vmatprep.subr.mxu0 0.0
    %1396 = vmatpush1.msra.mxu0 0.0
    %1397 = vmatprep.subr.mxu0 0.0
    %1398 = vmatpush1.msra.mxu0 0.0
    %1399 = vmatprep.subr.mxu0 0.0
    %1400 = vmatpush1.msra.mxu0 0.0
    %1401 = vmatprep.subr.mxu0 0.0
    %1402 = vmatpush1.msra.mxu0 0.0
    %1403 = vmatprep.subr.mxu0 0.0
    %1404 = vmatpush1.msra.mxu0 0.0
    %1405 = vmatprep.mubr.f32.mxu0 0.0
    %1406 = vmatmul.mubr.f32.gmra.mrb[0].mxu0 %v1176
    %v1407 = vpop.f32.mrb[0].mxu0
    %v1408 = vadd.f32 %v285, %v1407
    %v1409 = vpop.f32.mrb[0].mxu0
    %1410 = vmatprep.mubr.f32.mxu0 0.0
    %1411 = vmatmul.mubr.f32.gmra.mrb[0].mxu0 %v1179
    %v1412 = vpop.f32.mrb[0].mxu0
    %v1413 = vadd.f32 %v285, %v1412
    %v1414 = vpop.f32.mrb[0].mxu0
    %1415 = vdwg.mxu0
    %v1416 = vstv %s1166
    %v1417 = vmul.f32 %v1333, %v1416
    %v1418 = vmul.f32 %v1338, %v1416
    %v1419 = vadd.f32 %v1163, %v1417
    %v1420 = vadd.f32 %v1164, %v1418
    %s1421 = scalar_lea.vmem %s4, 64
    %v1422 = vld [vmem:[%s1421] sm:$0xff]
    %v1423 = vld [vmem:[%s1421 + $0x8] sm:$0xff]
    %v1424 = vmul.f32 %v1408, %v1422
    %v1425 = vmul.f32 %v1413, %v1423
    %v1426 = vadd.f32 %v1419, %v1424
    %v1427 = vadd.f32 %v1420, %v1425
    %s1428 = sld [smem:[#allocation4 + $0x5]]
    %s1429 = sld [smem:[#allocation6 + $0x5]]
    %v1430 = vstv %s1428
    %v1431 = vmul.f32 %v1430, %v78
    %v1433 = vlaneseq
    %v1434 = vshrl.u32 %v1433, 7
    %v1435 = vsub.s32 0, %v1434
    %v1436 = vrot.slane %v1431, %v1435
    %v1439 = vsel %vm89, %v1426, 0
    %v1442 = vsel %vm89, %v1427, 0
    %1444 = vmatprep.subr.mxu0 0.0
    %1445 = vmatpush1.msra.mxu0 %v77
    %1446 = vmatprep.subr.mxu0 0.0
    %1447 = vmatpush1.msra.mxu0 0.0
    %1448 = vmatprep.subr.mxu0 0.0
    %1449 = vmatpush1.msra.mxu0 0.0
    %1450 = vmatprep.subr.mxu0 0.0
    %1451 = vmatpush1.msra.mxu0 0.0
    %1452 = vmatprep.subr.mxu0 0.0
    %1453 = vmatpush1.msra.mxu0 0.0
    %1454 = vmatprep.subr.mxu0 0.0
    %1455 = vmatpush1.msra.mxu0 0.0
    %1456 = vmatprep.subr.mxu0 0.0
    %1457 = vmatpush1.msra.mxu0 0.0
    %1458 = vmatprep.subr.mxu0 0.0
    %1459 = vmatpush1.msra.mxu0 0.0
    %1460 = vmatprep.subr.mxu0 0.0
    %1461 = vmatpush1.msra.mxu0 0.0
    %1462 = vmatprep.subr.mxu0 0.0
    %1463 = vmatpush1.msra.mxu0 0.0
    %1464 = vmatprep.subr.mxu0 0.0
    %1465 = vmatpush1.msra.mxu0 0.0
    %1466 = vmatprep.subr.mxu0 0.0
    %1467 = vmatpush1.msra.mxu0 0.0
    %1468 = vmatprep.subr.mxu0 0.0
    %1469 = vmatpush1.msra.mxu0 0.0
    %1470 = vmatprep.subr.mxu0 0.0
    %1471 = vmatpush1.msra.mxu0 0.0
    %1472 = vmatprep.subr.mxu0 0.0
    %1473 = vmatpush1.msra.mxu0 0.0
    %1474 = vmatprep.subr.mxu0 0.0
    %1475 = vmatpush1.msra.mxu0 0.0
    %1476 = vmatprep.subr.mxu0 0.0
    %1477 = vmatpush1.msra.mxu0 0.0
    %1478 = vmatprep.subr.mxu0 0.0
    %1479 = vmatpush1.msra.mxu0 0.0
    %1480 = vmatprep.subr.mxu0 0.0
    %1481 = vmatpush1.msra.mxu0 0.0
    %1482 = vmatprep.subr.mxu0 0.0
    %1483 = vmatpush1.msra.mxu0 0.0
    %1484 = vmatprep.subr.mxu0 0.0
    %1485 = vmatpush1.msra.mxu0 0.0
    %1486 = vmatprep.subr.mxu0 0.0
    %1487 = vmatpush1.msra.mxu0 0.0
    %1488 = vmatprep.subr.mxu0 0.0
    %1489 = vmatpush1.msra.mxu0 0.0
    %1490 = vmatprep.subr.mxu0 0.0
    %1491 = vmatpush1.msra.mxu0 0.0
    %1492 = vmatprep.subr.mxu0 0.0
    %1493 = vmatpush1.msra.mxu0 0.0
    %1494 = vmatprep.subr.mxu0 0.0
    %1495 = vmatpush1.msra.mxu0 0.0
    %1496 = vmatprep.subr.mxu0 0.0
    %1497 = vmatpush1.msra.mxu0 0.0
    %1498 = vmatprep.subr.mxu0 0.0
    %1499 = vmatpush1.msra.mxu0 0.0
    %1500 = vmatprep.subr.mxu0 0.0
    %1501 = vmatpush1.msra.mxu0 0.0
    %1502 = vmatprep.subr.mxu0 0.0
    %1503 = vmatpush1.msra.mxu0 0.0
    %1504 = vmatprep.subr.mxu0 0.0
    %1505 = vmatpush1.msra.mxu0 0.0
    %1506 = vmatprep.subr.mxu0 0.0
    %1507 = vmatpush1.msra.mxu0 0.0
    %1508 = vmatprep.mubr.f32.mxu0 0.0
    %1509 = vmatmul.mubr.f32.gmra.mrb[0].mxu0 %v1439
    %v1510 = vpop.f32.mrb[0].mxu0
    %v1511 = vadd.f32 %v1436, %v1510
    %v1512 = vpop.f32.mrb[0].mxu0
    %1513 = vmatprep.mubr.f32.mxu0 0.0
    %1514 = vmatmul.mubr.f32.gmra.mrb[0].mxu0 %v1442
    %v1515 = vpop.f32.mrb[0].mxu0
    %v1516 = vadd.f32 %v1436, %v1515
    %v1517 = vpop.f32.mrb[0].mxu0
    %1518 = vdwg.mxu0
    %v1519 = vadd.f32 %v1511, %v187
    %v1520 = vadd.f32 %v1516, %v187
    %v1521 = vmax.f32 %v1519, 0.0
    %v1522 = vmax.f32 %v1520, 0.0
    %v1524 = vsel %vm199, %v1521, 0
    %v1527 = vsel %vm199, %v1522, 0
    %1529 = vmatprep.subr.mxu0 0.0
    %1530 = vmatpush1.msra.mxu0 %v80
    %1531 = vmatprep.subr.mxu0 0.0
    %1532 = vmatpush1.msra.mxu0 %v81
    %1533 = vmatprep.subr.mxu0 0.0
    %1534 = vmatpush1.msra.mxu0 %v82
    %1535 = vmatprep.subr.mxu0 0.0
    %1536 = vmatpush1.msra.mxu0 %v83
    %1537 = vmatprep.subr.mxu0 0.0
    %1538 = vmatpush1.msra.mxu0 0.0
    %1539 = vmatprep.subr.mxu0 0.0
    %1540 = vmatpush1.msra.mxu0 0.0
    %1541 = vmatprep.subr.mxu0 0.0
    %1542 = vmatpush1.msra.mxu0 0.0
    %1543 = vmatprep.subr.mxu0 0.0
    %1544 = vmatpush1.msra.mxu0 0.0
    %1545 = vmatprep.subr.mxu0 0.0
    %1546 = vmatpush1.msra.mxu0 0.0
    %1547 = vmatprep.subr.mxu0 0.0
    %1548 = vmatpush1.msra.mxu0 0.0
    %1549 = vmatprep.subr.mxu0 0.0
    %1550 = vmatpush1.msra.mxu0 0.0
    %1551 = vmatprep.subr.mxu0 0.0
    %1552 = vmatpush1.msra.mxu0 0.0
    %1553 = vmatprep.subr.mxu0 0.0
    %1554 = vmatpush1.msra.mxu0 0.0
    %1555 = vmatprep.subr.mxu0 0.0
    %1556 = vmatpush1.msra.mxu0 0.0
    %1557 = vmatprep.subr.mxu0 0.0
    %1558 = vmatpush1.msra.mxu0 0.0
    %1559 = vmatprep.subr.mxu0 0.0
    %1560 = vmatpush1.msra.mxu0 0.0
    %1561 = vmatprep.subr.mxu0 0.0
    %1562 = vmatpush1.msra.mxu0 0.0
    %1563 = vmatprep.subr.mxu0 0.0
    %1564 = vmatpush1.msra.mxu0 0.0
    %1565 = vmatprep.subr.mxu0 0.0
    %1566 = vmatpush1.msra.mxu0 0.0
    %1567 = vmatprep.subr.mxu0 0.0
    %1568 = vmatpush1.msra.mxu0 0.0
    %1569 = vmatprep.subr.mxu0 0.0
    %1570 = vmatpush1.msra.mxu0 0.0
    %1571 = vmatprep.subr.mxu0 0.0
    %1572 = vmatpush1.msra.mxu0 0.0
    %1573 = vmatprep.subr.mxu0 0.0
    %1574 = vmatpush1.msra.mxu0 0.0
    %1575 = vmatprep.subr.mxu0 0.0
    %1576 = vmatpush1.msra.mxu0 0.0
    %1577 = vmatprep.subr.mxu0 0.0
    %1578 = vmatpush1.msra.mxu0 0.0
    %1579 = vmatprep.subr.mxu0 0.0
    %1580 = vmatpush1.msra.mxu0 0.0
    %1581 = vmatprep.subr.mxu0 0.0
    %1582 = vmatpush1.msra.mxu0 0.0
    %1583 = vmatprep.subr.mxu0 0.0
    %1584 = vmatpush1.msra.mxu0 0.0
    %1585 = vmatprep.subr.mxu0 0.0
    %1586 = vmatpush1.msra.mxu0 0.0
    %1587 = vmatprep.subr.mxu0 0.0
    %1588 = vmatpush1.msra.mxu0 0.0
    %1589 = vmatprep.subr.mxu0 0.0
    %1590 = vmatpush1.msra.mxu0 0.0
    %1591 = vmatprep.subr.mxu0 0.0
    %1592 = vmatpush1.msra.mxu0 0.0
    %1593 = vmatprep.mubr.f32.mxu0 0.0
    %1594 = vmatmul.mubr.f32.gmra.mrb[0].mxu0 %v1524
    %v1595 = vpop.f32.mrb[0].mxu0
    %v1596 = vadd.f32 %v197, %v1595
    %v1597 = vpop.f32.mrb[0].mxu0
    %1598 = vmatprep.mubr.f32.mxu0 0.0
    %1599 = vmatmul.mubr.f32.gmra.mrb[0].mxu0 %v1527
    %v1600 = vpop.f32.mrb[0].mxu0
    %v1601 = vadd.f32 %v197, %v1600
    %v1602 = vpop.f32.mrb[0].mxu0
    %1603 = vdwg.mxu0
    %1604 = vmatprep.subr.mxu0 0.0
    %1605 = vmatpush1.msra.mxu0 %v85
    %1606 = vmatprep.subr.mxu0 0.0
    %1607 = vmatpush1.msra.mxu0 0.0
    %1608 = vmatprep.subr.mxu0 0.0
    %1609 = vmatpush1.msra.mxu0 0.0
    %1610 = vmatprep.subr.mxu0 0.0
    %1611 = vmatpush1.msra.mxu0 0.0
    %1612 = vmatprep.subr.mxu0 0.0
    %1613 = vmatpush1.msra.mxu0 0.0
    %1614 = vmatprep.subr.mxu0 0.0
    %1615 = vmatpush1.msra.mxu0 0.0
    %1616 = vmatprep.subr.mxu0 0.0
    %1617 = vmatpush1.msra.mxu0 0.0
    %1618 = vmatprep.subr.mxu0 0.0
    %1619 = vmatpush1.msra.mxu0 0.0
    %1620 = vmatprep.subr.mxu0 0.0
    %1621 = vmatpush1.msra.mxu0 0.0
    %1622 = vmatprep.subr.mxu0 0.0
    %1623 = vmatpush1.msra.mxu0 0.0
    %1624 = vmatprep.subr.mxu0 0.0
    %1625 = vmatpush1.msra.mxu0 0.0
    %1626 = vmatprep.subr.mxu0 0.0
    %1627 = vmatpush1.msra.mxu0 0.0
    %1628 = vmatprep.subr.mxu0 0.0
    %1629 = vmatpush1.msra.mxu0 0.0
    %1630 = vmatprep.subr.mxu0 0.0
    %1631 = vmatpush1.msra.mxu0 0.0
    %1632 = vmatprep.subr.mxu0 0.0
    %1633 = vmatpush1.msra.mxu0 0.0
    %1634 = vmatprep.subr.mxu0 0.0
    %1635 = vmatpush1.msra.mxu0 0.0
    %1636 = vmatprep.subr.mxu0 0.0
    %1637 = vmatpush1.msra.mxu0 0.0
    %1638 = vmatprep.subr.mxu0 0.0
    %1639 = vmatpush1.msra.mxu0 0.0
    %1640 = vmatprep.subr.mxu0 0.0
    %1641 = vmatpush1.msra.mxu0 0.0
    %1642 = vmatprep.subr.mxu0 0.0
    %1643 = vmatpush1.msra.mxu0 0.0
    %1644 = vmatprep.subr.mxu0 0.0
    %1645 = vmatpush1.msra.mxu0 0.0
    %1646 = vmatprep.subr.mxu0 0.0
    %1647 = vmatpush1.msra.mxu0 0.0
    %1648 = vmatprep.subr.mxu0 0.0
    %1649 = vmatpush1.msra.mxu0 0.0
    %1650 = vmatprep.subr.mxu0 0.0
    %1651 = vmatpush1.msra.mxu0 0.0
    %1652 = vmatprep.subr.mxu0 0.0
    %1653 = vmatpush1.msra.mxu0 0.0
    %1654 = vmatprep.subr.mxu0 0.0
    %1655 = vmatpush1.msra.mxu0 0.0
    %1656 = vmatprep.subr.mxu0 0.0
    %1657 = vmatpush1.msra.mxu0 0.0
    %1658 = vmatprep.subr.mxu0 0.0
    %1659 = vmatpush1.msra.mxu0 0.0
    %1660 = vmatprep.subr.mxu0 0.0
    %1661 = vmatpush1.msra.mxu0 0.0
    %1662 = vmatprep.subr.mxu0 0.0
    %1663 = vmatpush1.msra.mxu0 0.0
    %1664 = vmatprep.subr.mxu0 0.0
    %1665 = vmatpush1.msra.mxu0 0.0
    %1666 = vmatprep.subr.mxu0 0.0
    %1667 = vmatpush1.msra.mxu0 0.0
    %1668 = vmatprep.mubr.f32.mxu0 0.0
    %1669 = vmatmul.mubr.f32.gmra.mrb[0].mxu0 %v1439
    %v1670 = vpop.f32.mrb[0].mxu0
    %v1671 = vadd.f32 %v285, %v1670
    %v1672 = vpop.f32.mrb[0].mxu0
    %1673 = vmatprep.mubr.f32.mxu0 0.0
    %1674 = vmatmul.mubr.f32.gmra.mrb[0].mxu0 %v1442
    %v1675 = vpop.f32.mrb[0].mxu0
    %v1676 = vadd.f32 %v285, %v1675
    %v1677 = vpop.f32.mrb[0].mxu0
    %1678 = vdwg.mxu0
    %v1679 = vstv %s1429
    %v1680 = vmul.f32 %v1596, %v1679
    %v1681 = vmul.f32 %v1601, %v1679
    %v1682 = vadd.f32 %v1426, %v1680
    %v1683 = vadd.f32 %v1427, %v1681
    %s1684 = scalar_lea.vmem %s4, 80
    %v1685 = vld [vmem:[%s1684] sm:$0xff]
    %v1686 = vld [vmem:[%s1684 + $0x8] sm:$0xff]
    %v1687 = vmul.f32 %v1671, %v1685
    %v1688 = vmul.f32 %v1676, %v1686
    %v1689 = vadd.f32 %v1682, %v1687
    %v1690 = vadd.f32 %v1683, %v1688
    %s1691 = scalar_lea.vmem %s12, 32
    %1692 = vst.msk [vmem:[%s1691] sm:$0xff] %vm89, %v1689
    %1693 = vst.msk [vmem:[%s1691 + $0x8] sm:$0xff] %vm89, %v1690
    %s1694 = sld [smem:[#allocation4 + $0x6]]
    %s1695 = sld [smem:[#allocation6 + $0x6]]
    %v1696 = vstv %s1694
    %v1697 = vmul.f32 %v1696, %v78
    %v1699 = vlaneseq
    %v1700 = vshrl.u32 %v1699, 7
    %v1701 = vsub.s32 0, %v1700
    %v1702 = vrot.slane %v1697, %v1701
    %v1705 = vsel %vm89, %v1689, 0
    %v1708 = vsel %vm89, %v1690, 0
    %1710 = vmatprep.subr.mxu0 0.0
    %1711 = vmatpush1.msra.mxu0 %v77
    %1712 = vmatprep.subr.mxu0 0.0
    %1713 = vmatpush1.msra.mxu0 0.0
    %1714 = vmatprep.subr.mxu0 0.0
    %1715 = vmatpush1.msra.mxu0 0.0
    %1716 = vmatprep.subr.mxu0 0.0
    %1717 = vmatpush1.msra.mxu0 0.0
    %1718 = vmatprep.subr.mxu0 0.0
    %1719 = vmatpush1.msra.mxu0 0.0
    %1720 = vmatprep.subr.mxu0 0.0
    %1721 = vmatpush1.msra.mxu0 0.0
    %1722 = vmatprep.subr.mxu0 0.0
    %1723 = vmatpush1.msra.mxu0 0.0
    %1724 = vmatprep.subr.mxu0 0.0
    %1725 = vmatpush1.msra.mxu0 0.0
    %1726 = vmatprep.subr.mxu0 0.0
    %1727 = vmatpush1.msra.mxu0 0.0
    %1728 = vmatprep.subr.mxu0 0.0
    %1729 = vmatpush1.msra.mxu0 0.0
    %1730 = vmatprep.subr.mxu0 0.0
    %1731 = vmatpush1.msra.mxu0 0.0
    %1732 = vmatprep.subr.mxu0 0.0
    %1733 = vmatpush1.msra.mxu0 0.0
    %1734 = vmatprep.subr.mxu0 0.0
    %1735 = vmatpush1.msra.mxu0 0.0
    %1736 = vmatprep.subr.mxu0 0.0
    %1737 = vmatpush1.msra.mxu0 0.0
    %1738 = vmatprep.subr.mxu0 0.0
    %1739 = vmatpush1.msra.mxu0 0.0
    %1740 = vmatprep.subr.mxu0 0.0
    %1741 = vmatpush1.msra.mxu0 0.0
    %1742 = vmatprep.subr.mxu0 0.0
    %1743 = vmatpush1.msra.mxu0 0.0
    %1744 = vmatprep.subr.mxu0 0.0
    %1745 = vmatpush1.msra.mxu0 0.0
    %1746 = vmatprep.subr.mxu0 0.0
    %1747 = vmatpush1.msra.mxu0 0.0
    %1748 = vmatprep.subr.mxu0 0.0
    %1749 = vmatpush1.msra.mxu0 0.0
    %1750 = vmatprep.subr.mxu0 0.0
    %1751 = vmatpush1.msra.mxu0 0.0
    %1752 = vmatprep.subr.mxu0 0.0
    %1753 = vmatpush1.msra.mxu0 0.0
    %1754 = vmatprep.subr.mxu0 0.0
    %1755 = vmatpush1.msra.mxu0 0.0
    %1756 = vmatprep.subr.mxu0 0.0
    %1757 = vmatpush1.msra.mxu0 0.0
    %1758 = vmatprep.subr.mxu0 0.0
    %1759 = vmatpush1.msra.mxu0 0.0
    %1760 = vmatprep.subr.mxu0 0.0
    %1761 = vmatpush1.msra.mxu0 0.0
    %1762 = vmatprep.subr.mxu0 0.0
    %1763 = vmatpush1.msra.mxu0 0.0
    %1764 = vmatprep.subr.mxu0 0.0
    %1765 = vmatpush1.msra.mxu0 0.0
    %1766 = vmatprep.subr.mxu0 0.0
    %1767 = vmatpush1.msra.mxu0 0.0
    %1768 = vmatprep.subr.mxu0 0.0
    %1769 = vmatpush1.msra.mxu0 0.0
    %1770 = vmatprep.subr.mxu0 0.0
    %1771 = vmatpush1.msra.mxu0 0.0
    %1772 = vmatprep.subr.mxu0 0.0
    %1773 = vmatpush1.msra.mxu0 0.0
    %1774 = vmatprep.mubr.f32.mxu0 0.0
    %1775 = vmatmul.mubr.f32.gmra.mrb[0].mxu0 %v1705
    %v1776 = vpop.f32.mrb[0].mxu0
    %v1777 = vadd.f32 %v1702, %v1776
    %v1778 = vpop.f32.mrb[0].mxu0
    %1779 = vmatprep.mubr.f32.mxu0 0.0
    %1780 = vmatmul.mubr.f32.gmra.mrb[0].mxu0 %v1708
    %v1781 = vpop.f32.mrb[0].mxu0
    %v1782 = vadd.f32 %v1702, %v1781
    %v1783 = vpop.f32.mrb[0].mxu0
    %1784 = vdwg.mxu0
    %v1785 = vadd.f32 %v1777, %v187
    %v1786 = vadd.f32 %v1782, %v187
    %v1787 = vmax.f32 %v1785, 0.0
    %v1788 = vmax.f32 %v1786, 0.0
    %v1790 = vsel %vm199, %v1787, 0
    %v1793 = vsel %vm199, %v1788, 0
    %1795 = vmatprep.subr.mxu0 0.0
    %1796 = vmatpush1.msra.mxu0 %v80
    %1797 = vmatprep.subr.mxu0 0.0
    %1798 = vmatpush1.msra.mxu0 %v81
    %1799 = vmatprep.subr.mxu0 0.0
    %1800 = vmatpush1.msra.mxu0 %v82
    %1801 = vmatprep.subr.mxu0 0.0
    %1802 = vmatpush1.msra.mxu0 %v83
    %1803 = vmatprep.subr.mxu0 0.0
    %1804 = vmatpush1.msra.mxu0 0.0
    %1805 = vmatprep.subr.mxu0 0.0
    %1806 = vmatpush1.msra.mxu0 0.0
    %1807 = vmatprep.subr.mxu0 0.0
    %1808 = vmatpush1.msra.mxu0 0.0
    %1809 = vmatprep.subr.mxu0 0.0
    %1810 = vmatpush1.msra.mxu0 0.0
    %1811 = vmatprep.subr.mxu0 0.0
    %1812 = vmatpush1.msra.mxu0 0.0
    %1813 = vmatprep.subr.mxu0 0.0
    %1814 = vmatpush1.msra.mxu0 0.0
    %1815 = vmatprep.subr.mxu0 0.0
    %1816 = vmatpush1.msra.mxu0 0.0
    %1817 = vmatprep.subr.mxu0 0.0
    %1818 = vmatpush1.msra.mxu0 0.0
    %1819 = vmatprep.subr.mxu0 0.0
    %1820 = vmatpush1.msra.mxu0 0.0
    %1821 = vmatprep.subr.mxu0 0.0
    %1822 = vmatpush1.msra.mxu0 0.0
    %1823 = vmatprep.subr.mxu0 0.0
    %1824 = vmatpush1.msra.mxu0 0.0
    %1825 = vmatprep.subr.mxu0 0.0
    %1826 = vmatpush1.msra.mxu0 0.0
    %1827 = vmatprep.subr.mxu0 0.0
    %1828 = vmatpush1.msra.mxu0 0.0
    %1829 = vmatprep.subr.mxu0 0.0
    %1830 = vmatpush1.msra.mxu0 0.0
    %1831 = vmatprep.subr.mxu0 0.0
    %1832 = vmatpush1.msra.mxu0 0.0
    %1833 = vmatprep.subr.mxu0 0.0
    %1834 = vmatpush1.msra.mxu0 0.0
    %1835 = vmatprep.subr.mxu0 0.0
    %1836 = vmatpush1.msra.mxu0 0.0
    %1837 = vmatprep.subr.mxu0 0.0
    %1838 = vmatpush1.msra.mxu0 0.0
    %1839 = vmatprep.subr.mxu0 0.0
    %1840 = vmatpush1.msra.mxu0 0.0
    %1841 = vmatprep.subr.mxu0 0.0
    %1842 = vmatpush1.msra.mxu0 0.0
    %1843 = vmatprep.subr.mxu0 0.0
    %1844 = vmatpush1.msra.mxu0 0.0
    %1845 = vmatprep.subr.mxu0 0.0
    %1846 = vmatpush1.msra.mxu0 0.0
    %1847 = vmatprep.subr.mxu0 0.0
    %1848 = vmatpush1.msra.mxu0 0.0
    %1849 = vmatprep.subr.mxu0 0.0
    %1850 = vmatpush1.msra.mxu0 0.0
    %1851 = vmatprep.subr.mxu0 0.0
    %1852 = vmatpush1.msra.mxu0 0.0
    %1853 = vmatprep.subr.mxu0 0.0
    %1854 = vmatpush1.msra.mxu0 0.0
    %1855 = vmatprep.subr.mxu0 0.0
    %1856 = vmatpush1.msra.mxu0 0.0
    %1857 = vmatprep.subr.mxu0 0.0
    %1858 = vmatpush1.msra.mxu0 0.0
    %1859 = vmatprep.mubr.f32.mxu0 0.0
    %1860 = vmatmul.mubr.f32.gmra.mrb[0].mxu0 %v1790
    %v1861 = vpop.f32.mrb[0].mxu0
    %v1862 = vadd.f32 %v197, %v1861
    %v1863 = vpop.f32.mrb[0].mxu0
    %1864 = vmatprep.mubr.f32.mxu0 0.0
    %1865 = vmatmul.mubr.f32.gmra.mrb[0].mxu0 %v1793
    %v1866 = vpop.f32.mrb[0].mxu0
    %v1867 = vadd.f32 %v197, %v1866
    %v1868 = vpop.f32.mrb[0].mxu0
    %1869 = vdwg.mxu0
    %1870 = vmatprep.subr.mxu0 0.0
    %1871 = vmatpush1.msra.mxu0 %v85
    %1872 = vmatprep.subr.mxu0 0.0
    %1873 = vmatpush1.msra.mxu0 0.0
    %1874 = vmatprep.subr.mxu0 0.0
    %1875 = vmatpush1.msra.mxu0 0.0
    %1876 = vmatprep.subr.mxu0 0.0
    %1877 = vmatpush1.msra.mxu0 0.0
    %1878 = vmatprep.subr.mxu0 0.0
    %1879 = vmatpush1.msra.mxu0 0.0
    %1880 = vmatprep.subr.mxu0 0.0
    %1881 = vmatpush1.msra.mxu0 0.0
    %1882 = vmatprep.subr.mxu0 0.0
    %1883 = vmatpush1.msra.mxu0 0.0
    %1884 = vmatprep.subr.mxu0 0.0
    %1885 = vmatpush1.msra.mxu0 0.0
    %1886 = vmatprep.subr.mxu0 0.0
    %1887 = vmatpush1.msra.mxu0 0.0
    %1888 = vmatprep.subr.mxu0 0.0
    %1889 = vmatpush1.msra.mxu0 0.0
    %1890 = vmatprep.subr.mxu0 0.0
    %1891 = vmatpush1.msra.mxu0 0.0
    %1892 = vmatprep.subr.mxu0 0.0
    %1893 = vmatpush1.msra.mxu0 0.0
    %1894 = vmatprep.subr.mxu0 0.0
    %1895 = vmatpush1.msra.mxu0 0.0
    %1896 = vmatprep.subr.mxu0 0.0
    %1897 = vmatpush1.msra.mxu0 0.0
    %1898 = vmatprep.subr.mxu0 0.0
    %1899 = vmatpush1.msra.mxu0 0.0
    %1900 = vmatprep.subr.mxu0 0.0
    %1901 = vmatpush1.msra.mxu0 0.0
    %1902 = vmatprep.subr.mxu0 0.0
    %1903 = vmatpush1.msra.mxu0 0.0
    %1904 = vmatprep.subr.mxu0 0.0
    %1905 = vmatpush1.msra.mxu0 0.0
    %1906 = vmatprep.subr.mxu0 0.0
    %1907 = vmatpush1.msra.mxu0 0.0
    %1908 = vmatprep.subr.mxu0 0.0
    %1909 = vmatpush1.msra.mxu0 0.0
    %1910 = vmatprep.subr.mxu0 0.0
    %1911 = vmatpush1.msra.mxu0 0.0
    %1912 = vmatprep.subr.mxu0 0.0
    %1913 = vmatpush1.msra.mxu0 0.0
    %1914 = vmatprep.subr.mxu0 0.0
    %1915 = vmatpush1.msra.mxu0 0.0
    %1916 = vmatprep.subr.mxu0 0.0
    %1917 = vmatpush1.msra.mxu0 0.0
    %1918 = vmatprep.subr.mxu0 0.0
    %1919 = vmatpush1.msra.mxu0 0.0
    %1920 = vmatprep.subr.mxu0 0.0
    %1921 = vmatpush1.msra.mxu0 0.0
    %1922 = vmatprep.subr.mxu0 0.0
    %1923 = vmatpush1.msra.mxu0 0.0
    %1924 = vmatprep.subr.mxu0 0.0
    %1925 = vmatpush1.msra.mxu0 0.0
    %1926 = vmatprep.subr.mxu0 0.0
    %1927 = vmatpush1.msra.mxu0 0.0
    %1928 = vmatprep.subr.mxu0 0.0
    %1929 = vmatpush1.msra.mxu0 0.0
    %1930 = vmatprep.subr.mxu0 0.0
    %1931 = vmatpush1.msra.mxu0 0.0
    %1932 = vmatprep.subr.mxu0 0.0
    %1933 = vmatpush1.msra.mxu0 0.0
    %1934 = vmatprep.mubr.f32.mxu0 0.0
    %1935 = vmatmul.mubr.f32.gmra.mrb[0].mxu0 %v1705
    %v1936 = vpop.f32.mrb[0].mxu0
    %v1937 = vadd.f32 %v285, %v1936
    %v1938 = vpop.f32.mrb[0].mxu0
    %1939 = vmatprep.mubr.f32.mxu0 0.0
    %1940 = vmatmul.mubr.f32.gmra.mrb[0].mxu0 %v1708
    %v1941 = vpop.f32.mrb[0].mxu0
    %v1942 = vadd.f32 %v285, %v1941
    %v1943 = vpop.f32.mrb[0].mxu0
    %1944 = vdwg.mxu0
    %v1945 = vstv %s1695
    %v1946 = vmul.f32 %v1862, %v1945
    %v1947 = vmul.f32 %v1867, %v1945
    %v1948 = vadd.f32 %v1689, %v1946
    %v1949 = vadd.f32 %v1690, %v1947
    %s1950 = scalar_lea.vmem %s4, 96
    %v1951 = vld [vmem:[%s1950] sm:$0xff]
    %v1952 = vld [vmem:[%s1950 + $0x8] sm:$0xff]
    %v1953 = vmul.f32 %v1937, %v1951
    %v1954 = vmul.f32 %v1942, %v1952
    %v1955 = vadd.f32 %v1948, %v1953
    %v1956 = vadd.f32 %v1949, %v1954
    %s1957 = sld [smem:[#allocation4 + $0x7]]
    %s1958 = sld [smem:[#allocation6 + $0x7]]
    %v1959 = vstv %s1957
    %v1960 = vmul.f32 %v1959, %v78
    %v1962 = vlaneseq
    %v1963 = vshrl.u32 %v1962, 7
    %v1964 = vsub.s32 0, %v1963
    %v1965 = vrot.slane %v1960, %v1964
    %v1968 = vsel %vm89, %v1955, 0
    %v1971 = vsel %vm89, %v1956, 0
    %1973 = vmatprep.subr.mxu0 0.0
    %1974 = vmatpush1.msra.mxu0 %v77
    %1975 = vmatprep.subr.mxu0 0.0
    %1976 = vmatpush1.msra.mxu0 0.0
    %1977 = vmatprep.subr.mxu0 0.0
    %1978 = vmatpush1.msra.mxu0 0.0
    %1979 = vmatprep.subr.mxu0 0.0
    %1980 = vmatpush1.msra.mxu0 0.0
    %1981 = vmatprep.subr.mxu0 0.0
    %1982 = vmatpush1.msra.mxu0 0.0
    %1983 = vmatprep.subr.mxu0 0.0
    %1984 = vmatpush1.msra.mxu0 0.0
    %1985 = vmatprep.subr.mxu0 0.0
    %1986 = vmatpush1.msra.mxu0 0.0
    %1987 = vmatprep.subr.mxu0 0.0
    %1988 = vmatpush1.msra.mxu0 0.0
    %1989 = vmatprep.subr.mxu0 0.0
    %1990 = vmatpush1.msra.mxu0 0.0
    %1991 = vmatprep.subr.mxu0 0.0
    %1992 = vmatpush1.msra.mxu0 0.0
    %1993 = vmatprep.subr.mxu0 0.0
    %1994 = vmatpush1.msra.mxu0 0.0
    %1995 = vmatprep.subr.mxu0 0.0
    %1996 = vmatpush1.msra.mxu0 0.0
    %1997 = vmatprep.subr.mxu0 0.0
    %1998 = vmatpush1.msra.mxu0 0.0
    %1999 = vmatprep.subr.mxu0 0.0
    %2000 = vmatpush1.msra.mxu0 0.0
    %2001 = vmatprep.subr.mxu0 0.0
    %2002 = vmatpush1.msra.mxu0 0.0
    %2003 = vmatprep.subr.mxu0 0.0
    %2004 = vmatpush1.msra.mxu0 0.0
    %2005 = vmatprep.subr.mxu0 0.0
    %2006 = vmatpush1.msra.mxu0 0.0
    %2007 = vmatprep.subr.mxu0 0.0
    %2008 = vmatpush1.msra.mxu0 0.0
    %2009 = vmatprep.subr.mxu0 0.0
    %2010 = vmatpush1.msra.mxu0 0.0
    %2011 = vmatprep.subr.mxu0 0.0
    %2012 = vmatpush1.msra.mxu0 0.0
    %2013 = vmatprep.subr.mxu0 0.0
    %2014 = vmatpush1.msra.mxu0 0.0
    %2015 = vmatprep.subr.mxu0 0.0
    %2016 = vmatpush1.msra.mxu0 0.0
    %2017 = vmatprep.subr.mxu0 0.0
    %2018 = vmatpush1.msra.mxu0 0.0
    %2019 = vmatprep.subr.mxu0 0.0
    %2020 = vmatpush1.msra.mxu0 0.0
    %2021 = vmatprep.subr.mxu0 0.0
    %2022 = vmatpush1.msra.mxu0 0.0
    %2023 = vmatprep.subr.mxu0 0.0
    %2024 = vmatpush1.msra.mxu0 0.0
    %2025 = vmatprep.subr.mxu0 0.0
    %2026 = vmatpush1.msra.mxu0 0.0
    %2027 = vmatprep.subr.mxu0 0.0
    %2028 = vmatpush1.msra.mxu0 0.0
    %2029 = vmatprep.subr.mxu0 0.0
    %2030 = vmatpush1.msra.mxu0 0.0
    %2031 = vmatprep.subr.mxu0 0.0
    %2032 = vmatpush1.msra.mxu0 0.0
    %2033 = vmatprep.subr.mxu0 0.0
    %2034 = vmatpush1.msra.mxu0 0.0
    %2035 = vmatprep.subr.mxu0 0.0
    %2036 = vmatpush1.msra.mxu0 0.0
    %2037 = vmatprep.mubr.f32.mxu0 0.0
    %2038 = vmatmul.mubr.f32.gmra.mrb[0].mxu0 %v1968
    %v2039 = vpop.f32.mrb[0].mxu0
    %v2040 = vadd.f32 %v1965, %v2039
    %v2041 = vpop.f32.mrb[0].mxu0
    %2042 = vmatprep.mubr.f32.mxu0 0.0
    %2043 = vmatmul.mubr.f32.gmra.mrb[0].mxu0 %v1971
    %v2044 = vpop.f32.mrb[0].mxu0
    %v2045 = vadd.f32 %v1965, %v2044
    %v2046 = vpop.f32.mrb[0].mxu0
    %2047 = vdwg.mxu0
    %v2048 = vadd.f32 %v2040, %v187
    %v2049 = vadd.f32 %v2045, %v187
    %v2050 = vmax.f32 %v2048, 0.0
    %v2051 = vmax.f32 %v2049, 0.0
    %v2053 = vsel %vm199, %v2050, 0
    %v2056 = vsel %vm199, %v2051, 0
    %2058 = vmatprep.subr.mxu0 0.0
    %2059 = vmatpush1.msra.mxu0 %v80
    %2060 = vmatprep.subr.mxu0 0.0
    %2061 = vmatpush1.msra.mxu0 %v81
    %2062 = vmatprep.subr.mxu0 0.0
    %2063 = vmatpush1.msra.mxu0 %v82
    %2064 = vmatprep.subr.mxu0 0.0
    %2065 = vmatpush1.msra.mxu0 %v83
    %2066 = vmatprep.subr.mxu0 0.0
    %2067 = vmatpush1.msra.mxu0 0.0
    %2068 = vmatprep.subr.mxu0 0.0
    %2069 = vmatpush1.msra.mxu0 0.0
    %2070 = vmatprep.subr.mxu0 0.0
    %2071 = vmatpush1.msra.mxu0 0.0
    %2072 = vmatprep.subr.mxu0 0.0
    %2073 = vmatpush1.msra.mxu0 0.0
    %2074 = vmatprep.subr.mxu0 0.0
    %2075 = vmatpush1.msra.mxu0 0.0
    %2076 = vmatprep.subr.mxu0 0.0
    %2077 = vmatpush1.msra.mxu0 0.0
    %2078 = vmatprep.subr.mxu0 0.0
    %2079 = vmatpush1.msra.mxu0 0.0
    %2080 = vmatprep.subr.mxu0 0.0
    %2081 = vmatpush1.msra.mxu0 0.0
    %2082 = vmatprep.subr.mxu0 0.0
    %2083 = vmatpush1.msra.mxu0 0.0
    %2084 = vmatprep.subr.mxu0 0.0
    %2085 = vmatpush1.msra.mxu0 0.0
    %2086 = vmatprep.subr.mxu0 0.0
    %2087 = vmatpush1.msra.mxu0 0.0
    %2088 = vmatprep.subr.mxu0 0.0
    %2089 = vmatpush1.msra.mxu0 0.0
    %2090 = vmatprep.subr.mxu0 0.0
    %2091 = vmatpush1.msra.mxu0 0.0
    %2092 = vmatprep.subr.mxu0 0.0
    %2093 = vmatpush1.msra.mxu0 0.0
    %2094 = vmatprep.subr.mxu0 0.0
    %2095 = vmatpush1.msra.mxu0 0.0
    %2096 = vmatprep.subr.mxu0 0.0
    %2097 = vmatpush1.msra.mxu0 0.0
    %2098 = vmatprep.subr.mxu0 0.0
    %2099 = vmatpush1.msra.mxu0 0.0
    %2100 = vmatprep.subr.mxu0 0.0
    %2101 = vmatpush1.msra.mxu0 0.0
    %2102 = vmatprep.subr.mxu0 0.0
    %2103 = vmatpush1.msra.mxu0 0.0
    %2104 = vmatprep.subr.mxu0 0.0
    %2105 = vmatpush1.msra.mxu0 0.0
    %2106 = vmatprep.subr.mxu0 0.0
    %2107 = vmatpush1.msra.mxu0 0.0
    %2108 = vmatprep.subr.mxu0 0.0
    %2109 = vmatpush1.msra.mxu0 0.0
    %2110 = vmatprep.subr.mxu0 0.0
    %2111 = vmatpush1.msra.mxu0 0.0
    %2112 = vmatprep.subr.mxu0 0.0
    %2113 = vmatpush1.msra.mxu0 0.0
    %2114 = vmatprep.subr.mxu0 0.0
    %2115 = vmatpush1.msra.mxu0 0.0
    %2116 = vmatprep.subr.mxu0 0.0
    %2117 = vmatpush1.msra.mxu0 0.0
    %2118 = vmatprep.subr.mxu0 0.0
    %2119 = vmatpush1.msra.mxu0 0.0
    %2120 = vmatprep.subr.mxu0 0.0
    %2121 = vmatpush1.msra.mxu0 0.0
    %2122 = vmatprep.mubr.f32.mxu0 0.0
    %2123 = vmatmul.mubr.f32.gmra.mrb[0].mxu0 %v2053
    %v2124 = vpop.f32.mrb[0].mxu0
    %v2125 = vadd.f32 %v197, %v2124
    %v2126 = vpop.f32.mrb[0].mxu0
    %2127 = vmatprep.mubr.f32.mxu0 0.0
    %2128 = vmatmul.mubr.f32.gmra.mrb[0].mxu0 %v2056
    %v2129 = vpop.f32.mrb[0].mxu0
    %v2130 = vadd.f32 %v197, %v2129
    %v2131 = vpop.f32.mrb[0].mxu0
    %2132 = vdwg.mxu0
    %2133 = vmatprep.subr.mxu0 0.0
    %2134 = vmatpush1.msra.mxu0 %v85
    %2135 = vmatprep.subr.mxu0 0.0
    %2136 = vmatpush1.msra.mxu0 0.0
    %2137 = vmatprep.subr.mxu0 0.0
    %2138 = vmatpush1.msra.mxu0 0.0
    %2139 = vmatprep.subr.mxu0 0.0
    %2140 = vmatpush1.msra.mxu0 0.0
    %2141 = vmatprep.subr.mxu0 0.0
    %2142 = vmatpush1.msra.mxu0 0.0
    %2143 = vmatprep.subr.mxu0 0.0
    %2144 = vmatpush1.msra.mxu0 0.0
    %2145 = vmatprep.subr.mxu0 0.0
    %2146 = vmatpush1.msra.mxu0 0.0
    %2147 = vmatprep.subr.mxu0 0.0
    %2148 = vmatpush1.msra.mxu0 0.0
    %2149 = vmatprep.subr.mxu0 0.0
    %2150 = vmatpush1.msra.mxu0 0.0
    %2151 = vmatprep.subr.mxu0 0.0
    %2152 = vmatpush1.msra.mxu0 0.0
    %2153 = vmatprep.subr.mxu0 0.0
    %2154 = vmatpush1.msra.mxu0 0.0
    %2155 = vmatprep.subr.mxu0 0.0
    %2156 = vmatpush1.msra.mxu0 0.0
    %2157 = vmatprep.subr.mxu0 0.0
    %2158 = vmatpush1.msra.mxu0 0.0
    %2159 = vmatprep.subr.mxu0 0.0
    %2160 = vmatpush1.msra.mxu0 0.0
    %2161 = vmatprep.subr.mxu0 0.0
    %2162 = vmatpush1.msra.mxu0 0.0
    %2163 = vmatprep.subr.mxu0 0.0
    %2164 = vmatpush1.msra.mxu0 0.0
    %2165 = vmatprep.subr.mxu0 0.0
    %2166 = vmatpush1.msra.mxu0 0.0
    %2167 = vmatprep.subr.mxu0 0.0
    %2168 = vmatpush1.msra.mxu0 0.0
    %2169 = vmatprep.subr.mxu0 0.0
    %2170 = vmatpush1.msra.mxu0 0.0
    %2171 = vmatprep.subr.mxu0 0.0
    %2172 = vmatpush1.msra.mxu0 0.0
    %2173 = vmatprep.subr.mxu0 0.0
    %2174 = vmatpush1.msra.mxu0 0.0
    %2175 = vmatprep.subr.mxu0 0.0
    %2176 = vmatpush1.msra.mxu0 0.0
    %2177 = vmatprep.subr.mxu0 0.0
    %2178 = vmatpush1.msra.mxu0 0.0
    %2179 = vmatprep.subr.mxu0 0.0
    %2180 = vmatpush1.msra.mxu0 0.0
    %2181 = vmatprep.subr.mxu0 0.0
    %2182 = vmatpush1.msra.mxu0 0.0
    %2183 = vmatprep.subr.mxu0 0.0
    %2184 = vmatpush1.msra.mxu0 0.0
    %2185 = vmatprep.subr.mxu0 0.0
    %2186 = vmatpush1.msra.mxu0 0.0
    %2187 = vmatprep.subr.mxu0 0.0
    %2188 = vmatpush1.msra.mxu0 0.0
    %2189 = vmatprep.subr.mxu0 0.0
    %2190 = vmatpush1.msra.mxu0 0.0
    %2191 = vmatprep.subr.mxu0 0.0
    %2192 = vmatpush1.msra.mxu0 0.0
    %2193 = vmatprep.subr.mxu0 0.0
    %2194 = vmatpush1.msra.mxu0 0.0
    %2195 = vmatprep.subr.mxu0 0.0
    %2196 = vmatpush1.msra.mxu0 0.0
    %2197 = vmatprep.mubr.f32.mxu0 0.0
    %2198 = vmatmul.mubr.f32.gmra.mrb[0].mxu0 %v1968
    %v2199 = vpop.f32.mrb[0].mxu0
    %v2200 = vadd.f32 %v285, %v2199
    %v2201 = vpop.f32.mrb[0].mxu0
    %2202 = vmatprep.mubr.f32.mxu0 0.0
    %2203 = vmatmul.mubr.f32.gmra.mrb[0].mxu0 %v1971
    %v2204 = vpop.f32.mrb[0].mxu0
    %v2205 = vadd.f32 %v285, %v2204
    %v2206 = vpop.f32.mrb[0].mxu0
    %2207 = vdwg.mxu0
    %v2208 = vstv %s1958
    %v2209 = vmul.f32 %v2125, %v2208
    %v2210 = vmul.f32 %v2130, %v2208
    %v2211 = vadd.f32 %v1955, %v2209
    %v2212 = vadd.f32 %v1956, %v2210
    %s2213 = scalar_lea.vmem %s4, 112
    %v2214 = vld [vmem:[%s2213] sm:$0xff]
    %v2215 = vld [vmem:[%s2213 + $0x8] sm:$0xff]
    %v2216 = vmul.f32 %v2200, %v2214
    %v2217 = vmul.f32 %v2205, %v2215
    %v2218 = vadd.f32 %v2211, %v2216
    %v2219 = vadd.f32 %v2212, %v2217
    %s2220 = sld [smem:[#allocation4 + $0x8]]
    %s2221 = sld [smem:[#allocation6 + $0x8]]
    %v2222 = vstv %s2220
    %v2223 = vmul.f32 %v2222, %v78
    %v2225 = vlaneseq
    %v2226 = vshrl.u32 %v2225, 7
    %v2227 = vsub.s32 0, %v2226
    %v2228 = vrot.slane %v2223, %v2227
    %v2231 = vsel %vm89, %v2218, 0
    %v2234 = vsel %vm89, %v2219, 0
    %2236 = vmatprep.subr.mxu0 0.0
    %2237 = vmatpush1.msra.mxu0 %v77
    %2238 = vmatprep.subr.mxu0 0.0
    %2239 = vmatpush1.msra.mxu0 0.0
    %2240 = vmatprep.subr.mxu0 0.0
    %2241 = vmatpush1.msra.mxu0 0.0
    %2242 = vmatprep.subr.mxu0 0.0
    %2243 = vmatpush1.msra.mxu0 0.0
    %2244 = vmatprep.subr.mxu0 0.0
    %2245 = vmatpush1.msra.mxu0 0.0
    %2246 = vmatprep.subr.mxu0 0.0
    %2247 = vmatpush1.msra.mxu0 0.0
    %2248 = vmatprep.subr.mxu0 0.0
    %2249 = vmatpush1.msra.mxu0 0.0
    %2250 = vmatprep.subr.mxu0 0.0
    %2251 = vmatpush1.msra.mxu0 0.0
    %2252 = vmatprep.subr.mxu0 0.0
    %2253 = vmatpush1.msra.mxu0 0.0
    %2254 = vmatprep.subr.mxu0 0.0
    %2255 = vmatpush1.msra.mxu0 0.0
    %2256 = vmatprep.subr.mxu0 0.0
    %2257 = vmatpush1.msra.mxu0 0.0
    %2258 = vmatprep.subr.mxu0 0.0
    %2259 = vmatpush1.msra.mxu0 0.0
    %2260 = vmatprep.subr.mxu0 0.0
    %2261 = vmatpush1.msra.mxu0 0.0
    %2262 = vmatprep.subr.mxu0 0.0
    %2263 = vmatpush1.msra.mxu0 0.0
    %2264 = vmatprep.subr.mxu0 0.0
    %2265 = vmatpush1.msra.mxu0 0.0
    %2266 = vmatprep.subr.mxu0 0.0
    %2267 = vmatpush1.msra.mxu0 0.0
    %2268 = vmatprep.subr.mxu0 0.0
    %2269 = vmatpush1.msra.mxu0 0.0
    %2270 = vmatprep.subr.mxu0 0.0
    %2271 = vmatpush1.msra.mxu0 0.0
    %2272 = vmatprep.subr.mxu0 0.0
    %2273 = vmatpush1.msra.mxu0 0.0
    %2274 = vmatprep.subr.mxu0 0.0
    %2275 = vmatpush1.msra.mxu0 0.0
    %2276 = vmatprep.subr.mxu0 0.0
    %2277 = vmatpush1.msra.mxu0 0.0
    %2278 = vmatprep.subr.mxu0 0.0
    %2279 = vmatpush1.msra.mxu0 0.0
    %2280 = vmatprep.subr.mxu0 0.0
    %2281 = vmatpush1.msra.mxu0 0.0
    %2282 = vmatprep.subr.mxu0 0.0
    %2283 = vmatpush1.msra.mxu0 0.0
    %2284 = vmatprep.subr.mxu0 0.0
    %2285 = vmatpush1.msra.mxu0 0.0
    %2286 = vmatprep.subr.mxu0 0.0
    %2287 = vmatpush1.msra.mxu0 0.0
    %2288 = vmatprep.subr.mxu0 0.0
    %2289 = vmatpush1.msra.mxu0 0.0
    %2290 = vmatprep.subr.mxu0 0.0
    %2291 = vmatpush1.msra.mxu0 0.0
    %2292 = vmatprep.subr.mxu0 0.0
    %2293 = vmatpush1.msra.mxu0 0.0
    %2294 = vmatprep.subr.mxu0 0.0
    %2295 = vmatpush1.msra.mxu0 0.0
    %2296 = vmatprep.subr.mxu0 0.0
    %2297 = vmatpush1.msra.mxu0 0.0
    %2298 = vmatprep.subr.mxu0 0.0
    %2299 = vmatpush1.msra.mxu0 0.0
    %2300 = vmatprep.mubr.f32.mxu0 0.0
    %2301 = vmatmul.mubr.f32.gmra.mrb[0].mxu0 %v2231
    %v2302 = vpop.f32.mrb[0].mxu0
    %v2303 = vadd.f32 %v2228, %v2302
    %v2304 = vpop.f32.mrb[0].mxu0
    %2305 = vmatprep.mubr.f32.mxu0 0.0
    %2306 = vmatmul.mubr.f32.gmra.mrb[0].mxu0 %v2234
    %v2307 = vpop.f32.mrb[0].mxu0
    %v2308 = vadd.f32 %v2228, %v2307
    %v2309 = vpop.f32.mrb[0].mxu0
    %2310 = vdwg.mxu0
    %v2311 = vadd.f32 %v2303, %v187
    %v2312 = vadd.f32 %v2308, %v187
    %v2313 = vmax.f32 %v2311, 0.0
    %v2314 = vmax.f32 %v2312, 0.0
    %v2316 = vsel %vm199, %v2313, 0
    %v2319 = vsel %vm199, %v2314, 0
    %2321 = vmatprep.subr.mxu0 0.0
    %2322 = vmatpush1.msra.mxu0 %v80
    %2323 = vmatprep.subr.mxu0 0.0
    %2324 = vmatpush1.msra.mxu0 %v81
    %2325 = vmatprep.subr.mxu0 0.0
    %2326 = vmatpush1.msra.mxu0 %v82
    %2327 = vmatprep.subr.mxu0 0.0
    %2328 = vmatpush1.msra.mxu0 %v83
    %2329 = vmatprep.subr.mxu0 0.0
    %2330 = vmatpush1.msra.mxu0 0.0
    %2331 = vmatprep.subr.mxu0 0.0
    %2332 = vmatpush1.msra.mxu0 0.0
    %2333 = vmatprep.subr.mxu0 0.0
    %2334 = vmatpush1.msra.mxu0 0.0
    %2335 = vmatprep.subr.mxu0 0.0
    %2336 = vmatpush1.msra.mxu0 0.0
    %2337 = vmatprep.subr.mxu0 0.0
    %2338 = vmatpush1.msra.mxu0 0.0
    %2339 = vmatprep.subr.mxu0 0.0
    %2340 = vmatpush1.msra.mxu0 0.0
    %2341 = vmatprep.subr.mxu0 0.0
    %2342 = vmatpush1.msra.mxu0 0.0
    %2343 = vmatprep.subr.mxu0 0.0
    %2344 = vmatpush1.msra.mxu0 0.0
    %2345 = vmatprep.subr.mxu0 0.0
    %2346 = vmatpush1.msra.mxu0 0.0
    %2347 = vmatprep.subr.mxu0 0.0
    %2348 = vmatpush1.msra.mxu0 0.0
    %2349 = vmatprep.subr.mxu0 0.0
    %2350 = vmatpush1.msra.mxu0 0.0
    %2351 = vmatprep.subr.mxu0 0.0
    %2352 = vmatpush1.msra.mxu0 0.0
    %2353 = vmatprep.subr.mxu0 0.0
    %2354 = vmatpush1.msra.mxu0 0.0
    %2355 = vmatprep.subr.mxu0 0.0
    %2356 = vmatpush1.msra.mxu0 0.0
    %2357 = vmatprep.subr.mxu0 0.0
    %2358 = vmatpush1.msra.mxu0 0.0
    %2359 = vmatprep.subr.mxu0 0.0
    %2360 = vmatpush1.msra.mxu0 0.0
    %2361 = vmatprep.subr.mxu0 0.0
    %2362 = vmatpush1.msra.mxu0 0.0
    %2363 = vmatprep.subr.mxu0 0.0
    %2364 = vmatpush1.msra.mxu0 0.0
    %2365 = vmatprep.subr.mxu0 0.0
    %2366 = vmatpush1.msra.mxu0 0.0
    %2367 = vmatprep.subr.mxu0 0.0
    %2368 = vmatpush1.msra.mxu0 0.0
    %2369 = vmatprep.subr.mxu0 0.0
    %2370 = vmatpush1.msra.mxu0 0.0
    %2371 = vmatprep.subr.mxu0 0.0
    %2372 = vmatpush1.msra.mxu0 0.0
    %2373 = vmatprep.subr.mxu0 0.0
    %2374 = vmatpush1.msra.mxu0 0.0
    %2375 = vmatprep.subr.mxu0 0.0
    %2376 = vmatpush1.msra.mxu0 0.0
    %2377 = vmatprep.subr.mxu0 0.0
    %2378 = vmatpush1.msra.mxu0 0.0
    %2379 = vmatprep.subr.mxu0 0.0
    %2380 = vmatpush1.msra.mxu0 0.0
    %2381 = vmatprep.subr.mxu0 0.0
    %2382 = vmatpush1.msra.mxu0 0.0
    %2383 = vmatprep.subr.mxu0 0.0
    %2384 = vmatpush1.msra.mxu0 0.0
    %2385 = vmatprep.mubr.f32.mxu0 0.0
    %2386 = vmatmul.mubr.f32.gmra.mrb[0].mxu0 %v2316
    %v2387 = vpop.f32.mrb[0].mxu0
    %v2388 = vadd.f32 %v197, %v2387
    %v2389 = vpop.f32.mrb[0].mxu0
    %2390 = vmatprep.mubr.f32.mxu0 0.0
    %2391 = vmatmul.mubr.f32.gmra.mrb[0].mxu0 %v2319
    %v2392 = vpop.f32.mrb[0].mxu0
    %v2393 = vadd.f32 %v197, %v2392
    %v2394 = vpop.f32.mrb[0].mxu0
    %2395 = vdwg.mxu0
    %2396 = vmatprep.subr.mxu0 0.0
    %2397 = vmatpush1.msra.mxu0 %v85
    %2398 = vmatprep.subr.mxu0 0.0
    %2399 = vmatpush1.msra.mxu0 0.0
    %2400 = vmatprep.subr.mxu0 0.0
    %2401 = vmatpush1.msra.mxu0 0.0
    %2402 = vmatprep.subr.mxu0 0.0
    %2403 = vmatpush1.msra.mxu0 0.0
    %2404 = vmatprep.subr.mxu0 0.0
    %2405 = vmatpush1.msra.mxu0 0.0
    %2406 = vmatprep.subr.mxu0 0.0
    %2407 = vmatpush1.msra.mxu0 0.0
    %2408 = vmatprep.subr.mxu0 0.0
    %2409 = vmatpush1.msra.mxu0 0.0
    %2410 = vmatprep.subr.mxu0 0.0
    %2411 = vmatpush1.msra.mxu0 0.0
    %2412 = vmatprep.subr.mxu0 0.0
    %2413 = vmatpush1.msra.mxu0 0.0
    %2414 = vmatprep.subr.mxu0 0.0
    %2415 = vmatpush1.msra.mxu0 0.0
    %2416 = vmatprep.subr.mxu0 0.0
    %2417 = vmatpush1.msra.mxu0 0.0
    %2418 = vmatprep.subr.mxu0 0.0
    %2419 = vmatpush1.msra.mxu0 0.0
    %2420 = vmatprep.subr.mxu0 0.0
    %2421 = vmatpush1.msra.mxu0 0.0
    %2422 = vmatprep.subr.mxu0 0.0
    %2423 = vmatpush1.msra.mxu0 0.0
    %2424 = vmatprep.subr.mxu0 0.0
    %2425 = vmatpush1.msra.mxu0 0.0
    %2426 = vmatprep.subr.mxu0 0.0
    %2427 = vmatpush1.msra.mxu0 0.0
    %2428 = vmatprep.subr.mxu0 0.0
    %2429 = vmatpush1.msra.mxu0 0.0
    %2430 = vmatprep.subr.mxu0 0.0
    %2431 = vmatpush1.msra.mxu0 0.0
    %2432 = vmatprep.subr.mxu0 0.0
    %2433 = vmatpush1.msra.mxu0 0.0
    %2434 = vmatprep.subr.mxu0 0.0
    %2435 = vmatpush1.msra.mxu0 0.0
    %2436 = vmatprep.subr.mxu0 0.0
    %2437 = vmatpush1.msra.mxu0 0.0
    %2438 = vmatprep.subr.mxu0 0.0
    %2439 = vmatpush1.msra.mxu0 0.0
    %2440 = vmatprep.subr.mxu0 0.0
    %2441 = vmatpush1.msra.mxu0 0.0
    %2442 = vmatprep.subr.mxu0 0.0
    %2443 = vmatpush1.msra.mxu0 0.0
    %2444 = vmatprep.subr.mxu0 0.0
    %2445 = vmatpush1.msra.mxu0 0.0
    %2446 = vmatprep.subr.mxu0 0.0
    %2447 = vmatpush1.msra.mxu0 0.0
    %2448 = vmatprep.subr.mxu0 0.0
    %2449 = vmatpush1.msra.mxu0 0.0
    %2450 = vmatprep.subr.mxu0 0.0
    %2451 = vmatpush1.msra.mxu0 0.0
    %2452 = vmatprep.subr.mxu0 0.0
    %2453 = vmatpush1.msra.mxu0 0.0
    %2454 = vmatprep.subr.mxu0 0.0
    %2455 = vmatpush1.msra.mxu0 0.0
    %2456 = vmatprep.subr.mxu0 0.0
    %2457 = vmatpush1.msra.mxu0 0.0
    %2458 = vmatprep.subr.mxu0 0.0
    %2459 = vmatpush1.msra.mxu0 0.0
    %2460 = vmatprep.mubr.f32.mxu0 0.0
    %2461 = vmatmul.mubr.f32.gmra.mrb[0].mxu0 %v2231
    %v2462 = vpop.f32.mrb[0].mxu0
    %v2463 = vadd.f32 %v285, %v2462
    %v2464 = vpop.f32.mrb[0].mxu0
    %2465 = vmatprep.mubr.f32.mxu0 0.0
    %2466 = vmatmul.mubr.f32.gmra.mrb[0].mxu0 %v2234
    %v2467 = vpop.f32.mrb[0].mxu0
    %v2468 = vadd.f32 %v285, %v2467
    %v2469 = vpop.f32.mrb[0].mxu0
    %2470 = vdwg.mxu0
    %v2471 = vstv %s2221
    %v2472 = vmul.f32 %v2388, %v2471
    %v2473 = vmul.f32 %v2393, %v2471
    %v2474 = vadd.f32 %v2218, %v2472
    %v2475 = vadd.f32 %v2219, %v2473
    %s2476 = scalar_lea.vmem %s4, 128
    %v2477 = vld [vmem:[%s2476] sm:$0xff]
    %v2478 = vld [vmem:[%s2476 + $0x8] sm:$0xff]
    %v2479 = vmul.f32 %v2463, %v2477
    %v2480 = vmul.f32 %v2468, %v2478
    %v2481 = vadd.f32 %v2474, %v2479
    %v2482 = vadd.f32 %v2475, %v2480
    %s2483 = scalar_lea.vmem %s12, 48
    %2484 = vst.msk [vmem:[%s2483] sm:$0xff] %vm89, %v2481
    %2485 = vst.msk [vmem:[%s2483 + $0x8] sm:$0xff] %vm89, %v2482
    %s2486 = sld [smem:[#allocation4 + $0x9]]
    %s2487 = sld [smem:[#allocation6 + $0x9]]
    %v2488 = vstv %s2486
    %v2489 = vmul.f32 %v2488, %v78
    %v2491 = vlaneseq
    %v2492 = vshrl.u32 %v2491, 7
    %v2493 = vsub.s32 0, %v2492
    %v2494 = vrot.slane %v2489, %v2493
    %v2497 = vsel %vm89, %v2481, 0
    %v2500 = vsel %vm89, %v2482, 0
    %2502 = vmatprep.subr.mxu0 0.0
    %2503 = vmatpush1.msra.mxu0 %v77
    %2504 = vmatprep.subr.mxu0 0.0
    %2505 = vmatpush1.msra.mxu0 0.0
    %2506 = vmatprep.subr.mxu0 0.0
    %2507 = vmatpush1.msra.mxu0 0.0
    %2508 = vmatprep.subr.mxu0 0.0
    %2509 = vmatpush1.msra.mxu0 0.0
    %2510 = vmatprep.subr.mxu0 0.0
    %2511 = vmatpush1.msra.mxu0 0.0
    %2512 = vmatprep.subr.mxu0 0.0
    %2513 = vmatpush1.msra.mxu0 0.0
    %2514 = vmatprep.subr.mxu0 0.0
    %2515 = vmatpush1.msra.mxu0 0.0
    %2516 = vmatprep.subr.mxu0 0.0
    %2517 = vmatpush1.msra.mxu0 0.0
    %2518 = vmatprep.subr.mxu0 0.0
    %2519 = vmatpush1.msra.mxu0 0.0
    %2520 = vmatprep.subr.mxu0 0.0
    %2521 = vmatpush1.msra.mxu0 0.0
    %2522 = vmatprep.subr.mxu0 0.0
    %2523 = vmatpush1.msra.mxu0 0.0
    %2524 = vmatprep.subr.mxu0 0.0
    %2525 = vmatpush1.msra.mxu0 0.0
    %2526 = vmatprep.subr.mxu0 0.0
    %2527 = vmatpush1.msra.mxu0 0.0
    %2528 = vmatprep.subr.mxu0 0.0
    %2529 = vmatpush1.msra.mxu0 0.0
    %2530 = vmatprep.subr.mxu0 0.0
    %2531 = vmatpush1.msra.mxu0 0.0
    %2532 = vmatprep.subr.mxu0 0.0
    %2533 = vmatpush1.msra.mxu0 0.0
    %2534 = vmatprep.subr.mxu0 0.0
    %2535 = vmatpush1.msra.mxu0 0.0
    %2536 = vmatprep.subr.mxu0 0.0
    %2537 = vmatpush1.msra.mxu0 0.0
    %2538 = vmatprep.subr.mxu0 0.0
    %2539 = vmatpush1.msra.mxu0 0.0
    %2540 = vmatprep.subr.mxu0 0.0
    %2541 = vmatpush1.msra.mxu0 0.0
    %2542 = vmatprep.subr.mxu0 0.0
    %2543 = vmatpush1.msra.mxu0 0.0
    %2544 = vmatprep.subr.mxu0 0.0
    %2545 = vmatpush1.msra.mxu0 0.0
    %2546 = vmatprep.subr.mxu0 0.0
    %2547 = vmatpush1.msra.mxu0 0.0
    %2548 = vmatprep.subr.mxu0 0.0
    %2549 = vmatpush1.msra.mxu0 0.0
    %2550 = vmatprep.subr.mxu0 0.0
    %2551 = vmatpush1.msra.mxu0 0.0
    %2552 = vmatprep.subr.mxu0 0.0
    %2553 = vmatpush1.msra.mxu0 0.0
    %2554 = vmatprep.subr.mxu0 0.0
    %2555 = vmatpush1.msra.mxu0 0.0
    %2556 = vmatprep.subr.mxu0 0.0
    %2557 = vmatpush1.msra.mxu0 0.0
    %2558 = vmatprep.subr.mxu0 0.0
    %2559 = vmatpush1.msra.mxu0 0.0
    %2560 = vmatprep.subr.mxu0 0.0
    %2561 = vmatpush1.msra.mxu0 0.0
    %2562 = vmatprep.subr.mxu0 0.0
    %2563 = vmatpush1.msra.mxu0 0.0
    %2564 = vmatprep.subr.mxu0 0.0
    %2565 = vmatpush1.msra.mxu0 0.0
    %2566 = vmatprep.mubr.f32.mxu0 0.0
    %2567 = vmatmul.mubr.f32.gmra.mrb[0].mxu0 %v2497
    %v2568 = vpop.f32.mrb[0].mxu0
    %v2569 = vadd.f32 %v2494, %v2568
    %v2570 = vpop.f32.mrb[0].mxu0
    %2571 = vmatprep.mubr.f32.mxu0 0.0
    %2572 = vmatmul.mubr.f32.gmra.mrb[0].mxu0 %v2500
    %v2573 = vpop.f32.mrb[0].mxu0
    %v2574 = vadd.f32 %v2494, %v2573
    %v2575 = vpop.f32.mrb[0].mxu0
    %2576 = vdwg.mxu0
    %v2577 = vadd.f32 %v2569, %v187
    %v2578 = vadd.f32 %v2574, %v187
    %v2579 = vmax.f32 %v2577, 0.0
    %v2580 = vmax.f32 %v2578, 0.0
    %v2582 = vsel %vm199, %v2579, 0
    %v2585 = vsel %vm199, %v2580, 0
    %2587 = vmatprep.subr.mxu0 0.0
    %2588 = vmatpush1.msra.mxu0 %v80
    %2589 = vmatprep.subr.mxu0 0.0
    %2590 = vmatpush1.msra.mxu0 %v81
    %2591 = vmatprep.subr.mxu0 0.0
    %2592 = vmatpush1.msra.mxu0 %v82
    %2593 = vmatprep.subr.mxu0 0.0
    %2594 = vmatpush1.msra.mxu0 %v83
    %2595 = vmatprep.subr.mxu0 0.0
    %2596 = vmatpush1.msra.mxu0 0.0
    %2597 = vmatprep.subr.mxu0 0.0
    %2598 = vmatpush1.msra.mxu0 0.0
    %2599 = vmatprep.subr.mxu0 0.0
    %2600 = vmatpush1.msra.mxu0 0.0
    %2601 = vmatprep.subr.mxu0 0.0
    %2602 = vmatpush1.msra.mxu0 0.0
    %2603 = vmatprep.subr.mxu0 0.0
    %2604 = vmatpush1.msra.mxu0 0.0
    %2605 = vmatprep.subr.mxu0 0.0
    %2606 = vmatpush1.msra.mxu0 0.0
    %2607 = vmatprep.subr.mxu0 0.0
    %2608 = vmatpush1.msra.mxu0 0.0
    %2609 = vmatprep.subr.mxu0 0.0
    %2610 = vmatpush1.msra.mxu0 0.0
    %2611 = vmatprep.subr.mxu0 0.0
    %2612 = vmatpush1.msra.mxu0 0.0
    %2613 = vmatprep.subr.mxu0 0.0
    %2614 = vmatpush1.msra.mxu0 0.0
    %2615 = vmatprep.subr.mxu0 0.0
    %2616 = vmatpush1.msra.mxu0 0.0
    %2617 = vmatprep.subr.mxu0 0.0
    %2618 = vmatpush1.msra.mxu0 0.0
    %2619 = vmatprep.subr.mxu0 0.0
    %2620 = vmatpush1.msra.mxu0 0.0
    %2621 = vmatprep.subr.mxu0 0.0
    %2622 = vmatpush1.msra.mxu0 0.0
    %2623 = vmatprep.subr.mxu0 0.0
    %2624 = vmatpush1.msra.mxu0 0.0
    %2625 = vmatprep.subr.mxu0 0.0
    %2626 = vmatpush1.msra.mxu0 0.0
    %2627 = vmatprep.subr.mxu0 0.0
    %2628 = vmatpush1.msra.mxu0 0.0
    %2629 = vmatprep.subr.mxu0 0.0
    %2630 = vmatpush1.msra.mxu0 0.0
    %2631 = vmatprep.subr.mxu0 0.0
    %2632 = vmatpush1.msra.mxu0 0.0
    %2633 = vmatprep.subr.mxu0 0.0
    %2634 = vmatpush1.msra.mxu0 0.0
    %2635 = vmatprep.subr.mxu0 0.0
    %2636 = vmatpush1.msra.mxu0 0.0
    %2637 = vmatprep.subr.mxu0 0.0
    %2638 = vmatpush1.msra.mxu0 0.0
    %2639 = vmatprep.subr.mxu0 0.0
    %2640 = vmatpush1.msra.mxu0 0.0
    %2641 = vmatprep.subr.mxu0 0.0
    %2642 = vmatpush1.msra.mxu0 0.0
    %2643 = vmatprep.subr.mxu0 0.0
    %2644 = vmatpush1.msra.mxu0 0.0
    %2645 = vmatprep.subr.mxu0 0.0
    %2646 = vmatpush1.msra.mxu0 0.0
    %2647 = vmatprep.subr.mxu0 0.0
    %2648 = vmatpush1.msra.mxu0 0.0
    %2649 = vmatprep.subr.mxu0 0.0
    %2650 = vmatpush1.msra.mxu0 0.0
    %2651 = vmatprep.mubr.f32.mxu0 0.0
    %2652 = vmatmul.mubr.f32.gmra.mrb[0].mxu0 %v2582
    %v2653 = vpop.f32.mrb[0].mxu0
    %v2654 = vadd.f32 %v197, %v2653
    %v2655 = vpop.f32.mrb[0].mxu0
    %2656 = vmatprep.mubr.f32.mxu0 0.0
    %2657 = vmatmul.mubr.f32.gmra.mrb[0].mxu0 %v2585
    %v2658 = vpop.f32.mrb[0].mxu0
    %v2659 = vadd.f32 %v197, %v2658
    %v2660 = vpop.f32.mrb[0].mxu0
    %2661 = vdwg.mxu0
    %2662 = vmatprep.subr.mxu0 0.0
    %2663 = vmatpush1.msra.mxu0 %v85
    %2664 = vmatprep.subr.mxu0 0.0
    %2665 = vmatpush1.msra.mxu0 0.0
    %2666 = vmatprep.subr.mxu0 0.0
    %2667 = vmatpush1.msra.mxu0 0.0
    %2668 = vmatprep.subr.mxu0 0.0
    %2669 = vmatpush1.msra.mxu0 0.0
    %2670 = vmatprep.subr.mxu0 0.0
    %2671 = vmatpush1.msra.mxu0 0.0
    %2672 = vmatprep.subr.mxu0 0.0
    %2673 = vmatpush1.msra.mxu0 0.0
    %2674 = vmatprep.subr.mxu0 0.0
    %2675 = vmatpush1.msra.mxu0 0.0
    %2676 = vmatprep.subr.mxu0 0.0
    %2677 = vmatpush1.msra.mxu0 0.0
    %2678 = vmatprep.subr.mxu0 0.0
    %2679 = vmatpush1.msra.mxu0 0.0
    %2680 = vmatprep.subr.mxu0 0.0
    %2681 = vmatpush1.msra.mxu0 0.0
    %2682 = vmatprep.subr.mxu0 0.0
    %2683 = vmatpush1.msra.mxu0 0.0
    %2684 = vmatprep.subr.mxu0 0.0
    %2685 = vmatpush1.msra.mxu0 0.0
    %2686 = vmatprep.subr.mxu0 0.0
    %2687 = vmatpush1.msra.mxu0 0.0
    %2688 = vmatprep.subr.mxu0 0.0
    %2689 = vmatpush1.msra.mxu0 0.0
    %2690 = vmatprep.subr.mxu0 0.0
    %2691 = vmatpush1.msra.mxu0 0.0
    %2692 = vmatprep.subr.mxu0 0.0
    %2693 = vmatpush1.msra.mxu0 0.0
    %2694 = vmatprep.subr.mxu0 0.0
    %2695 = vmatpush1.msra.mxu0 0.0
    %2696 = vmatprep.subr.mxu0 0.0
    %2697 = vmatpush1.msra.mxu0 0.0
    %2698 = vmatprep.subr.mxu0 0.0
    %2699 = vmatpush1.msra.mxu0 0.0
    %2700 = vmatprep.subr.mxu0 0.0
    %2701 = vmatpush1.msra.mxu0 0.0
    %2702 = vmatprep.subr.mxu0 0.0
    %2703 = vmatpush1.msra.mxu0 0.0
    %2704 = vmatprep.subr.mxu0 0.0
    %2705 = vmatpush1.msra.mxu0 0.0
    %2706 = vmatprep.subr.mxu0 0.0
    %2707 = vmatpush1.msra.mxu0 0.0
    %2708 = vmatprep.subr.mxu0 0.0
    %2709 = vmatpush1.msra.mxu0 0.0
    %2710 = vmatprep.subr.mxu0 0.0
    %2711 = vmatpush1.msra.mxu0 0.0
    %2712 = vmatprep.subr.mxu0 0.0
    %2713 = vmatpush1.msra.mxu0 0.0
    %2714 = vmatprep.subr.mxu0 0.0
    %2715 = vmatpush1.msra.mxu0 0.0
    %2716 = vmatprep.subr.mxu0 0.0
    %2717 = vmatpush1.msra.mxu0 0.0
    %2718 = vmatprep.subr.mxu0 0.0
    %2719 = vmatpush1.msra.mxu0 0.0
    %2720 = vmatprep.subr.mxu0 0.0
    %2721 = vmatpush1.msra.mxu0 0.0
    %2722 = vmatprep.subr.mxu0 0.0
    %2723 = vmatpush1.msra.mxu0 0.0
    %2724 = vmatprep.subr.mxu0 0.0
    %2725 = vmatpush1.msra.mxu0 0.0
    %2726 = vmatprep.mubr.f32.mxu0 0.0
    %2727 = vmatmul.mubr.f32.gmra.mrb[0].mxu0 %v2497
    %v2728 = vpop.f32.mrb[0].mxu0
    %v2729 = vadd.f32 %v285, %v2728
    %v2730 = vpop.f32.mrb[0].mxu0
    %2731 = vmatprep.mubr.f32.mxu0 0.0
    %2732 = vmatmul.mubr.f32.gmra.mrb[0].mxu0 %v2500
    %v2733 = vpop.f32.mrb[0].mxu0
    %v2734 = vadd.f32 %v285, %v2733
    %v2735 = vpop.f32.mrb[0].mxu0
    %2736 = vdwg.mxu0
    %v2737 = vstv %s2487
    %v2738 = vmul.f32 %v2654, %v2737
    %v2739 = vmul.f32 %v2659, %v2737
    %v2740 = vadd.f32 %v2481, %v2738
    %v2741 = vadd.f32 %v2482, %v2739
    %s2742 = scalar_lea.vmem %s4, 144
    %v2743 = vld [vmem:[%s2742] sm:$0xff]
    %v2744 = vld [vmem:[%s2742 + $0x8] sm:$0xff]
    %v2745 = vmul.f32 %v2729, %v2743
    %v2746 = vmul.f32 %v2734, %v2744
    %v2747 = vadd.f32 %v2740, %v2745
    %v2748 = vadd.f32 %v2741, %v2746
    %s2749 = sld [smem:[#allocation4 + $0xa]]
    %s2750 = sld [smem:[#allocation6 + $0xa]]
    %v2751 = vstv %s2749
    %v2752 = vmul.f32 %v2751, %v78
    %v2754 = vlaneseq
    %v2755 = vshrl.u32 %v2754, 7
    %v2756 = vsub.s32 0, %v2755
    %v2757 = vrot.slane %v2752, %v2756
    %v2760 = vsel %vm89, %v2747, 0
    %v2763 = vsel %vm89, %v2748, 0
    %2765 = vmatprep.subr.mxu0 0.0
    %2766 = vmatpush1.msra.mxu0 %v77
    %2767 = vmatprep.subr.mxu0 0.0
    %2768 = vmatpush1.msra.mxu0 0.0
    %2769 = vmatprep.subr.mxu0 0.0
    %2770 = vmatpush1.msra.mxu0 0.0
    %2771 = vmatprep.subr.mxu0 0.0
    %2772 = vmatpush1.msra.mxu0 0.0
    %2773 = vmatprep.subr.mxu0 0.0
    %2774 = vmatpush1.msra.mxu0 0.0
    %2775 = vmatprep.subr.mxu0 0.0
    %2776 = vmatpush1.msra.mxu0 0.0
    %2777 = vmatprep.subr.mxu0 0.0
    %2778 = vmatpush1.msra.mxu0 0.0
    %2779 = vmatprep.subr.mxu0 0.0
    %2780 = vmatpush1.msra.mxu0 0.0
    %2781 = vmatprep.subr.mxu0 0.0
    %2782 = vmatpush1.msra.mxu0 0.0
    %2783 = vmatprep.subr.mxu0 0.0
    %2784 = vmatpush1.msra.mxu0 0.0
    %2785 = vmatprep.subr.mxu0 0.0
    %2786 = vmatpush1.msra.mxu0 0.0
    %2787 = vmatprep.subr.mxu0 0.0
    %2788 = vmatpush1.msra.mxu0 0.0
    %2789 = vmatprep.subr.mxu0 0.0
    %2790 = vmatpush1.msra.mxu0 0.0
    %2791 = vmatprep.subr.mxu0 0.0
    %2792 = vmatpush1.msra.mxu0 0.0
    %2793 = vmatprep.subr.mxu0 0.0
    %2794 = vmatpush1.msra.mxu0 0.0
    %2795 = vmatprep.subr.mxu0 0.0
    %2796 = vmatpush1.msra.mxu0 0.0
    %2797 = vmatprep.subr.mxu0 0.0
    %2798 = vmatpush1.msra.mxu0 0.0
    %2799 = vmatprep.subr.mxu0 0.0
    %2800 = vmatpush1.msra.mxu0 0.0
    %2801 = vmatprep.subr.mxu0 0.0
    %2802 = vmatpush1.msra.mxu0 0.0
    %2803 = vmatprep.subr.mxu0 0.0
    %2804 = vmatpush1.msra.mxu0 0.0
    %2805 = vmatprep.subr.mxu0 0.0
    %2806 = vmatpush1.msra.mxu0 0.0
    %2807 = vmatprep.subr.mxu0 0.0
    %2808 = vmatpush1.msra.mxu0 0.0
    %2809 = vmatprep.subr.mxu0 0.0
    %2810 = vmatpush1.msra.mxu0 0.0
    %2811 = vmatprep.subr.mxu0 0.0
    %2812 = vmatpush1.msra.mxu0 0.0
    %2813 = vmatprep.subr.mxu0 0.0
    %2814 = vmatpush1.msra.mxu0 0.0
    %2815 = vmatprep.subr.mxu0 0.0
    %2816 = vmatpush1.msra.mxu0 0.0
    %2817 = vmatprep.subr.mxu0 0.0
    %2818 = vmatpush1.msra.mxu0 0.0
    %2819 = vmatprep.subr.mxu0 0.0
    %2820 = vmatpush1.msra.mxu0 0.0
    %2821 = vmatprep.subr.mxu0 0.0
    %2822 = vmatpush1.msra.mxu0 0.0
    %2823 = vmatprep.subr.mxu0 0.0
    %2824 = vmatpush1.msra.mxu0 0.0
    %2825 = vmatprep.subr.mxu0 0.0
    %2826 = vmatpush1.msra.mxu0 0.0
    %2827 = vmatprep.subr.mxu0 0.0
    %2828 = vmatpush1.msra.mxu0 0.0
    %2829 = vmatprep.mubr.f32.mxu0 0.0
    %2830 = vmatmul.mubr.f32.gmra.mrb[0].mxu0 %v2760
    %v2831 = vpop.f32.mrb[0].mxu0
    %v2832 = vadd.f32 %v2757, %v2831
    %v2833 = vpop.f32.mrb[0].mxu0
    %2834 = vmatprep.mubr.f32.mxu0 0.0
    %2835 = vmatmul.mubr.f32.gmra.mrb[0].mxu0 %v2763
    %v2836 = vpop.f32.mrb[0].mxu0
    %v2837 = vadd.f32 %v2757, %v2836
    %v2838 = vpop.f32.mrb[0].mxu0
    %2839 = vdwg.mxu0
    %v2840 = vadd.f32 %v2832, %v187
    %v2841 = vadd.f32 %v2837, %v187
    %v2842 = vmax.f32 %v2840, 0.0
    %v2843 = vmax.f32 %v2841, 0.0
    %v2845 = vsel %vm199, %v2842, 0
    %v2848 = vsel %vm199, %v2843, 0
    %2850 = vmatprep.subr.mxu0 0.0
    %2851 = vmatpush1.msra.mxu0 %v80
    %2852 = vmatprep.subr.mxu0 0.0
    %2853 = vmatpush1.msra.mxu0 %v81
    %2854 = vmatprep.subr.mxu0 0.0
    %2855 = vmatpush1.msra.mxu0 %v82
    %2856 = vmatprep.subr.mxu0 0.0
    %2857 = vmatpush1.msra.mxu0 %v83
    %2858 = vmatprep.subr.mxu0 0.0
    %2859 = vmatpush1.msra.mxu0 0.0
    %2860 = vmatprep.subr.mxu0 0.0
    %2861 = vmatpush1.msra.mxu0 0.0
    %2862 = vmatprep.subr.mxu0 0.0
    %2863 = vmatpush1.msra.mxu0 0.0
    %2864 = vmatprep.subr.mxu0 0.0
    %2865 = vmatpush1.msra.mxu0 0.0
    %2866 = vmatprep.subr.mxu0 0.0
    %2867 = vmatpush1.msra.mxu0 0.0
    %2868 = vmatprep.subr.mxu0 0.0
    %2869 = vmatpush1.msra.mxu0 0.0
    %2870 = vmatprep.subr.mxu0 0.0
    %2871 = vmatpush1.msra.mxu0 0.0
    %2872 = vmatprep.subr.mxu0 0.0
    %2873 = vmatpush1.msra.mxu0 0.0
    %2874 = vmatprep.subr.mxu0 0.0
    %2875 = vmatpush1.msra.mxu0 0.0
    %2876 = vmatprep.subr.mxu0 0.0
    %2877 = vmatpush1.msra.mxu0 0.0
    %2878 = vmatprep.subr.mxu0 0.0
    %2879 = vmatpush1.msra.mxu0 0.0
    %2880 = vmatprep.subr.mxu0 0.0
    %2881 = vmatpush1.msra.mxu0 0.0
    %2882 = vmatprep.subr.mxu0 0.0
    %2883 = vmatpush1.msra.mxu0 0.0
    %2884 = vmatprep.subr.mxu0 0.0
    %2885 = vmatpush1.msra.mxu0 0.0
    %2886 = vmatprep.subr.mxu0 0.0
    %2887 = vmatpush1.msra.mxu0 0.0
    %2888 = vmatprep.subr.mxu0 0.0
    %2889 = vmatpush1.msra.mxu0 0.0
    %2890 = vmatprep.subr.mxu0 0.0
    %2891 = vmatpush1.msra.mxu0 0.0
    %2892 = vmatprep.subr.mxu0 0.0
    %2893 = vmatpush1.msra.mxu0 0.0
    %2894 = vmatprep.subr.mxu0 0.0
    %2895 = vmatpush1.msra.mxu0 0.0
    %2896 = vmatprep.subr.mxu0 0.0
    %2897 = vmatpush1.msra.mxu0 0.0
    %2898 = vmatprep.subr.mxu0 0.0
    %2899 = vmatpush1.msra.mxu0 0.0
    %2900 = vmatprep.subr.mxu0 0.0
    %2901 = vmatpush1.msra.mxu0 0.0
    %2902 = vmatprep.subr.mxu0 0.0
    %2903 = vmatpush1.msra.mxu0 0.0
    %2904 = vmatprep.subr.mxu0 0.0
    %2905 = vmatpush1.msra.mxu0 0.0
    %2906 = vmatprep.subr.mxu0 0.0
    %2907 = vmatpush1.msra.mxu0 0.0
    %2908 = vmatprep.subr.mxu0 0.0
    %2909 = vmatpush1.msra.mxu0 0.0
    %2910 = vmatprep.subr.mxu0 0.0
    %2911 = vmatpush1.msra.mxu0 0.0
    %2912 = vmatprep.subr.mxu0 0.0
    %2913 = vmatpush1.msra.mxu0 0.0
    %2914 = vmatprep.mubr.f32.mxu0 0.0
    %2915 = vmatmul.mubr.f32.gmra.mrb[0].mxu0 %v2845
    %v2916 = vpop.f32.mrb[0].mxu0
    %v2917 = vadd.f32 %v197, %v2916
    %v2918 = vpop.f32.mrb[0].mxu0
    %2919 = vmatprep.mubr.f32.mxu0 0.0
    %2920 = vmatmul.mubr.f32.gmra.mrb[0].mxu0 %v2848
    %v2921 = vpop.f32.mrb[0].mxu0
    %v2922 = vadd.f32 %v197, %v2921
    %v2923 = vpop.f32.mrb[0].mxu0
    %2924 = vdwg.mxu0
    %2925 = vmatprep.subr.mxu0 0.0
    %2926 = vmatpush1.msra.mxu0 %v85
    %2927 = vmatprep.subr.mxu0 0.0
    %2928 = vmatpush1.msra.mxu0 0.0
    %2929 = vmatprep.subr.mxu0 0.0
    %2930 = vmatpush1.msra.mxu0 0.0
    %2931 = vmatprep.subr.mxu0 0.0
    %2932 = vmatpush1.msra.mxu0 0.0
    %2933 = vmatprep.subr.mxu0 0.0
    %2934 = vmatpush1.msra.mxu0 0.0
    %2935 = vmatprep.subr.mxu0 0.0
    %2936 = vmatpush1.msra.mxu0 0.0
    %2937 = vmatprep.subr.mxu0 0.0
    %2938 = vmatpush1.msra.mxu0 0.0
    %2939 = vmatprep.subr.mxu0 0.0
    %2940 = vmatpush1.msra.mxu0 0.0
    %2941 = vmatprep.subr.mxu0 0.0
    %2942 = vmatpush1.msra.mxu0 0.0
    %2943 = vmatprep.subr.mxu0 0.0
    %2944 = vmatpush1.msra.mxu0 0.0
    %2945 = vmatprep.subr.mxu0 0.0
    %2946 = vmatpush1.msra.mxu0 0.0
    %2947 = vmatprep.subr.mxu0 0.0
    %2948 = vmatpush1.msra.mxu0 0.0
    %2949 = vmatprep.subr.mxu0 0.0
    %2950 = vmatpush1.msra.mxu0 0.0
    %2951 = vmatprep.subr.mxu0 0.0
    %2952 = vmatpush1.msra.mxu0 0.0
    %2953 = vmatprep.subr.mxu0 0.0
    %2954 = vmatpush1.msra.mxu0 0.0
    %2955 = vmatprep.subr.mxu0 0.0
    %2956 = vmatpush1.msra.mxu0 0.0
    %2957 = vmatprep.subr.mxu0 0.0
    %2958 = vmatpush1.msra.mxu0 0.0
    %2959 = vmatprep.subr.mxu0 0.0
    %2960 = vmatpush1.msra.mxu0 0.0
    %2961 = vmatprep.subr.mxu0 0.0
    %2962 = vmatpush1.msra.mxu0 0.0
    %2963 = vmatprep.subr.mxu0 0.0
    %2964 = vmatpush1.msra.mxu0 0.0
    %2965 = vmatprep.subr.mxu0 0.0
    %2966 = vmatpush1.msra.mxu0 0.0
    %2967 = vmatprep.subr.mxu0 0.0
    %2968 = vmatpush1.msra.mxu0 0.0
    %2969 = vmatprep.subr.mxu0 0.0
    %2970 = vmatpush1.msra.mxu0 0.0
    %2971 = vmatprep.subr.mxu0 0.0
    %2972 = vmatpush1.msra.mxu0 0.0
    %2973 = vmatprep.subr.mxu0 0.0
    %2974 = vmatpush1.msra.mxu0 0.0
    %2975 = vmatprep.subr.mxu0 0.0
    %2976 = vmatpush1.msra.mxu0 0.0
    %2977 = vmatprep.subr.mxu0 0.0
    %2978 = vmatpush1.msra.mxu0 0.0
    %2979 = vmatprep.subr.mxu0 0.0
    %2980 = vmatpush1.msra.mxu0 0.0
    %2981 = vmatprep.subr.mxu0 0.0
    %2982 = vmatpush1.msra.mxu0 0.0
    %2983 = vmatprep.subr.mxu0 0.0
    %2984 = vmatpush1.msra.mxu0 0.0
    %2985 = vmatprep.subr.mxu0 0.0
    %2986 = vmatpush1.msra.mxu0 0.0
    %2987 = vmatprep.subr.mxu0 0.0
    %2988 = vmatpush1.msra.mxu0 0.0
    %2989 = vmatprep.mubr.f32.mxu0 0.0
    %2990 = vmatmul.mubr.f32.gmra.mrb[0].mxu0 %v2760
    %v2991 = vpop.f32.mrb[0].mxu0
    %v2992 = vadd.f32 %v285, %v2991
    %v2993 = vpop.f32.mrb[0].mxu0
    %2994 = vmatprep.mubr.f32.mxu0 0.0
    %2995 = vmatmul.mubr.f32.gmra.mrb[0].mxu0 %v2763
    %v2996 = vpop.f32.mrb[0].mxu0
    %v2997 = vadd.f32 %v285, %v2996
    %v2998 = vpop.f32.mrb[0].mxu0
    %2999 = vdwg.mxu0
    %v3000 = vstv %s2750
    %v3001 = vmul.f32 %v2917, %v3000
    %v3002 = vmul.f32 %v2922, %v3000
    %v3003 = vadd.f32 %v2747, %v3001
    %v3004 = vadd.f32 %v2748, %v3002
    %s3005 = scalar_lea.vmem %s4, 160
    %v3006 = vld [vmem:[%s3005] sm:$0xff]
    %v3007 = vld [vmem:[%s3005 + $0x8] sm:$0xff]
    %v3008 = vmul.f32 %v2992, %v3006
    %v3009 = vmul.f32 %v2997, %v3007
    %v3010 = vadd.f32 %v3003, %v3008
    %v3011 = vadd.f32 %v3004, %v3009
    %s3012 = sld [smem:[#allocation4 + $0xb]]
    %s3013 = sld [smem:[#allocation6 + $0xb]]
    %v3014 = vstv %s3012
    %v3015 = vmul.f32 %v3014, %v78
    %v3017 = vlaneseq
    %v3018 = vshrl.u32 %v3017, 7
    %v3019 = vsub.s32 0, %v3018
    %v3020 = vrot.slane %v3015, %v3019
    %v3023 = vsel %vm89, %v3010, 0
    %v3026 = vsel %vm89, %v3011, 0
    %3028 = vmatprep.subr.mxu0 0.0
    %3029 = vmatpush1.msra.mxu0 %v77
    %3030 = vmatprep.subr.mxu0 0.0
    %3031 = vmatpush1.msra.mxu0 0.0
    %3032 = vmatprep.subr.mxu0 0.0
    %3033 = vmatpush1.msra.mxu0 0.0
    %3034 = vmatprep.subr.mxu0 0.0
    %3035 = vmatpush1.msra.mxu0 0.0
    %3036 = vmatprep.subr.mxu0 0.0
    %3037 = vmatpush1.msra.mxu0 0.0
    %3038 = vmatprep.subr.mxu0 0.0
    %3039 = vmatpush1.msra.mxu0 0.0
    %3040 = vmatprep.subr.mxu0 0.0
    %3041 = vmatpush1.msra.mxu0 0.0
    %3042 = vmatprep.subr.mxu0 0.0
    %3043 = vmatpush1.msra.mxu0 0.0
    %3044 = vmatprep.subr.mxu0 0.0
    %3045 = vmatpush1.msra.mxu0 0.0
    %3046 = vmatprep.subr.mxu0 0.0
    %3047 = vmatpush1.msra.mxu0 0.0
    %3048 = vmatprep.subr.mxu0 0.0
    %3049 = vmatpush1.msra.mxu0 0.0
    %3050 = vmatprep.subr.mxu0 0.0
    %3051 = vmatpush1.msra.mxu0 0.0
    %3052 = vmatprep.subr.mxu0 0.0
    %3053 = vmatpush1.msra.mxu0 0.0
    %3054 = vmatprep.subr.mxu0 0.0
    %3055 = vmatpush1.msra.mxu0 0.0
    %3056 = vmatprep.subr.mxu0 0.0
    %3057 = vmatpush1.msra.mxu0 0.0
    %3058 = vmatprep.subr.mxu0 0.0
    %3059 = vmatpush1.msra.mxu0 0.0
    %3060 = vmatprep.subr.mxu0 0.0
    %3061 = vmatpush1.msra.mxu0 0.0
    %3062 = vmatprep.subr.mxu0 0.0
    %3063 = vmatpush1.msra.mxu0 0.0
    %3064 = vmatprep.subr.mxu0 0.0
    %3065 = vmatpush1.msra.mxu0 0.0
    %3066 = vmatprep.subr.mxu0 0.0
    %3067 = vmatpush1.msra.mxu0 0.0
    %3068 = vmatprep.subr.mxu0 0.0
    %3069 = vmatpush1.msra.mxu0 0.0
    %3070 = vmatprep.subr.mxu0 0.0
    %3071 = vmatpush1.msra.mxu0 0.0
    %3072 = vmatprep.subr.mxu0 0.0
    %3073 = vmatpush1.msra.mxu0 0.0
    %3074 = vmatprep.subr.mxu0 0.0
    %3075 = vmatpush1.msra.mxu0 0.0
    %3076 = vmatprep.subr.mxu0 0.0
    %3077 = vmatpush1.msra.mxu0 0.0
    %3078 = vmatprep.subr.mxu0 0.0
    %3079 = vmatpush1.msra.mxu0 0.0
    %3080 = vmatprep.subr.mxu0 0.0
    %3081 = vmatpush1.msra.mxu0 0.0
    %3082 = vmatprep.subr.mxu0 0.0
    %3083 = vmatpush1.msra.mxu0 0.0
    %3084 = vmatprep.subr.mxu0 0.0
    %3085 = vmatpush1.msra.mxu0 0.0
    %3086 = vmatprep.subr.mxu0 0.0
    %3087 = vmatpush1.msra.mxu0 0.0
    %3088 = vmatprep.subr.mxu0 0.0
    %3089 = vmatpush1.msra.mxu0 0.0
    %3090 = vmatprep.subr.mxu0 0.0
    %3091 = vmatpush1.msra.mxu0 0.0
    %3092 = vmatprep.mubr.f32.mxu0 0.0
    %3093 = vmatmul.mubr.f32.gmra.mrb[0].mxu0 %v3023
    %v3094 = vpop.f32.mrb[0].mxu0
    %v3095 = vadd.f32 %v3020, %v3094
    %v3096 = vpop.f32.mrb[0].mxu0
    %3097 = vmatprep.mubr.f32.mxu0 0.0
    %3098 = vmatmul.mubr.f32.gmra.mrb[0].mxu0 %v3026
    %v3099 = vpop.f32.mrb[0].mxu0
    %v3100 = vadd.f32 %v3020, %v3099
    %v3101 = vpop.f32.mrb[0].mxu0
    %3102 = vdwg.mxu0
    %v3103 = vadd.f32 %v3095, %v187
    %v3104 = vadd.f32 %v3100, %v187
    %v3105 = vmax.f32 %v3103, 0.0
    %v3106 = vmax.f32 %v3104, 0.0
    %v3108 = vsel %vm199, %v3105, 0
    %v3111 = vsel %vm199, %v3106, 0
    %3113 = vmatprep.subr.mxu0 0.0
    %3114 = vmatpush1.msra.mxu0 %v80
    %3115 = vmatprep.subr.mxu0 0.0
    %3116 = vmatpush1.msra.mxu0 %v81
    %3117 = vmatprep.subr.mxu0 0.0
    %3118 = vmatpush1.msra.mxu0 %v82
    %3119 = vmatprep.subr.mxu0 0.0
    %3120 = vmatpush1.msra.mxu0 %v83
    %3121 = vmatprep.subr.mxu0 0.0
    %3122 = vmatpush1.msra.mxu0 0.0
    %3123 = vmatprep.subr.mxu0 0.0
    %3124 = vmatpush1.msra.mxu0 0.0
    %3125 = vmatprep.subr.mxu0 0.0
    %3126 = vmatpush1.msra.mxu0 0.0
    %3127 = vmatprep.subr.mxu0 0.0
    %3128 = vmatpush1.msra.mxu0 0.0
    %3129 = vmatprep.subr.mxu0 0.0
    %3130 = vmatpush1.msra.mxu0 0.0
    %3131 = vmatprep.subr.mxu0 0.0
    %3132 = vmatpush1.msra.mxu0 0.0
    %3133 = vmatprep.subr.mxu0 0.0
    %3134 = vmatpush1.msra.mxu0 0.0
    %3135 = vmatprep.subr.mxu0 0.0
    %3136 = vmatpush1.msra.mxu0 0.0
    %3137 = vmatprep.subr.mxu0 0.0
    %3138 = vmatpush1.msra.mxu0 0.0
    %3139 = vmatprep.subr.mxu0 0.0
    %3140 = vmatpush1.msra.mxu0 0.0
    %3141 = vmatprep.subr.mxu0 0.0
    %3142 = vmatpush1.msra.mxu0 0.0
    %3143 = vmatprep.subr.mxu0 0.0
    %3144 = vmatpush1.msra.mxu0 0.0
    %3145 = vmatprep.subr.mxu0 0.0
    %3146 = vmatpush1.msra.mxu0 0.0
    %3147 = vmatprep.subr.mxu0 0.0
    %3148 = vmatpush1.msra.mxu0 0.0
    %3149 = vmatprep.subr.mxu0 0.0
    %3150 = vmatpush1.msra.mxu0 0.0
    %3151 = vmatprep.subr.mxu0 0.0
    %3152 = vmatpush1.msra.mxu0 0.0
    %3153 = vmatprep.subr.mxu0 0.0
    %3154 = vmatpush1.msra.mxu0 0.0
    %3155 = vmatprep.subr.mxu0 0.0
    %3156 = vmatpush1.msra.mxu0 0.0
    %3157 = vmatprep.subr.mxu0 0.0
    %3158 = vmatpush1.msra.mxu0 0.0
    %3159 = vmatprep.subr.mxu0 0.0
    %3160 = vmatpush1.msra.mxu0 0.0
    %3161 = vmatprep.subr.mxu0 0.0
    %3162 = vmatpush1.msra.mxu0 0.0
    %3163 = vmatprep.subr.mxu0 0.0
    %3164 = vmatpush1.msra.mxu0 0.0
    %3165 = vmatprep.subr.mxu0 0.0
    %3166 = vmatpush1.msra.mxu0 0.0
    %3167 = vmatprep.subr.mxu0 0.0
    %3168 = vmatpush1.msra.mxu0 0.0
    %3169 = vmatprep.subr.mxu0 0.0
    %3170 = vmatpush1.msra.mxu0 0.0
    %3171 = vmatprep.subr.mxu0 0.0
    %3172 = vmatpush1.msra.mxu0 0.0
    %3173 = vmatprep.subr.mxu0 0.0
    %3174 = vmatpush1.msra.mxu0 0.0
    %3175 = vmatprep.subr.mxu0 0.0
    %3176 = vmatpush1.msra.mxu0 0.0
    %3177 = vmatprep.mubr.f32.mxu0 0.0
    %3178 = vmatmul.mubr.f32.gmra.mrb[0].mxu0 %v3108
    %v3179 = vpop.f32.mrb[0].mxu0
    %v3180 = vadd.f32 %v197, %v3179
    %v3181 = vpop.f32.mrb[0].mxu0
    %3182 = vmatprep.mubr.f32.mxu0 0.0
    %3183 = vmatmul.mubr.f32.gmra.mrb[0].mxu0 %v3111
    %v3184 = vpop.f32.mrb[0].mxu0
    %v3185 = vadd.f32 %v197, %v3184
    %v3186 = vpop.f32.mrb[0].mxu0
    %3187 = vdwg.mxu0
    %3188 = vmatprep.subr.mxu0 0.0
    %3189 = vmatpush1.msra.mxu0 %v85
    %3190 = vmatprep.subr.mxu0 0.0
    %3191 = vmatpush1.msra.mxu0 0.0
    %3192 = vmatprep.subr.mxu0 0.0
    %3193 = vmatpush1.msra.mxu0 0.0
    %3194 = vmatprep.subr.mxu0 0.0
    %3195 = vmatpush1.msra.mxu0 0.0
    %3196 = vmatprep.subr.mxu0 0.0
    %3197 = vmatpush1.msra.mxu0 0.0
    %3198 = vmatprep.subr.mxu0 0.0
    %3199 = vmatpush1.msra.mxu0 0.0
    %3200 = vmatprep.subr.mxu0 0.0
    %3201 = vmatpush1.msra.mxu0 0.0
    %3202 = vmatprep.subr.mxu0 0.0
    %3203 = vmatpush1.msra.mxu0 0.0
    %3204 = vmatprep.subr.mxu0 0.0
    %3205 = vmatpush1.msra.mxu0 0.0
    %3206 = vmatprep.subr.mxu0 0.0
    %3207 = vmatpush1.msra.mxu0 0.0
    %3208 = vmatprep.subr.mxu0 0.0
    %3209 = vmatpush1.msra.mxu0 0.0
    %3210 = vmatprep.subr.mxu0 0.0
    %3211 = vmatpush1.msra.mxu0 0.0
    %3212 = vmatprep.subr.mxu0 0.0
    %3213 = vmatpush1.msra.mxu0 0.0
    %3214 = vmatprep.subr.mxu0 0.0
    %3215 = vmatpush1.msra.mxu0 0.0
    %3216 = vmatprep.subr.mxu0 0.0
    %3217 = vmatpush1.msra.mxu0 0.0
    %3218 = vmatprep.subr.mxu0 0.0
    %3219 = vmatpush1.msra.mxu0 0.0
    %3220 = vmatprep.subr.mxu0 0.0
    %3221 = vmatpush1.msra.mxu0 0.0
    %3222 = vmatprep.subr.mxu0 0.0
    %3223 = vmatpush1.msra.mxu0 0.0
    %3224 = vmatprep.subr.mxu0 0.0
    %3225 = vmatpush1.msra.mxu0 0.0
    %3226 = vmatprep.subr.mxu0 0.0
    %3227 = vmatpush1.msra.mxu0 0.0
    %3228 = vmatprep.subr.mxu0 0.0
    %3229 = vmatpush1.msra.mxu0 0.0
    %3230 = vmatprep.subr.mxu0 0.0
    %3231 = vmatpush1.msra.mxu0 0.0
    %3232 = vmatprep.subr.mxu0 0.0
    %3233 = vmatpush1.msra.mxu0 0.0
    %3234 = vmatprep.subr.mxu0 0.0
    %3235 = vmatpush1.msra.mxu0 0.0
    %3236 = vmatprep.subr.mxu0 0.0
    %3237 = vmatpush1.msra.mxu0 0.0
    %3238 = vmatprep.subr.mxu0 0.0
    %3239 = vmatpush1.msra.mxu0 0.0
    %3240 = vmatprep.subr.mxu0 0.0
    %3241 = vmatpush1.msra.mxu0 0.0
    %3242 = vmatprep.subr.mxu0 0.0
    %3243 = vmatpush1.msra.mxu0 0.0
    %3244 = vmatprep.subr.mxu0 0.0
    %3245 = vmatpush1.msra.mxu0 0.0
    %3246 = vmatprep.subr.mxu0 0.0
    %3247 = vmatpush1.msra.mxu0 0.0
    %3248 = vmatprep.subr.mxu0 0.0
    %3249 = vmatpush1.msra.mxu0 0.0
    %3250 = vmatprep.subr.mxu0 0.0
    %3251 = vmatpush1.msra.mxu0 0.0
    %3252 = vmatprep.mubr.f32.mxu0 0.0
    %3253 = vmatmul.mubr.f32.gmra.mrb[0].mxu0 %v3023
    %v3254 = vpop.f32.mrb[0].mxu0
    %v3255 = vadd.f32 %v285, %v3254
    %v3256 = vpop.f32.mrb[0].mxu0
    %3257 = vmatprep.mubr.f32.mxu0 0.0
    %3258 = vmatmul.mubr.f32.gmra.mrb[0].mxu0 %v3026
    %v3259 = vpop.f32.mrb[0].mxu0
    %v3260 = vadd.f32 %v285, %v3259
    %v3261 = vpop.f32.mrb[0].mxu0
    %3262 = vdwg.mxu0
    %v3263 = vstv %s3013
    %v3264 = vmul.f32 %v3180, %v3263
    %v3265 = vmul.f32 %v3185, %v3263
    %v3266 = vadd.f32 %v3010, %v3264
    %v3267 = vadd.f32 %v3011, %v3265
    %s3268 = scalar_lea.vmem %s4, 176
    %v3269 = vld [vmem:[%s3268] sm:$0xff]
    %v3270 = vld [vmem:[%s3268 + $0x8] sm:$0xff]
    %v3271 = vmul.f32 %v3255, %v3269
    %v3272 = vmul.f32 %v3260, %v3270
    %v3273 = vadd.f32 %v3266, %v3271
    %v3274 = vadd.f32 %v3267, %v3272
    %s3275 = scalar_lea.vmem %s12, 64
    %3276 = vst.msk [vmem:[%s3275] sm:$0xff] %vm89, %v3273
    %3277 = vst.msk [vmem:[%s3275 + $0x8] sm:$0xff] %vm89, %v3274
    // Predicated region
    $region62: #{tpu_custom_call.1} parent=1 // pred_check
      _
    $region63: #{tpu_custom_call.1} parent=1 // pred_check_branch
      %3279 = sbr.rel (0) target = $region65
    $region64: #{tpu_custom_call.1} parent=1 // pred_region
      _
    $region65: #{tpu_custom_call.1} parent=1 // pred_fallthru
      _
    // Predicated region
    $region66: #{tpu_custom_call.1} parent=1 // pred_check
      _
    $region67: #{tpu_custom_call.1} parent=1 // pred_check_branch
      %3281 = sbr.rel (0) target = $region69
    $region68: #{tpu_custom_call.1} parent=1 // pred_region
      _
    $region69: #{tpu_custom_call.1} parent=1 // pred_fallthru
      _
    %3282 = vsyncpa [#allocation3], 1
    %3283 = vsyncpa [#allocation5], 1

</llo_original>
